<compile_context>
chip_gen: v7x
topology: tpu7x:2x2x1
jax: 0.10.0
libtpu: 0.0.40
codegen_flags: <defaults>
</compile_context>

<pallas_src>
import functools

import jax
import jax.numpy as jnp
from jax import lax
from jax.experimental import pallas as pl
from jax.experimental.pallas import tpu as pltpu

# ----------------------------- configuration ------------------------------
PATCH = 14
IN_CHANS = 3
IMG = 28                      # -> (28/14)^2 = 4 patches
EMBED_DIM = 128               # real DINOv2 ViT-B/14: 768
DEPTH = 2                     # real: 12
NUM_HEADS = 4                 # real: 12
HEAD_DIM = EMBED_DIM // NUM_HEADS
MLP_HIDDEN = 4 * EMBED_DIM
NUM_CLASSES = 9
LN_EPS = 1e-6                 # DINOv2 uses LayerNorm(eps=1e-6)

# Scoped VMEM limit: set explicitly so the same tiling compiles on v7x
# (64 MiB physical VMEM per TC) as well as v5e/v6e (128 MiB).
VMEM_LIMIT = 32 * 1024 * 1024


# ------------------------------ kernel helpers -----------------------------
def _ln(x, g, b):
    # LayerNorm in f32 (keep stats in f32 even when matmul operands are bf16).
    mean = jnp.mean(x, axis=-1, keepdims=True)
    var = jnp.mean((x - mean) ** 2, axis=-1, keepdims=True)
    return (x - mean) * lax.rsqrt(var + LN_EPS) * g + b


# ------------------------------ Pallas kernels ----------------------------
def _block_kernel(x_ref,
                  ln1_g, ln1_b, qkv_w, qkv_b, proj_w, proj_b, ls1,
                  ln2_g, ln2_b, fc1_w, fc1_b, fc2_w, fc2_b, ls2,
                  o_ref, *, n_real):
    """One full transformer block for one batch element, fully fused in VMEM.

    x_ref / o_ref: (N_pad, D) f32.  Weights (qkv_w, proj_w, fc1_w, fc2_w) are
    bf16; biases / LN params / LayerScale are f32.
    """
    D = EMBED_DIM
    x = x_ref[...]                                          # (N_pad, D) f32
    n_pad = x.shape[0]

    # ---------------- attention branch: x + ls1 * proj(attn(LN1(x))) --------
    h = _ln(x, ln1_g[...], ln1_b[...])
    qkv = jnp.dot(h.astype(jnp.bfloat16), qkv_w[...],
                  preferred_element_type=jnp.float32) + qkv_b[...]   # (N, 3D)

    # head split via static lane slices of the VMEM-resident qkv slab
    # (no host-side reshape(B,N,3,H,Dh).transpose and no HBM round trip).
    q = qkv[:, :D] * jnp.float32(HEAD_DIM ** -0.5)   # fold 1/sqrt(Dh) into q
    k = qkv[:, D:2 * D]
    v = qkv[:, 2 * D:]

    # mask padded key columns so padding does not change real-token results
    key_ok = lax.broadcasted_iota(jnp.int32, (n_pad, n_pad), 1) < n_real

    heads = []
    for hh in range(NUM_HEADS):                       # static unrolled loop
        sl = slice(hh * HEAD_DIM, (hh + 1) * HEAD_DIM)
        qh = q[:, sl].astype(jnp.bfloat16)
        kh = k[:, sl].astype(jnp.bfloat16)
        vh = v[:, sl].astype(jnp.bfloat16)
        s = lax.dot_general(qh, kh, (((1,), (1,)), ((), ())),
                            preferred_element_type=jnp.float32)      # (N, N)
        s = jnp.where(key_ok, s, jnp.float32(-1e30))
        m = jnp.max(s, axis=-1, keepdims=True)
        p = jnp.exp(s - m)
        p = p * pl.reciprocal(jnp.sum(p, axis=-1, keepdims=True), approx=True)
        heads.append(jnp.dot(p.astype(jnp.bfloat16), vh,
                             preferred_element_type=jnp.float32))     # (N, Dh)
    attn = jnp.concatenate(heads, axis=-1)            # lane-dense (N, D)

    proj = jnp.dot(attn.astype(jnp.bfloat16), proj_w[...],
                   preferred_element_type=jnp.float32) + proj_b[...]
    x1 = x + ls1[...] * proj                          # LayerScale + residual

    # ---------------- MLP branch: x1 + ls2 * fc2(gelu(fc1(LN2(x1)))) --------
    h2 = _ln(x1, ln2_g[...], ln2_b[...])
    m1 = jnp.dot(h2.astype(jnp.bfloat16), fc1_w[...],
                 preferred_element_type=jnp.float32) + fc1_b[...]     # (N, 4D)
    # TODO(synk): DINOv2 uses exact erf-GELU; tanh approximation used for
    # guaranteed Mosaic lowering of the activation on TPU.
    m1 = jax.nn.gelu(m1, approximate=True)
    y = jnp.dot(m1.astype(jnp.bfloat16), fc2_w[...],
                preferred_element_type=jnp.float32) + fc2_b[...]
    o_ref[...] = x1 + ls2[...] * y


def _linear_kernel(x_ref, w_ref, b_ref, o_ref):
    # o = x @ w + b ; cast activations to the weight dtype (bf16 for the
    # patch-embed), accumulate in f32.
    y = jnp.dot(x_ref[...].astype(w_ref.dtype), w_ref[...],
                preferred_element_type=jnp.float32) + b_ref[...]
    o_ref[...] = y


def _head_kernel(x_ref, g_ref, b_ref, w_ref, wb_ref, o_ref):
    # final LayerNorm (on CLS features only — LN is per-token so this equals
    # norm-then-slice) fused with the 9-class classifier head.
    h = _ln(x_ref[...], g_ref[...], b_ref[...])
    o_ref[...] = jnp.dot(h, w_ref[...],
                         preferred_element_type=jnp.float32) + wb_ref[...]


# ------------------------------ pallas_call wrappers -----------------------
def linear(x, w, b, tile_m=128):
    """Row-tiled linear: grid over M (parallel), full weight resident."""
    M, K = x.shape
    N = w.shape[1]
    tm = tile_m if M % tile_m == 0 else M
    return pl.pallas_call(
        _linear_kernel,
        out_shape=jax.ShapeDtypeStruct((M, N), jnp.float32),
        grid=(M // tm,),
        in_specs=[pl.BlockSpec((tm, K), lambda i: (i, 0)),
                  pl.BlockSpec((K, N), lambda i: (0, 0)),
                  pl.BlockSpec((1, N), lambda i: (0, 0))],
        out_specs=pl.BlockSpec((tm, N), lambda i: (i, 0)),
        compiler_params=pltpu.CompilerParams(
            dimension_semantics=("parallel",),
            vmem_limit_bytes=VMEM_LIMIT),
    )(x, w, b.reshape(1, N))


def transformer_block(x, blk, n_real):
    B, Np, D = x.shape
    tok_spec = pl.BlockSpec((None, Np, D), lambda b: (b, 0, 0))

    def full(shape):
        nd = len(shape)
        return pl.BlockSpec(shape, lambda b, _nd=nd: (0,) * _nd)

    cost = pl.CostEstimate(
        flops=int(2 * B * Np * D * 3 * D            # qkv
                  + 4 * B * NUM_HEADS * Np * Np * HEAD_DIM   # q@k^T + p@v
                  + 2 * B * Np * D * D              # proj
                  + 4 * B * Np * D * MLP_HIDDEN),   # fc1 + fc2
        transcendentals=int(B * NUM_HEADS * Np * Np + B * Np * MLP_HIDDEN),
        bytes_accessed=int(2 * B * Np * D * 4
                           + 2 * (3 * D * D + D * D + 2 * D * MLP_HIDDEN)),
    )

    return pl.pallas_call(
        functools.partial(_block_kernel, n_real=n_real),
        out_shape=jax.ShapeDtypeStruct((B, Np, D), jnp.float32),
        grid=(B,),
        in_specs=[tok_spec,
                  full((1, D)), full((1, D)),
                  full((D, 3 * D)), full((1, 3 * D)),
                  full((D, D)), full((1, D)), full((1, D)),
                  full((1, D)), full((1, D)),
                  full((D, MLP_HIDDEN)), full((1, MLP_HIDDEN)),
                  full((MLP_HIDDEN, D)), full((1, D)), full((1, D))],
        out_specs=tok_spec,
        compiler_params=pltpu.CompilerParams(
            dimension_semantics=("parallel",),
            vmem_limit_bytes=VMEM_LIMIT),
        cost_estimate=cost,
    )(x,
      blk["ln1_g"], blk["ln1_b"], blk["qkv_w"], blk["qkv_b"],
      blk["proj_w"], blk["proj_b"], blk["ls1"],
      blk["ln2_g"], blk["ln2_b"], blk["fc1_w"], blk["fc1_b"],
      blk["fc2_w"], blk["fc2_b"], blk["ls2"])


def head(cls_feat, g, b, w, wb):
    B, D = cls_feat.shape
    C = w.shape[1]
    return pl.pallas_call(
        _head_kernel,
        out_shape=jax.ShapeDtypeStruct((B, C), jnp.float32),
        grid=(1,),
        in_specs=[pl.BlockSpec((B, D), lambda i: (0, 0)),
                  pl.BlockSpec((1, D), lambda i: (0, 0)),
                  pl.BlockSpec((1, D), lambda i: (0, 0)),
                  pl.BlockSpec((D, C), lambda i: (0, 0)),
                  pl.BlockSpec((1, C), lambda i: (0, 0))],
        out_specs=pl.BlockSpec((B, C), lambda i: (0, 0)),
        compiler_params=pltpu.CompilerParams(vmem_limit_bytes=VMEM_LIMIT),
    )(cls_feat, g, b, w, wb)


# ------------------------------ model forward ------------------------------
def forward(params, x):
    """x: (B, C, H, W) float32, NCHW.  Returns logits (B, NUM_CLASSES)."""
    B, C, H, W = x.shape
    hp, wp = H // PATCH, W // PATCH
    n_patches = hp * wp
    n_tokens = 1 + n_patches
    n_pad = ((n_tokens + 7) // 8) * 8           # pad tokens to sublane multiple

    # patch embed: 14x14 stride-14 conv == im2col + row-tiled matmul
    patches = (x.reshape(B, C, hp, PATCH, wp, PATCH)
                 .transpose(0, 2, 4, 1, 3, 5)
                 .reshape(B * n_patches, C * PATCH * PATCH))
    tok = linear(patches, params["pe_w"], params["pe_b"])            # (B*np, D)
    tok = tok.reshape(B, n_patches, EMBED_DIM)

    # prepend CLS token, add positional embedding, pad token axis
    # TODO(synk): real DINOv2 bicubic-interpolates the pretrained 224x224
    # pos_embed grid; here pos_embed is generated at the target token count.
    cls = jnp.broadcast_to(params["cls"], (B, 1, EMBED_DIM))
    h = jnp.concatenate([cls, tok], axis=1) + params["pos"]          # (B, N, D)
    h = jnp.pad(h, ((0, 0), (0, n_pad - n_tokens), (0, 0)))          # (B, Np, D)

    for blk in params["blocks"]:
        h = transformer_block(h, blk, n_real=n_tokens)

    # final LayerNorm on CLS token + classifier head (fused)
    cls_feat = h[:, 0]                                               # (B, D)
    return head(cls_feat, params["norm_g"], params["norm_b"],
                params["cls_w"], params["cls_b"])


# ------------------------------ parameter init -----------------------------
def init_params(key, n_tokens):
    cnt = [0]

    def nxt():
        cnt[0] += 1
        return jax.random.fold_in(key, cnt[0])

    def nrm(shape, std=0.02, dtype=jnp.float32):
        return (std * jax.random.normal(nxt(), shape)).astype(dtype)

    D = EMBED_DIM
    blocks = []
    for _ in range(DEPTH):
        blocks.append(dict(
            ln1_g=jnp.ones((1, D), jnp.float32),
            ln1_b=jnp.zeros((1, D), jnp.float32),
            qkv_w=nrm((D, 3 * D), dtype=jnp.bfloat16),     # bf16 MXU operands
            qkv_b=nrm((1, 3 * D)),
            proj_w=nrm((D, D), dtype=jnp.bfloat16),
            proj_b=nrm((1, D)),
            ls1=jnp.full((1, D), 1e-5, jnp.float32),       # LayerScale (DINOv2)
            ln2_g=jnp.ones((1, D), jnp.float32),
            ln2_b=jnp.zeros((1, D), jnp.float32),
            fc1_w=nrm((D, MLP_HIDDEN), dtype=jnp.bfloat16),
            fc1_b=nrm((1, MLP_HIDDEN)),
            fc2_w=nrm((MLP_HIDDEN, D), dtype=jnp.bfloat16),
            fc2_b=nrm((1, D)),
            ls2=jnp.full((1, D), 1e-5, jnp.float32),
        ))

    return dict(
        pe_w=nrm((IN_CHANS * PATCH * PATCH, D), dtype=jnp.bfloat16),
        pe_b=nrm((D,)),
        cls=nrm((1, 1, D)),
        pos=nrm((1, n_tokens, D)),
        blocks=blocks,
        norm_g=jnp.ones((1, D), jnp.float32),
        norm_b=jnp.zeros((1, D), jnp.float32),
        cls_w=nrm((D, NUM_CLASSES)),                       # head kept in f32
        cls_b=nrm((1, NUM_CLASSES)),
    )


# ---------------------------------- main -----------------------------------
if __name__ == "__main__":
    key = jax.random.PRNGKey(0)
    n_patches = (IMG // PATCH) ** 2
    params = init_params(key, n_tokens=1 + n_patches)

    x = jax.random.normal(jax.random.fold_in(key, 12345),
                          (2, IN_CHANS, IMG, IMG), jnp.float32)

    logits = jax.jit(forward)(params, x)
    jax.block_until_ready(logits)
    assert logits.shape == (2, NUM_CLASSES)
    assert logits.dtype == jnp.float32
    print("KERNEL_OK")
</pallas_src>

<mosaic_0001>
module attributes {stable_mosaic.version = 11 : i64} {
  func.func @_linear_kernel(%arg0: i32, %arg1: memref<8x588xf32, #tpu.memory_space<vmem>>, %arg2: memref<588x128xbf16, #tpu.memory_space<vmem>>, %arg3: memref<1x128xf32, #tpu.memory_space<vmem>>, %arg4: memref<8x128xf32, #tpu.memory_space<vmem>>) attributes {dimension_semantics = [#tpu.dimension_semantics<parallel>], iteration_bounds = array<i64: 1>, scalar_prefetch = 0 : i64, scratch_operands = 0 : i64, tpu.core_type = #tpu.core_type<tc>, window_params = [{transform_indices = @transform_0, window_bounds = array<i64: 8, 588>}, {pipeline_mode = #tpu.pipeline_mode<synchronous>, transform_indices = @transform_1, window_bounds = array<i64: 588, 128>}, {pipeline_mode = #tpu.pipeline_mode<synchronous>, transform_indices = @transform_2, window_bounds = array<i64: 1, 128>}, {transform_indices = @transform_3, window_bounds = array<i64: 8, 128>}]} {
    %c0 = arith.constant 0 : index
    %c0_0 = arith.constant 0 : index
    %0 = vector.load %arg1[%c0, %c0_0] : memref<8x588xf32, #tpu.memory_space<vmem>>, vector<8x588xf32>
    %1 = arith.truncf %0 : vector<8x588xf32> to vector<8x588xbf16>
    %c0_1 = arith.constant 0 : index
    %c0_2 = arith.constant 0 : index
    %2 = vector.load %arg2[%c0_1, %c0_2] : memref<588x128xbf16, #tpu.memory_space<vmem>>, vector<588x128xbf16>
    %cst = arith.constant dense<0.000000e+00> : vector<8x128xf32>
    %3 = tpu.matmul %1, %2, %cst {dimension_numbers = #tpu.dot_dimension_numbers<[1], [0], [0], [1], [0, 0, 1, 1], [], []>} : vector<8x588xbf16>, vector<588x128xbf16>, vector<8x128xf32> -> vector<8x128xf32>
    %c0_3 = arith.constant 0 : index
    %c0_4 = arith.constant 0 : index
    %4 = vector.load %arg3[%c0_3, %c0_4] : memref<1x128xf32, #tpu.memory_space<vmem>>, vector<1x128xf32>
    %5 = vector.broadcast %4 : vector<1x128xf32> to vector<8x128xf32>
    %6 = arith.addf %3, %5 : vector<8x128xf32>
    %c0_5 = arith.constant 0 : index
    %c0_6 = arith.constant 0 : index
    %7 = vector.load %arg4[%c0_5, %c0_6] : memref<8x128xf32, #tpu.memory_space<vmem>>, vector<8x128xf32>
    tpu.vector_store %arg4[%c0_5, %c0_6], %6 {strides = array<i32>} : memref<8x128xf32, #tpu.memory_space<vmem>>, vector<8x128xf32>,
    return
  }
  func.func @transform_0(%arg0: i32) -> (i32, i32) {
    %c0_i32 = arith.constant 0 : i32
    %c0_i32_0 = arith.constant 0 : i32
    return %arg0, %c0_i32 : i32, i32
  }
  func.func @transform_1(%arg0: i32) -> (i32, i32) {
    %c0_i32 = arith.constant 0 : i32
    %c0_i32_0 = arith.constant 0 : i32
    %c0_i32_1 = arith.constant 0 : i32
    return %c0_i32, %c0_i32_0 : i32, i32
  }
  func.func @transform_2(%arg0: i32) -> (i32, i32) {
    %c0_i32 = arith.constant 0 : i32
    %c0_i32_0 = arith.constant 0 : i32
    %c0_i32_1 = arith.constant 0 : i32
    return %c0_i32, %c0_i32_0 : i32, i32
  }
  func.func @transform_3(%arg0: i32) -> (i32, i32) {
    %c0_i32 = arith.constant 0 : i32
    %c0_i32_0 = arith.constant 0 : i32
    return %arg0, %c0_i32 : i32, i32
  }
}

module attributes {stable_mosaic.version = 11 : i64} {
  func.func @_block_kernel(%arg0: i32, %arg1: memref<1x8x128xf32, #tpu.memory_space<vmem>>, %arg2: memref<1x128xf32, #tpu.memory_space<vmem>>, %arg3: memref<1x128xf32, #tpu.memory_space<vmem>>, %arg4: memref<128x384xbf16, #tpu.memory_space<vmem>>, %arg5: memref<1x384xf32, #tpu.memory_space<vmem>>, %arg6: memref<128x128xbf16, #tpu.memory_space<vmem>>, %arg7: memref<1x128xf32, #tpu.memory_space<vmem>>, %arg8: memref<1x128xf32, #tpu.memory_space<vmem>>, %arg9: memref<1x128xf32, #tpu.memory_space<vmem>>, %arg10: memref<1x128xf32, #tpu.memory_space<vmem>>, %arg11: memref<128x512xbf16, #tpu.memory_space<vmem>>, %arg12: memref<1x512xf32, #tpu.memory_space<vmem>>, %arg13: memref<512x128xbf16, #tpu.memory_space<vmem>>, %arg14: memref<1x128xf32, #tpu.memory_space<vmem>>, %arg15: memref<1x128xf32, #tpu.memory_space<vmem>>, %arg16: memref<1x8x128xf32, #tpu.memory_space<vmem>>) attributes {dimension_semantics = [#tpu.dimension_semantics<parallel>], iteration_bounds = array<i64: 2>, scalar_prefetch = 0 : i64, scratch_operands = 0 : i64, tpu.core_type = #tpu.core_type<tc>, window_params = [{transform_indices = @transform_0, window_bounds = array<i64: 1, 8, 128>}, {pipeline_mode = #tpu.pipeline_mode<synchronous>, transform_indices = @transform_1, window_bounds = array<i64: 1, 128>}, {pipeline_mode = #tpu.pipeline_mode<synchronous>, transform_indices = @transform_2, window_bounds = array<i64: 1, 128>}, {pipeline_mode = #tpu.pipeline_mode<synchronous>, transform_indices = @transform_3, window_bounds = array<i64: 128, 384>}, {pipeline_mode = #tpu.pipeline_mode<synchronous>, transform_indices = @transform_4, window_bounds = array<i64: 1, 384>}, {pipeline_mode = #tpu.pipeline_mode<synchronous>, transform_indices = @transform_5, window_bounds = array<i64: 128, 128>}, {pipeline_mode = #tpu.pipeline_mode<synchronous>, transform_indices = @transform_6, window_bounds = array<i64: 1, 128>}, {pipeline_mode = #tpu.pipeline_mode<synchronous>, transform_indices = @transform_7, window_bounds = array<i64: 1, 128>}, {pipeline_mode = #tpu.pipeline_mode<synchronous>, transform_indices = @transform_8, window_bounds = array<i64: 1, 128>}, {pipeline_mode = #tpu.pipeline_mode<synchronous>, transform_indices = @transform_9, window_bounds = array<i64: 1, 128>}, {pipeline_mode = #tpu.pipeline_mode<synchronous>, transform_indices = @transform_10, window_bounds = array<i64: 128, 512>}, {pipeline_mode = #tpu.pipeline_mode<synchronous>, transform_indices = @transform_11, window_bounds = array<i64: 1, 512>}, {pipeline_mode = #tpu.pipeline_mode<synchronous>, transform_indices = @transform_12, window_bounds = array<i64: 512, 128>}, {pipeline_mode = #tpu.pipeline_mode<synchronous>, transform_indices = @transform_13, window_bounds = array<i64: 1, 128>}, {pipeline_mode = #tpu.pipeline_mode<synchronous>, transform_indices = @transform_14, window_bounds = array<i64: 1, 128>}, {transform_indices = @transform_15, window_bounds = array<i64: 1, 8, 128>}]} {
    %c0 = arith.constant 0 : index
    %c0_0 = arith.constant 0 : index
    %c0_1 = arith.constant 0 : index
    %0 = vector.load %arg1[%c0, %c0_0, %c0_1] : memref<1x8x128xf32, #tpu.memory_space<vmem>>, vector<1x8x128xf32>
    %1 = vector.shape_cast %0 : vector<1x8x128xf32> to vector<8x128xf32>
    %c0_2 = arith.constant 0 : index
    %c0_3 = arith.constant 0 : index
    %2 = vector.load %arg2[%c0_2, %c0_3] : memref<1x128xf32, #tpu.memory_space<vmem>>, vector<1x128xf32>
    %c0_4 = arith.constant 0 : index
    %c0_5 = arith.constant 0 : index
    %3 = vector.load %arg3[%c0_4, %c0_5] : memref<1x128xf32, #tpu.memory_space<vmem>>, vector<1x128xf32>
    %cst = arith.constant dense<0.000000e+00> : vector<8xf32>
    %4 = vector.multi_reduction <add>, %1, %cst [1] : vector<8x128xf32> to vector<8xf32>
    %5 = vector.shape_cast %4 : vector<8xf32> to vector<8x1xf32>
    %cst_6 = arith.constant 1.280000e+02 : f32
    %6 = vector.broadcast %cst_6 : f32 to vector<8x1xf32>
    %7 = arith.divf %5, %6 : vector<8x1xf32>
    %8 = vector.broadcast %7 : vector<8x1xf32> to vector<8x128xf32>
    %9 = arith.subf %1, %8 : vector<8x128xf32>
    %10 = arith.mulf %9, %9 : vector<8x128xf32>
    %cst_7 = arith.constant dense<0.000000e+00> : vector<8xf32>
    %11 = vector.multi_reduction <add>, %10, %cst_7 [1] : vector<8x128xf32> to vector<8xf32>
    %12 = vector.shape_cast %11 : vector<8xf32> to vector<8x1xf32>
    %cst_8 = arith.constant 1.280000e+02 : f32
    %13 = vector.broadcast %cst_8 : f32 to vector<8x1xf32>
    %14 = arith.divf %12, %13 : vector<8x1xf32>
    %15 = vector.broadcast %7 : vector<8x1xf32> to vector<8x128xf32>
    %16 = arith.subf %1, %15 : vector<8x128xf32>
    %cst_9 = arith.constant 9.99999997E-7 : f32
    %17 = vector.broadcast %cst_9 : f32 to vector<8x1xf32>
    %18 = arith.addf %14, %17 : vector<8x1xf32>
    %19 = math.rsqrt %18 : vector<8x1xf32>
    %20 = vector.broadcast %19 : vector<8x1xf32> to vector<8x128xf32>
    %21 = arith.mulf %16, %20 : vector<8x128xf32>
    %22 = vector.broadcast %2 : vector<1x128xf32> to vector<8x128xf32>
    %23 = arith.mulf %21, %22 : vector<8x128xf32>
    %24 = vector.broadcast %3 : vector<1x128xf32> to vector<8x128xf32>
    %25 = arith.addf %23, %24 : vector<8x128xf32>
    %26 = arith.truncf %25 : vector<8x128xf32> to vector<8x128xbf16>
    %c0_10 = arith.constant 0 : index
    %c0_11 = arith.constant 0 : index
    %27 = vector.load %arg4[%c0_10, %c0_11] : memref<128x384xbf16, #tpu.memory_space<vmem>>, vector<128x384xbf16>
    %cst_12 = arith.constant dense<0.000000e+00> : vector<8x384xf32>
    %28 = tpu.matmul %26, %27, %cst_12 {dimension_numbers = #tpu.dot_dimension_numbers<[1], [0], [0], [1], [0, 0, 1, 1], [], []>} : vector<8x128xbf16>, vector<128x384xbf16>, vector<8x384xf32> -> vector<8x384xf32>
    %c0_13 = arith.constant 0 : index
    %c0_14 = arith.constant 0 : index
    %29 = vector.load %arg5[%c0_13, %c0_14] : memref<1x384xf32, #tpu.memory_space<vmem>>, vector<1x384xf32>
    %30 = vector.broadcast %29 : vector<1x384xf32> to vector<8x384xf32>
    %31 = arith.addf %28, %30 : vector<8x384xf32>
    %32 = vector.extract_strided_slice %31 {offsets = [0, 0], sizes = [8, 128], strides = [1, 1]} : vector<8x384xf32> to vector<8x128xf32>
    %cst_15 = arith.constant 0.176776692 : f32
    %33 = vector.broadcast %cst_15 : f32 to vector<8x128xf32>
    %34 = arith.mulf %32, %33 : vector<8x128xf32>
    %35 = vector.extract_strided_slice %31 {offsets = [0, 128], sizes = [8, 128], strides = [1, 1]} : vector<8x384xf32> to vector<8x128xf32>
    %36 = vector.extract_strided_slice %31 {offsets = [0, 256], sizes = [8, 128], strides = [1, 1]} : vector<8x384xf32> to vector<8x128xf32>
    %37 = tpu.iota {dimensions = array<i32: 1>} : vector<8x8xi32>
    %c5_i32 = arith.constant 5 : i32
    %38 = vector.broadcast %c5_i32 : i32 to vector<8x8xi32>
    %39 = arith.cmpi slt, %37, %38 : vector<8x8xi32>
    %40 = vector.extract_strided_slice %34 {offsets = [0, 0], sizes = [8, 32], strides = [1, 1]} : vector<8x128xf32> to vector<8x32xf32>
    %41 = arith.truncf %40 : vector<8x32xf32> to vector<8x32xbf16>
    %42 = vector.extract_strided_slice %35 {offsets = [0, 0], sizes = [8, 32], strides = [1, 1]} : vector<8x128xf32> to vector<8x32xf32>
    %43 = arith.truncf %42 : vector<8x32xf32> to vector<8x32xbf16>
    %44 = vector.extract_strided_slice %36 {offsets = [0, 0], sizes = [8, 32], strides = [1, 1]} : vector<8x128xf32> to vector<8x32xf32>
    %45 = arith.truncf %44 : vector<8x32xf32> to vector<8x32xbf16>
    %cst_16 = arith.constant dense<0.000000e+00> : vector<8x8xf32>
    %46 = tpu.matmul %41, %43, %cst_16 {dimension_numbers = #tpu.dot_dimension_numbers<[1], [1], [0], [0], [0, 0, 1, 0], [], []>} : vector<8x32xbf16>, vector<8x32xbf16>, vector<8x8xf32> -> vector<8x8xf32>
    %cst_17 = arith.constant -1.000000e+30 : f32
    %47 = vector.broadcast %cst_17 : f32 to vector<8x8xf32>
    %48 = arith.select %39, %46, %47 : vector<8x8xi1>, vector<8x8xf32>
    %cst_18 = arith.constant dense<0xFF800000> : vector<8xf32>
    %49 = vector.multi_reduction <maximumf>, %48, %cst_18 [1] : vector<8x8xf32> to vector<8xf32>
    %50 = vector.shape_cast %49 : vector<8xf32> to vector<8x1xf32>
    %51 = vector.broadcast %50 : vector<8x1xf32> to vector<8x8xf32>
    %52 = arith.subf %48, %51 : vector<8x8xf32>
    %53 = math.exp %52 : vector<8x8xf32>
    %cst_19 = arith.constant dense<0.000000e+00> : vector<8xf32>
    %54 = vector.multi_reduction <add>, %53, %cst_19 [1] : vector<8x8xf32> to vector<8xf32>
    %55 = vector.shape_cast %54 : vector<8xf32> to vector<8x1xf32>
    %56 = tpu.reciprocal %55 {approx = true} : vector<8x1xf32> -> vector<8x1xf32>
    %57 = vector.broadcast %56 : vector<8x1xf32> to vector<8x8xf32>
    %58 = arith.mulf %53, %57 : vector<8x8xf32>
    %59 = arith.truncf %58 : vector<8x8xf32> to vector<8x8xbf16>
    %cst_20 = arith.constant dense<0.000000e+00> : vector<8x32xf32>
    %60 = tpu.matmul %59, %45, %cst_20 {dimension_numbers = #tpu.dot_dimension_numbers<[1], [0], [0], [1], [0, 0, 1, 1], [], []>} : vector<8x8xbf16>, vector<8x32xbf16>, vector<8x32xf32> -> vector<8x32xf32>
    %61 = vector.extract_strided_slice %34 {offsets = [0, 32], sizes = [8, 32], strides = [1, 1]} : vector<8x128xf32> to vector<8x32xf32>
    %62 = arith.truncf %61 : vector<8x32xf32> to vector<8x32xbf16>
    %63 = vector.extract_strided_slice %35 {offsets = [0, 32], sizes = [8, 32], strides = [1, 1]} : vector<8x128xf32> to vector<8x32xf32>
    %64 = arith.truncf %63 : vector<8x32xf32> to vector<8x32xbf16>
    %65 = vector.extract_strided_slice %36 {offsets = [0, 32], sizes = [8, 32], strides = [1, 1]} : vector<8x128xf32> to vector<8x32xf32>
    %66 = arith.truncf %65 : vector<8x32xf32> to vector<8x32xbf16>
    %cst_21 = arith.constant dense<0.000000e+00> : vector<8x8xf32>
    %67 = tpu.matmul %62, %64, %cst_21 {dimension_numbers = #tpu.dot_dimension_numbers<[1], [1], [0], [0], [0, 0, 1, 0], [], []>} : vector<8x32xbf16>, vector<8x32xbf16>, vector<8x8xf32> -> vector<8x8xf32>
    %cst_22 = arith.constant -1.000000e+30 : f32
    %68 = vector.broadcast %cst_22 : f32 to vector<8x8xf32>
    %69 = arith.select %39, %67, %68 : vector<8x8xi1>, vector<8x8xf32>
    %cst_23 = arith.constant dense<0xFF800000> : vector<8xf32>
    %70 = vector.multi_reduction <maximumf>, %69, %cst_23 [1] : vector<8x8xf32> to vector<8xf32>
    %71 = vector.shape_cast %70 : vector<8xf32> to vector<8x1xf32>
    %72 = vector.broadcast %71 : vector<8x1xf32> to vector<8x8xf32>
    %73 = arith.subf %69, %72 : vector<8x8xf32>
    %74 = math.exp %73 : vector<8x8xf32>
    %cst_24 = arith.constant dense<0.000000e+00> : vector<8xf32>
    %75 = vector.multi_reduction <add>, %74, %cst_24 [1] : vector<8x8xf32> to vector<8xf32>
    %76 = vector.shape_cast %75 : vector<8xf32> to vector<8x1xf32>
    %77 = tpu.reciprocal %76 {approx = true} : vector<8x1xf32> -> vector<8x1xf32>
    %78 = vector.broadcast %77 : vector<8x1xf32> to vector<8x8xf32>
    %79 = arith.mulf %74, %78 : vector<8x8xf32>
    %80 = arith.truncf %79 : vector<8x8xf32> to vector<8x8xbf16>
    %cst_25 = arith.constant dense<0.000000e+00> : vector<8x32xf32>
    %81 = tpu.matmul %80, %66, %cst_25 {dimension_numbers = #tpu.dot_dimension_numbers<[1], [0], [0], [1], [0, 0, 1, 1], [], []>} : vector<8x8xbf16>, vector<8x32xbf16>, vector<8x32xf32> -> vector<8x32xf32>
    %82 = vector.extract_strided_slice %34 {offsets = [0, 64], sizes = [8, 32], strides = [1, 1]} : vector<8x128xf32> to vector<8x32xf32>
    %83 = arith.truncf %82 : vector<8x32xf32> to vector<8x32xbf16>
    %84 = vector.extract_strided_slice %35 {offsets = [0, 64], sizes = [8, 32], strides = [1, 1]} : vector<8x128xf32> to vector<8x32xf32>
    %85 = arith.truncf %84 : vector<8x32xf32> to vector<8x32xbf16>
    %86 = vector.extract_strided_slice %36 {offsets = [0, 64], sizes = [8, 32], strides = [1, 1]} : vector<8x128xf32> to vector<8x32xf32>
    %87 = arith.truncf %86 : vector<8x32xf32> to vector<8x32xbf16>
    %cst_26 = arith.constant dense<0.000000e+00> : vector<8x8xf32>
    %88 = tpu.matmul %83, %85, %cst_26 {dimension_numbers = #tpu.dot_dimension_numbers<[1], [1], [0], [0], [0, 0, 1, 0], [], []>} : vector<8x32xbf16>, vector<8x32xbf16>, vector<8x8xf32> -> vector<8x8xf32>
    %cst_27 = arith.constant -1.000000e+30 : f32
    %89 = vector.broadcast %cst_27 : f32 to vector<8x8xf32>
    %90 = arith.select %39, %88, %89 : vector<8x8xi1>, vector<8x8xf32>
    %cst_28 = arith.constant dense<0xFF800000> : vector<8xf32>
    %91 = vector.multi_reduction <maximumf>, %90, %cst_28 [1] : vector<8x8xf32> to vector<8xf32>
    %92 = vector.shape_cast %91 : vector<8xf32> to vector<8x1xf32>
    %93 = vector.broadcast %92 : vector<8x1xf32> to vector<8x8xf32>
    %94 = arith.subf %90, %93 : vector<8x8xf32>
    %95 = math.exp %94 : vector<8x8xf32>
    %cst_29 = arith.constant dense<0.000000e+00> : vector<8xf32>
    %96 = vector.multi_reduction <add>, %95, %cst_29 [1] : vector<8x8xf32> to vector<8xf32>
    %97 = vector.shape_cast %96 : vector<8xf32> to vector<8x1xf32>
    %98 = tpu.reciprocal %97 {approx = true} : vector<8x1xf32> -> vector<8x1xf32>
    %99 = vector.broadcast %98 : vector<8x1xf32> to vector<8x8xf32>
    %100 = arith.mulf %95, %99 : vector<8x8xf32>
    %101 = arith.truncf %100 : vector<8x8xf32> to vector<8x8xbf16>
    %cst_30 = arith.constant dense<0.000000e+00> : vector<8x32xf32>
    %102 = tpu.matmul %101, %87, %cst_30 {dimension_numbers = #tpu.dot_dimension_numbers<[1], [0], [0], [1], [0, 0, 1, 1], [], []>} : vector<8x8xbf16>, vector<8x32xbf16>, vector<8x32xf32> -> vector<8x32xf32>
    %103 = vector.extract_strided_slice %34 {offsets = [0, 96], sizes = [8, 32], strides = [1, 1]} : vector<8x128xf32> to vector<8x32xf32>
    %104 = arith.truncf %103 : vector<8x32xf32> to vector<8x32xbf16>
    %105 = vector.extract_strided_slice %35 {offsets = [0, 96], sizes = [8, 32], strides = [1, 1]} : vector<8x128xf32> to vector<8x32xf32>
    %106 = arith.truncf %105 : vector<8x32xf32> to vector<8x32xbf16>
    %107 = vector.extract_strided_slice %36 {offsets = [0, 96], sizes = [8, 32], strides = [1, 1]} : vector<8x128xf32> to vector<8x32xf32>
    %108 = arith.truncf %107 : vector<8x32xf32> to vector<8x32xbf16>
    %cst_31 = arith.constant dense<0.000000e+00> : vector<8x8xf32>
    %109 = tpu.matmul %104, %106, %cst_31 {dimension_numbers = #tpu.dot_dimension_numbers<[1], [1], [0], [0], [0, 0, 1, 0], [], []>} : vector<8x32xbf16>, vector<8x32xbf16>, vector<8x8xf32> -> vector<8x8xf32>
    %cst_32 = arith.constant -1.000000e+30 : f32
    %110 = vector.broadcast %cst_32 : f32 to vector<8x8xf32>
    %111 = arith.select %39, %109, %110 : vector<8x8xi1>, vector<8x8xf32>
    %cst_33 = arith.constant dense<0xFF800000> : vector<8xf32>
    %112 = vector.multi_reduction <maximumf>, %111, %cst_33 [1] : vector<8x8xf32> to vector<8xf32>
    %113 = vector.shape_cast %112 : vector<8xf32> to vector<8x1xf32>
    %114 = vector.broadcast %113 : vector<8x1xf32> to vector<8x8xf32>
    %115 = arith.subf %111, %114 : vector<8x8xf32>
    %116 = math.exp %115 : vector<8x8xf32>
    %cst_34 = arith.constant dense<0.000000e+00> : vector<8xf32>
    %117 = vector.multi_reduction <add>, %116, %cst_34 [1] : vector<8x8xf32> to vector<8xf32>
    %118 = vector.shape_cast %117 : vector<8xf32> to vector<8x1xf32>
    %119 = tpu.reciprocal %118 {approx = true} : vector<8x1xf32> -> vector<8x1xf32>
    %120 = vector.broadcast %119 : vector<8x1xf32> to vector<8x8xf32>
    %121 = arith.mulf %116, %120 : vector<8x8xf32>
    %122 = arith.truncf %121 : vector<8x8xf32> to vector<8x8xbf16>
    %cst_35 = arith.constant dense<0.000000e+00> : vector<8x32xf32>
    %123 = tpu.matmul %122, %108, %cst_35 {dimension_numbers = #tpu.dot_dimension_numbers<[1], [0], [0], [1], [0, 0, 1, 1], [], []>} : vector<8x8xbf16>, vector<8x32xbf16>, vector<8x32xf32> -> vector<8x32xf32>
    %124 = tpu.concatenate %60, %81, %102, %123 in 1 : vector<8x32xf32>, vector<8x32xf32>, vector<8x32xf32>, vector<8x32xf32> -> vector<8x128xf32>
    %125 = arith.truncf %124 : vector<8x128xf32> to vector<8x128xbf16>
    %c0_36 = arith.constant 0 : index
    %c0_37 = arith.constant 0 : index
    %126 = vector.load %arg6[%c0_36, %c0_37] : memref<128x128xbf16, #tpu.memory_space<vmem>>, vector<128x128xbf16>
    %cst_38 = arith.constant dense<0.000000e+00> : vector<8x128xf32>
    %127 = tpu.matmul %125, %126, %cst_38 {dimension_numbers = #tpu.dot_dimension_numbers<[1], [0], [0], [1], [0, 0, 1, 1], [], []>} : vector<8x128xbf16>, vector<128x128xbf16>, vector<8x128xf32> -> vector<8x128xf32>
    %c0_39 = arith.constant 0 : index
    %c0_40 = arith.constant 0 : index
    %128 = vector.load %arg7[%c0_39, %c0_40] : memref<1x128xf32, #tpu.memory_space<vmem>>, vector<1x128xf32>
    %129 = vector.broadcast %128 : vector<1x128xf32> to vector<8x128xf32>
    %130 = arith.addf %127, %129 : vector<8x128xf32>
    %c0_41 = arith.constant 0 : index
    %c0_42 = arith.constant 0 : index
    %131 = vector.load %arg8[%c0_41, %c0_42] : memref<1x128xf32, #tpu.memory_space<vmem>>, vector<1x128xf32>
    %132 = vector.broadcast %131 : vector<1x128xf32> to vector<8x128xf32>
    %133 = arith.mulf %132, %130 : vector<8x128xf32>
    %134 = arith.addf %1, %133 : vector<8x128xf32>
    %c0_43 = arith.constant 0 : index
    %c0_44 = arith.constant 0 : index
    %135 = vector.load %arg9[%c0_43, %c0_44] : memref<1x128xf32, #tpu.memory_space<vmem>>, vector<1x128xf32>
    %c0_45 = arith.constant 0 : index
    %c0_46 = arith.constant 0 : index
    %136 = vector.load %arg10[%c0_45, %c0_46] : memref<1x128xf32, #tpu.memory_space<vmem>>, vector<1x128xf32>
    %cst_47 = arith.constant dense<0.000000e+00> : vector<8xf32>
    %137 = vector.multi_reduction <add>, %134, %cst_47 [1] : vector<8x128xf32> to vector<8xf32>
    %138 = vector.shape_cast %137 : vector<8xf32> to vector<8x1xf32>
    %cst_48 = arith.constant 1.280000e+02 : f32
    %139 = vector.broadcast %cst_48 : f32 to vector<8x1xf32>
    %140 = arith.divf %138, %139 : vector<8x1xf32>
    %141 = vector.broadcast %140 : vector<8x1xf32> to vector<8x128xf32>
    %142 = arith.subf %134, %141 : vector<8x128xf32>
    %143 = arith.mulf %142, %142 : vector<8x128xf32>
    %cst_49 = arith.constant dense<0.000000e+00> : vector<8xf32>
    %144 = vector.multi_reduction <add>, %143, %cst_49 [1] : vector<8x128xf32> to vector<8xf32>
    %145 = vector.shape_cast %144 : vector<8xf32> to vector<8x1xf32>
    %cst_50 = arith.constant 1.280000e+02 : f32
    %146 = vector.broadcast %cst_50 : f32 to vector<8x1xf32>
    %147 = arith.divf %145, %146 : vector<8x1xf32>
    %148 = vector.broadcast %140 : vector<8x1xf32> to vector<8x128xf32>
    %149 = arith.subf %134, %148 : vector<8x128xf32>
    %cst_51 = arith.constant 9.99999997E-7 : f32
    %150 = vector.broadcast %cst_51 : f32 to vector<8x1xf32>
    %151 = arith.addf %147, %150 : vector<8x1xf32>
    %152 = math.rsqrt %151 : vector<8x1xf32>
    %153 = vector.broadcast %152 : vector<8x1xf32> to vector<8x128xf32>
    %154 = arith.mulf %149, %153 : vector<8x128xf32>
    %155 = vector.broadcast %135 : vector<1x128xf32> to vector<8x128xf32>
    %156 = arith.mulf %154, %155 : vector<8x128xf32>
    %157 = vector.broadcast %136 : vector<1x128xf32> to vector<8x128xf32>
    %158 = arith.addf %156, %157 : vector<8x128xf32>
    %159 = arith.truncf %158 : vector<8x128xf32> to vector<8x128xbf16>
    %c0_52 = arith.constant 0 : index
    %c0_53 = arith.constant 0 : index
    %160 = vector.load %arg11[%c0_52, %c0_53] : memref<128x512xbf16, #tpu.memory_space<vmem>>, vector<128x512xbf16>
    %cst_54 = arith.constant dense<0.000000e+00> : vector<8x512xf32>
    %161 = tpu.matmul %159, %160, %cst_54 {dimension_numbers = #tpu.dot_dimension_numbers<[1], [0], [0], [1], [0, 0, 1, 1], [], []>} : vector<8x128xbf16>, vector<128x512xbf16>, vector<8x512xf32> -> vector<8x512xf32>
    %c0_55 = arith.constant 0 : index
    %c0_56 = arith.constant 0 : index
    %162 = vector.load %arg12[%c0_55, %c0_56] : memref<1x512xf32, #tpu.memory_space<vmem>>, vector<1x512xf32>
    %163 = vector.broadcast %162 : vector<1x512xf32> to vector<8x512xf32>
    %164 = arith.addf %161, %163 : vector<8x512xf32>
    %165 = arith.mulf %164, %164 : vector<8x512xf32>
    %166 = arith.mulf %164, %165 : vector<8x512xf32>
    %cst_57 = arith.constant 4.471500e-02 : f32
    %167 = vector.broadcast %cst_57 : f32 to vector<8x512xf32>
    %168 = arith.mulf %167, %166 : vector<8x512xf32>
    %169 = arith.addf %164, %168 : vector<8x512xf32>
    %cst_58 = arith.constant 0.797884583 : f32
    %170 = vector.broadcast %cst_58 : f32 to vector<8x512xf32>
    %171 = arith.mulf %170, %169 : vector<8x512xf32>
    %172 = math.tanh %171 : vector<8x512xf32>
    %cst_59 = arith.constant 1.000000e+00 : f32
    %173 = vector.broadcast %cst_59 : f32 to vector<8x512xf32>
    %174 = arith.addf %173, %172 : vector<8x512xf32>
    %cst_60 = arith.constant 5.000000e-01 : f32
    %175 = vector.broadcast %cst_60 : f32 to vector<8x512xf32>
    %176 = arith.mulf %175, %174 : vector<8x512xf32>
    %177 = arith.mulf %164, %176 : vector<8x512xf32>
    %178 = arith.truncf %177 : vector<8x512xf32> to vector<8x512xbf16>
    %c0_61 = arith.constant 0 : index
    %c0_62 = arith.constant 0 : index
    %179 = vector.load %arg13[%c0_61, %c0_62] : memref<512x128xbf16, #tpu.memory_space<vmem>>, vector<512x128xbf16>
    %cst_63 = arith.constant dense<0.000000e+00> : vector<8x128xf32>
    %180 = tpu.matmul %178, %179, %cst_63 {dimension_numbers = #tpu.dot_dimension_numbers<[1], [0], [0], [1], [0, 0, 1, 1], [], []>} : vector<8x512xbf16>, vector<512x128xbf16>, vector<8x128xf32> -> vector<8x128xf32>
    %c0_64 = arith.constant 0 : index
    %c0_65 = arith.constant 0 : index
    %181 = vector.load %arg14[%c0_64, %c0_65] : memref<1x128xf32, #tpu.memory_space<vmem>>, vector<1x128xf32>
    %182 = vector.broadcast %181 : vector<1x128xf32> to vector<8x128xf32>
    %183 = arith.addf %180, %182 : vector<8x128xf32>
    %c0_66 = arith.constant 0 : index
    %c0_67 = arith.constant 0 : index
    %184 = vector.load %arg15[%c0_66, %c0_67] : memref<1x128xf32, #tpu.memory_space<vmem>>, vector<1x128xf32>
    %185 = vector.broadcast %184 : vector<1x128xf32> to vector<8x128xf32>
    %186 = arith.mulf %185, %183 : vector<8x128xf32>
    %187 = arith.addf %134, %186 : vector<8x128xf32>
    %c0_68 = arith.constant 0 : index
    %c0_69 = arith.constant 0 : index
    %c0_70 = arith.constant 0 : index
    %188 = vector.load %arg16[%c0_68, %c0_69, %c0_70] : memref<1x8x128xf32, #tpu.memory_space<vmem>>, vector<1x8x128xf32>
    %189 = vector.shape_cast %188 : vector<1x8x128xf32> to vector<8x128xf32>
    %190 = vector.shape_cast %187 : vector<8x128xf32> to vector<1x8x128xf32>
    tpu.vector_store %arg16[%c0_68, %c0_69, %c0_70], %190 {strides = array<i32>} : memref<1x8x128xf32, #tpu.memory_space<vmem>>, vector<1x8x128xf32>,
    return
  }
  func.func @transform_0(%arg0: i32) -> (i32, i32, i32) {
    %c0_i32 = arith.constant 0 : i32
    %c0_i32_0 = arith.constant 0 : i32
    %c0_i32_1 = arith.constant 0 : i32
    return %arg0, %c0_i32, %c0_i32_0 : i32, i32, i32
  }
  func.func @transform_1(%arg0: i32) -> (i32, i32) {
    %c0_i32 = arith.constant 0 : i32
    %c0_i32_0 = arith.constant 0 : i32
    %c0_i32_1 = arith.constant 0 : i32
    return %c0_i32, %c0_i32_0 : i32, i32
  }
  func.func @transform_2(%arg0: i32) -> (i32, i32) {
    %c0_i32 = arith.constant 0 : i32
    %c0_i32_0 = arith.constant 0 : i32
    %c0_i32_1 = arith.constant 0 : i32
    return %c0_i32, %c0_i32_0 : i32, i32
  }
  func.func @transform_3(%arg0: i32) -> (i32, i32) {
    %c0_i32 = arith.constant 0 : i32
    %c0_i32_0 = arith.constant 0 : i32
    %c0_i32_1 = arith.constant 0 : i32
    return %c0_i32, %c0_i32_0 : i32, i32
  }
  func.func @transform_4(%arg0: i32) -> (i32, i32) {
    %c0_i32 = arith.constant 0 : i32
    %c0_i32_0 = arith.constant 0 : i32
    %c0_i32_1 = arith.constant 0 : i32
    return %c0_i32, %c0_i32_0 : i32, i32
  }
  func.func @transform_5(%arg0: i32) -> (i32, i32) {
    %c0_i32 = arith.constant 0 : i32
    %c0_i32_0 = arith.constant 0 : i32
    %c0_i32_1 = arith.constant 0 : i32
    return %c0_i32, %c0_i32_0 : i32, i32
  }
  func.func @transform_6(%arg0: i32) -> (i32, i32) {
    %c0_i32 = arith.constant 0 : i32
    %c0_i32_0 = arith.constant 0 : i32
    %c0_i32_1 = arith.constant 0 : i32
    return %c0_i32, %c0_i32_0 : i32, i32
  }
  func.func @transform_7(%arg0: i32) -> (i32, i32) {
    %c0_i32 = arith.constant 0 : i32
    %c0_i32_0 = arith.constant 0 : i32
    %c0_i32_1 = arith.constant 0 : i32
    return %c0_i32, %c0_i32_0 : i32, i32
  }
  func.func @transform_8(%arg0: i32) -> (i32, i32) {
    %c0_i32 = arith.constant 0 : i32
    %c0_i32_0 = arith.constant 0 : i32
    %c0_i32_1 = arith.constant 0 : i32
    return %c0_i32, %c0_i32_0 : i32, i32
  }
  func.func @transform_9(%arg0: i32) -> (i32, i32) {
    %c0_i32 = arith.constant 0 : i32
    %c0_i32_0 = arith.constant 0 : i32
    %c0_i32_1 = arith.constant 0 : i32
    return %c0_i32, %c0_i32_0 : i32, i32
  }
  func.func @transform_10(%arg0: i32) -> (i32, i32) {
    %c0_i32 = arith.constant 0 : i32
    %c0_i32_0 = arith.constant 0 : i32
    %c0_i32_1 = arith.constant 0 : i32
    return %c0_i32, %c0_i32_0 : i32, i32
  }
  func.func @transform_11(%arg0: i32) -> (i32, i32) {
    %c0_i32 = arith.constant 0 : i32
    %c0_i32_0 = arith.constant 0 : i32
    %c0_i32_1 = arith.constant 0 : i32
    return %c0_i32, %c0_i32_0 : i32, i32
  }
  func.func @transform_12(%arg0: i32) -> (i32, i32) {
    %c0_i32 = arith.constant 0 : i32
    %c0_i32_0 = arith.constant 0 : i32
    %c0_i32_1 = arith.constant 0 : i32
    return %c0_i32, %c0_i32_0 : i32, i32
  }
  func.func @transform_13(%arg0: i32) -> (i32, i32) {
    %c0_i32 = arith.constant 0 : i32
    %c0_i32_0 = arith.constant 0 : i32
    %c0_i32_1 = arith.constant 0 : i32
    return %c0_i32, %c0_i32_0 : i32, i32
  }
  func.func @transform_14(%arg0: i32) -> (i32, i32) {
    %c0_i32 = arith.constant 0 : i32
    %c0_i32_0 = arith.constant 0 : i32
    %c0_i32_1 = arith.constant 0 : i32
    return %c0_i32, %c0_i32_0 : i32, i32
  }
  func.func @transform_15(%arg0: i32) -> (i32, i32, i32) {
    %c0_i32 = arith.constant 0 : i32
    %c0_i32_0 = arith.constant 0 : i32
    %c0_i32_1 = arith.constant 0 : i32
    return %arg0, %c0_i32, %c0_i32_0 : i32, i32, i32
  }
}

module attributes {stable_mosaic.version = 11 : i64} {
  func.func @_head_kernel(%arg0: i32, %arg1: memref<2x128xf32, #tpu.memory_space<vmem>>, %arg2: memref<1x128xf32, #tpu.memory_space<vmem>>, %arg3: memref<1x128xf32, #tpu.memory_space<vmem>>, %arg4: memref<128x9xf32, #tpu.memory_space<vmem>>, %arg5: memref<1x9xf32, #tpu.memory_space<vmem>>, %arg6: memref<2x9xf32, #tpu.memory_space<vmem>>) attributes {dimension_semantics = [#tpu.dimension_semantics<arbitrary>], iteration_bounds = array<i64: 1>, scalar_prefetch = 0 : i64, scratch_operands = 0 : i64, tpu.core_type = #tpu.core_type<tc>, window_params = [{pipeline_mode = #tpu.pipeline_mode<synchronous>, transform_indices = @transform_0, window_bounds = array<i64: 2, 128>}, {pipeline_mode = #tpu.pipeline_mode<synchronous>, transform_indices = @transform_1, window_bounds = array<i64: 1, 128>}, {pipeline_mode = #tpu.pipeline_mode<synchronous>, transform_indices = @transform_2, window_bounds = array<i64: 1, 128>}, {pipeline_mode = #tpu.pipeline_mode<synchronous>, transform_indices = @transform_3, window_bounds = array<i64: 128, 9>}, {pipeline_mode = #tpu.pipeline_mode<synchronous>, transform_indices = @transform_4, window_bounds = array<i64: 1, 9>}, {pipeline_mode = #tpu.pipeline_mode<synchronous>, transform_indices = @transform_5, window_bounds = array<i64: 2, 9>}]} {
    %c0 = arith.constant 0 : index
    %c0_0 = arith.constant 0 : index
    %0 = vector.load %arg1[%c0, %c0_0] : memref<2x128xf32, #tpu.memory_space<vmem>>, vector<2x128xf32>
    %c0_1 = arith.constant 0 : index
    %c0_2 = arith.constant 0 : index
    %1 = vector.load %arg2[%c0_1, %c0_2] : memref<1x128xf32, #tpu.memory_space<vmem>>, vector<1x128xf32>
    %c0_3 = arith.constant 0 : index
    %c0_4 = arith.constant 0 : index
    %2 = vector.load %arg3[%c0_3, %c0_4] : memref<1x128xf32, #tpu.memory_space<vmem>>, vector<1x128xf32>
    %cst = arith.constant dense<0.000000e+00> : vector<2xf32>
    %3 = vector.multi_reduction <add>, %0, %cst [1] : vector<2x128xf32> to vector<2xf32>
    %4 = vector.shape_cast %3 : vector<2xf32> to vector<2x1xf32>
    %cst_5 = arith.constant 1.280000e+02 : f32
    %5 = vector.broadcast %cst_5 : f32 to vector<2x1xf32>
    %6 = arith.divf %4, %5 : vector<2x1xf32>
    %7 = vector.broadcast %6 : vector<2x1xf32> to vector<2x128xf32>
    %8 = arith.subf %0, %7 : vector<2x128xf32>
    %9 = arith.mulf %8, %8 : vector<2x128xf32>
    %cst_6 = arith.constant dense<0.000000e+00> : vector<2xf32>
    %10 = vector.multi_reduction <add>, %9, %cst_6 [1] : vector<2x128xf32> to vector<2xf32>
    %11 = vector.shape_cast %10 : vector<2xf32> to vector<2x1xf32>
    %cst_7 = arith.constant 1.280000e+02 : f32
    %12 = vector.broadcast %cst_7 : f32 to vector<2x1xf32>
    %13 = arith.divf %11, %12 : vector<2x1xf32>
    %14 = vector.broadcast %6 : vector<2x1xf32> to vector<2x128xf32>
    %15 = arith.subf %0, %14 : vector<2x128xf32>
    %cst_8 = arith.constant 9.99999997E-7 : f32
    %16 = vector.broadcast %cst_8 : f32 to vector<2x1xf32>
    %17 = arith.addf %13, %16 : vector<2x1xf32>
    %18 = math.rsqrt %17 : vector<2x1xf32>
    %19 = vector.broadcast %18 : vector<2x1xf32> to vector<2x128xf32>
    %20 = arith.mulf %15, %19 : vector<2x128xf32>
    %21 = vector.broadcast %1 : vector<1x128xf32> to vector<2x128xf32>
    %22 = arith.mulf %20, %21 : vector<2x128xf32>
    %23 = vector.broadcast %2 : vector<1x128xf32> to vector<2x128xf32>
    %24 = arith.addf %22, %23 : vector<2x128xf32>
    %c0_9 = arith.constant 0 : index
    %c0_10 = arith.constant 0 : index
    %25 = vector.load %arg4[%c0_9, %c0_10] : memref<128x9xf32, #tpu.memory_space<vmem>>, vector<128x9xf32>
    %cst_11 = arith.constant dense<0.000000e+00> : vector<2x9xf32>
    %26 = tpu.matmul %24, %25, %cst_11 {dimension_numbers = #tpu.dot_dimension_numbers<[1], [0], [0], [1], [0, 0, 1, 1], [], []>} : vector<2x128xf32>, vector<128x9xf32>, vector<2x9xf32> -> vector<2x9xf32>
    %c0_12 = arith.constant 0 : index
    %c0_13 = arith.constant 0 : index
    %27 = vector.load %arg5[%c0_12, %c0_13] : memref<1x9xf32, #tpu.memory_space<vmem>>, vector<1x9xf32>
    %28 = vector.broadcast %27 : vector<1x9xf32> to vector<2x9xf32>
    %29 = arith.addf %26, %28 : vector<2x9xf32>
    %c0_14 = arith.constant 0 : index
    %c0_15 = arith.constant 0 : index
    %30 = vector.load %arg6[%c0_14, %c0_15] : memref<2x9xf32, #tpu.memory_space<vmem>>, vector<2x9xf32>
    tpu.vector_store %arg6[%c0_14, %c0_15], %29 {strides = array<i32>} : memref<2x9xf32, #tpu.memory_space<vmem>>, vector<2x9xf32>,
    return
  }
  func.func @transform_0(%arg0: i32) -> (i32, i32) {
    %c0_i32 = arith.constant 0 : i32
    %c0_i32_0 = arith.constant 0 : i32
    %c0_i32_1 = arith.constant 0 : i32
    return %c0_i32, %c0_i32_0 : i32, i32
  }
  func.func @transform_1(%arg0: i32) -> (i32, i32) {
    %c0_i32 = arith.constant 0 : i32
    %c0_i32_0 = arith.constant 0 : i32
    %c0_i32_1 = arith.constant 0 : i32
    return %c0_i32, %c0_i32_0 : i32, i32
  }
  func.func @transform_2(%arg0: i32) -> (i32, i32) {
    %c0_i32 = arith.constant 0 : i32
    %c0_i32_0 = arith.constant 0 : i32
    %c0_i32_1 = arith.constant 0 : i32
    return %c0_i32, %c0_i32_0 : i32, i32
  }
  func.func @transform_3(%arg0: i32) -> (i32, i32) {
    %c0_i32 = arith.constant 0 : i32
    %c0_i32_0 = arith.constant 0 : i32
    %c0_i32_1 = arith.constant 0 : i32
    return %c0_i32, %c0_i32_0 : i32, i32
  }
  func.func @transform_4(%arg0: i32) -> (i32, i32) {
    %c0_i32 = arith.constant 0 : i32
    %c0_i32_0 = arith.constant 0 : i32
    %c0_i32_1 = arith.constant 0 : i32
    return %c0_i32, %c0_i32_0 : i32, i32
  }
  func.func @transform_5(%arg0: i32) -> (i32, i32) {
    %c0_i32 = arith.constant 0 : i32
    %c0_i32_0 = arith.constant 0 : i32
    %c0_i32_1 = arith.constant 0 : i32
    return %c0_i32, %c0_i32_0 : i32, i32
  }
}

</mosaic_0001>

<llo_original>
// kernel: forward.4
$region0: #{forward.4}
  #allocation0 [shape = 'u32[]', space=smem, size = 0x4, offset = 0x4, fixed_abs, tag = 'smem constant byte address 0x4 - core index']
  #allocation1 [shape = 'u32[144,128]{1,0:T(1,128)}', space=vmem, size = 0x12000, scoped, tag = 'internal scratch']
  %s0 = inlined_call_operand.vmem [shape: f32[8,588], index: 0, kind: input, shape index: {}]
  %s1 = inlined_call_operand.vmem [shape: bf16[588,128], index: 1, kind: input, shape index: {}]
  %s2 = inlined_call_operand.vmem [shape: f32[1,128], index: 2, kind: input, shape index: {}]
  %s3 = inlined_call_operand.vmem [shape: f32[8,128], index: 3, kind: output, shape index: {}]
  %s4 = sld [smem:[#allocation0]]
  $region22: #{forward.4} parent=0
    _
  %s6 = ssub.s32 1, %s4
  %s7 = scalar_select 0, %s6, %s4
  // Predicated region
  $region2: #{forward.4} parent=0 // pred_check
    _
  $region3: #{forward.4} parent=0 // pred_check_branch
    %9 = sbr.rel (0) target = $region5
  $region4: #{forward.4} parent=0 // pred_region
    _
  $region5: #{forward.4} parent=0 // pred_fallthru
    _
  // Predicated region
  $region6: #{forward.4} parent=0 // pred_check
    _
  $region7: #{forward.4} parent=0 // pred_check_branch
    %11 = sbr.rel (0) target = $region9
  $region8: #{forward.4} parent=0 // pred_region
    _
  $region9: #{forward.4} parent=0 // pred_fallthru
    _
  // Predicated region
  $region10: #{forward.4} parent=0 // pred_check
    _
  $region11: #{forward.4} parent=0 // pred_check_branch
    %13 = sbr.rel (0) target = $region13
  $region12: #{forward.4} parent=0 // pred_region
    _
  $region13: #{forward.4} parent=0 // pred_fallthru
    _
  %v15 = vld [vmem:[%s0] sm:$0xff]
  %v16 = vld [vmem:[%s0 + $0x8] sm:$0xff]
  %v17 = vld [vmem:[%s0 + $0x10] sm:$0xff]
  %v18 = vld [vmem:[%s0 + $0x18] sm:$0xff]
  %v19 = vld [vmem:[%s0 + $0x20] sm:$0xff]
  %v20 = vpack.c.bf16 %v15, %v15
  %v21 = vpack.c.bf16 %v16, %v16
  %v22 = vpack.c.bf16 %v17, %v17
  %v23 = vpack.c.bf16 %v18, %v18
  %v24 = vpack.c.bf16 %v19, %v19
  %v25 = vld [vmem:[%s1] sm:$0xf]
  %v26 = vld [vmem:[%s1 + $0x4] sm:$0xf]
  %v27 = vld [vmem:[%s1 + $0x8] sm:$0xf]
  %v28 = vld [vmem:[%s1 + $0xc] sm:$0xf]
  %v29 = vld [vmem:[%s1 + $0x10] sm:$0xf]
  %v30 = vld [vmem:[%s1 + $0x14] sm:$0xf]
  %v31 = vld [vmem:[%s1 + $0x18] sm:$0xf]
  %v32 = vld [vmem:[%s1 + $0x1c] sm:$0xf]
  %v33 = vld [vmem:[%s1 + $0x20] sm:$0xf]
  %v34 = vld [vmem:[%s1 + $0x24] sm:$0xf]
  %v35 = vld [vmem:[%s1 + $0x28] sm:$0xf]
  %v36 = vld [vmem:[%s1 + $0x2c] sm:$0xf]
  %v37 = vld [vmem:[%s1 + $0x30] sm:$0xf]
  %v38 = vld [vmem:[%s1 + $0x34] sm:$0xf]
  %v39 = vld [vmem:[%s1 + $0x38] sm:$0xf]
  %v40 = vld [vmem:[%s1 + $0x3c] sm:$0xf]
  %v41 = vld [vmem:[%s1 + $0x40] sm:$0xf]
  %v42 = vld [vmem:[%s1 + $0x44] sm:$0xf]
  %v43 = vld [vmem:[%s1 + $0x48] sm:$0xf]
  %v44 = vld [vmem:[%s1 + $0x4c] sm:$0xf]
  %v45 = vld [vmem:[%s1 + $0x50] sm:$0xf]
  %v46 = vld [vmem:[%s1 + $0x54] sm:$0xf]
  %v47 = vld [vmem:[%s1 + $0x58] sm:$0xf]
  %v48 = vld [vmem:[%s1 + $0x5c] sm:$0xf]
  %v49 = vld [vmem:[%s1 + $0x60] sm:$0xf]
  %v50 = vld [vmem:[%s1 + $0x64] sm:$0xf]
  %v51 = vld [vmem:[%s1 + $0x68] sm:$0xf]
  %v52 = vld [vmem:[%s1 + $0x6c] sm:$0xf]
  %v53 = vld [vmem:[%s1 + $0x70] sm:$0xf]
  %v54 = vld [vmem:[%s1 + $0x74] sm:$0xf]
  %v55 = vld [vmem:[%s1 + $0x78] sm:$0xf]
  %v56 = vld [vmem:[%s1 + $0x7c] sm:$0xf]
  %v57 = vld [vmem:[%s1 + $0x80] sm:$0xf]
  %v58 = vld [vmem:[%s1 + $0x84] sm:$0xf]
  %v59 = vld [vmem:[%s1 + $0x88] sm:$0xf]
  %v60 = vld [vmem:[%s1 + $0x8c] sm:$0xf]
  %v61 = vld [vmem:[%s1 + $0x90] sm:$0xf]
  %v62 = vld [vmem:[%s1 + $0x94] sm:$0xf]
  %v63 = vld [vmem:[%s1 + $0x98] sm:$0xf]
  %v64 = vld [vmem:[%s1 + $0x9c] sm:$0xf]
  %v65 = vld [vmem:[%s1 + $0xa0] sm:$0xf]
  %v66 = vld [vmem:[%s1 + $0xa4] sm:$0xf]
  %v67 = vld [vmem:[%s1 + $0xa8] sm:$0xf]
  %v68 = vld [vmem:[%s1 + $0xac] sm:$0xf]
  %v69 = vld [vmem:[%s1 + $0xb0] sm:$0xf]
  %v70 = vld [vmem:[%s1 + $0xb4] sm:$0xf]
  %v71 = vld [vmem:[%s1 + $0xb8] sm:$0xf]
  %v72 = vld [vmem:[%s1 + $0xbc] sm:$0xf]
  %v73 = vld [vmem:[%s1 + $0xc0] sm:$0xf]
  %v74 = vld [vmem:[%s1 + $0xc4] sm:$0xf]
  %v75 = vld [vmem:[%s1 + $0xc8] sm:$0xf]
  %v76 = vld [vmem:[%s1 + $0xcc] sm:$0xf]
  %v77 = vld [vmem:[%s1 + $0xd0] sm:$0xf]
  %v78 = vld [vmem:[%s1 + $0xd4] sm:$0xf]
  %v79 = vld [vmem:[%s1 + $0xd8] sm:$0xf]
  %v80 = vld [vmem:[%s1 + $0xdc] sm:$0xf]
  %v81 = vld [vmem:[%s1 + $0xe0] sm:$0xf]
  %v82 = vld [vmem:[%s1 + $0xe4] sm:$0xf]
  %v83 = vld [vmem:[%s1 + $0xe8] sm:$0xf]
  %v84 = vld [vmem:[%s1 + $0xec] sm:$0xf]
  %v85 = vld [vmem:[%s1 + $0xf0] sm:$0xf]
  %v86 = vld [vmem:[%s1 + $0xf4] sm:$0xf]
  %v87 = vld [vmem:[%s1 + $0xf8] sm:$0xf]
  %v88 = vld [vmem:[%s1 + $0xfc] sm:$0xf]
  %v89 = vld [vmem:[%s1 + $0x100] sm:$0xf]
  %v90 = vld [vmem:[%s1 + $0x104] sm:$0xf]
  %v91 = vld [vmem:[%s1 + $0x108] sm:$0xf]
  %v92 = vld [vmem:[%s1 + $0x10c] sm:$0xf]
  %v93 = vld [vmem:[%s1 + $0x110] sm:$0xf]
  %v94 = vld [vmem:[%s1 + $0x114] sm:$0xf]
  %v95 = vld [vmem:[%s1 + $0x118] sm:$0xf]
  %v96 = vld [vmem:[%s1 + $0x11c] sm:$0xf]
  %v97 = vld [vmem:[%s1 + $0x120] sm:$0xf]
  %v98 = vld [vmem:[%s1 + $0x124] sm:$0x3]
  %v99 = vld [vmem:[%s2] sm:$0x1]
  %v101 = vlaneseq
  %v102 = vshrl.u32 %v101, 7
  %v103 = vsub.s32 0, %v102
  %v104 = vrot.slane %v99, %v103
  %v180 = vunpack.c.l.b16 %v25
  %v181 = vunpack.c.l.b16 %v26
  %v182 = vunpack.c.l.b16 %v27
  %v183 = vunpack.c.l.b16 %v28
  %v184 = vunpack.c.l.b16 %v29
  %v185 = vunpack.c.l.b16 %v30
  %v186 = vunpack.c.l.b16 %v31
  %v187 = vunpack.c.l.b16 %v32
  %v188 = vunpack.c.l.b16 %v33
  %v189 = vunpack.c.l.b16 %v34
  %v190 = vunpack.c.l.b16 %v35
  %v191 = vunpack.c.l.b16 %v36
  %v192 = vunpack.c.l.b16 %v37
  %v193 = vunpack.c.l.b16 %v38
  %v194 = vunpack.c.l.b16 %v39
  %v195 = vunpack.c.l.b16 %v40
  %v196 = vunpack.c.l.b16 %v41
  %v197 = vunpack.c.l.b16 %v42
  %v198 = vunpack.c.l.b16 %v43
  %v199 = vunpack.c.l.b16 %v44
  %v200 = vunpack.c.l.b16 %v45
  %v201 = vunpack.c.l.b16 %v46
  %v202 = vunpack.c.l.b16 %v47
  %v203 = vunpack.c.l.b16 %v48
  %v204 = vunpack.c.l.b16 %v49
  %v205 = vunpack.c.l.b16 %v50
  %v206 = vunpack.c.l.b16 %v51
  %v207 = vunpack.c.l.b16 %v52
  %v208 = vunpack.c.l.b16 %v53
  %v209 = vunpack.c.l.b16 %v54
  %v210 = vunpack.c.l.b16 %v55
  %v211 = vunpack.c.l.b16 %v56
  %v212 = vunpack.c.l.b16 %v57
  %v213 = vunpack.c.l.b16 %v58
  %v214 = vunpack.c.l.b16 %v59
  %v215 = vunpack.c.l.b16 %v60
  %v216 = vunpack.c.l.b16 %v61
  %v217 = vunpack.c.l.b16 %v62
  %v218 = vunpack.c.l.b16 %v63
  %v219 = vunpack.c.l.b16 %v64
  %v220 = vunpack.c.l.b16 %v65
  %v221 = vunpack.c.l.b16 %v66
  %v222 = vunpack.c.l.b16 %v67
  %v223 = vunpack.c.l.b16 %v68
  %v224 = vunpack.c.l.b16 %v69
  %v225 = vunpack.c.l.b16 %v70
  %v226 = vunpack.c.l.b16 %v71
  %v227 = vunpack.c.l.b16 %v72
  %v228 = vunpack.c.l.b16 %v73
  %v229 = vunpack.c.l.b16 %v74
  %v230 = vunpack.c.l.b16 %v75
  %v231 = vunpack.c.l.b16 %v76
  %v232 = vunpack.c.l.b16 %v77
  %v233 = vunpack.c.l.b16 %v78
  %v234 = vunpack.c.l.b16 %v79
  %v235 = vunpack.c.l.b16 %v80
  %v236 = vunpack.c.l.b16 %v81
  %v237 = vunpack.c.l.b16 %v82
  %v238 = vunpack.c.l.b16 %v83
  %v239 = vunpack.c.l.b16 %v84
  %v240 = vunpack.c.l.b16 %v85
  %v241 = vunpack.c.l.b16 %v86
  %v242 = vunpack.c.l.b16 %v87
  %v243 = vunpack.c.l.b16 %v88
  %v244 = vunpack.c.l.b16 %v89
  %v245 = vunpack.c.l.b16 %v90
  %v246 = vunpack.c.l.b16 %v91
  %v247 = vunpack.c.l.b16 %v92
  %v248 = vunpack.c.l.b16 %v93
  %v249 = vunpack.c.l.b16 %v94
  %v250 = vunpack.c.l.b16 %v95
  %v251 = vunpack.c.l.b16 %v96
  %v252 = vunpack.c.l.b16 %v97
  %v253 = vunpack.c.l.b16 %v98
  %v254 = vpack.c.b16 %v181, %v180
  %v255 = vpack.c.b16 %v183, %v182
  %v256 = vpack.c.b16 %v185, %v184
  %v257 = vpack.c.b16 %v187, %v186
  %v258 = vpack.c.b16 %v189, %v188
  %v259 = vpack.c.b16 %v191, %v190
  %v260 = vpack.c.b16 %v193, %v192
  %v261 = vpack.c.b16 %v195, %v194
  %v262 = vpack.c.b16 %v197, %v196
  %v263 = vpack.c.b16 %v199, %v198
  %v264 = vpack.c.b16 %v201, %v200
  %v265 = vpack.c.b16 %v203, %v202
  %v266 = vpack.c.b16 %v205, %v204
  %v267 = vpack.c.b16 %v207, %v206
  %v268 = vpack.c.b16 %v209, %v208
  %v269 = vpack.c.b16 %v211, %v210
  %v270 = vpack.c.b16 %v213, %v212
  %v271 = vpack.c.b16 %v215, %v214
  %v272 = vpack.c.b16 %v217, %v216
  %v273 = vpack.c.b16 %v219, %v218
  %v274 = vpack.c.b16 %v221, %v220
  %v275 = vpack.c.b16 %v223, %v222
  %v276 = vpack.c.b16 %v225, %v224
  %v277 = vpack.c.b16 %v227, %v226
  %v278 = vpack.c.b16 %v229, %v228
  %v279 = vpack.c.b16 %v231, %v230
  %v280 = vpack.c.b16 %v233, %v232
  %v281 = vpack.c.b16 %v235, %v234
  %v282 = vpack.c.b16 %v237, %v236
  %v283 = vpack.c.b16 %v239, %v238
  %v284 = vpack.c.b16 %v241, %v240
  %v285 = vpack.c.b16 %v243, %v242
  %v286 = vpack.c.b16 %v245, %v244
  %v287 = vpack.c.b16 %v247, %v246
  %v288 = vpack.c.b16 %v249, %v248
  %v289 = vpack.c.b16 %v251, %v250
  %v290 = vpack.c.b16 %v253, %v252
  %vm327 = vcmask 621568
  %v329 = vsel %vm327, %v24, 0
  %vm331 = vcmask 1045504
  %v333 = vsel %vm331, %v290, 0
  %335 = vmatprep.subr.bf16.mxu0 0
  %336 = vmatpush1.bf16.msra.mxu0 %v254
  %337 = vmatprep.subr.bf16.mxu0 0
  %338 = vmatpush1.bf16.msra.mxu0 %v255
  %339 = vmatprep.subr.bf16.mxu0 0
  %340 = vmatpush1.bf16.msra.mxu0 %v256
  %341 = vmatprep.subr.bf16.mxu0 0
  %342 = vmatpush1.bf16.msra.mxu0 %v257
  %343 = vmatprep.subr.bf16.mxu0 0
  %344 = vmatpush1.bf16.msra.mxu0 %v258
  %345 = vmatprep.subr.bf16.mxu0 0
  %346 = vmatpush1.bf16.msra.mxu0 %v259
  %347 = vmatprep.subr.bf16.mxu0 0
  %348 = vmatpush1.bf16.msra.mxu0 %v260
  %349 = vmatprep.subr.bf16.mxu0 0
  %350 = vmatpush1.bf16.msra.mxu0 %v261
  %351 = vmatprep.subr.bf16.mxu0 0
  %352 = vmatpush1.bf16.msra.mxu0 %v262
  %353 = vmatprep.subr.bf16.mxu0 0
  %354 = vmatpush1.bf16.msra.mxu0 %v263
  %355 = vmatprep.subr.bf16.mxu0 0
  %356 = vmatpush1.bf16.msra.mxu0 %v264
  %357 = vmatprep.subr.bf16.mxu0 0
  %358 = vmatpush1.bf16.msra.mxu0 %v265
  %359 = vmatprep.subr.bf16.mxu0 0
  %360 = vmatpush1.bf16.msra.mxu0 %v266
  %361 = vmatprep.subr.bf16.mxu0 0
  %362 = vmatpush1.bf16.msra.mxu0 %v267
  %363 = vmatprep.subr.bf16.mxu0 0
  %364 = vmatpush1.bf16.msra.mxu0 %v268
  %365 = vmatprep.subr.bf16.mxu0 0
  %366 = vmatpush1.bf16.msra.mxu0 %v269
  %367 = vmatprep.mubr.bf16.mxu0 %v21
  %368 = vmatmul.mubr.bf16.gmra.mrb[0].mxu0 %v20
  %v369 = vpop.f32.mrb[0].mxu0
  %v370 = vadd.f32 %v104, %v369
  %v371 = vpop.f32.mrb[0].mxu0
  %v372 = vpop.f32.mrb[0].mxu0
  %v373 = vpop.f32.mrb[0].mxu0
  %374 = vdwg.mxu0
  %375 = vmatprep.subr.bf16.mxu0 0
  %376 = vmatpush1.bf16.msra.mxu0 %v270
  %377 = vmatprep.subr.bf16.mxu0 0
  %378 = vmatpush1.bf16.msra.mxu0 %v271
  %379 = vmatprep.subr.bf16.mxu0 0
  %380 = vmatpush1.bf16.msra.mxu0 %v272
  %381 = vmatprep.subr.bf16.mxu0 0
  %382 = vmatpush1.bf16.msra.mxu0 %v273
  %383 = vmatprep.subr.bf16.mxu0 0
  %384 = vmatpush1.bf16.msra.mxu0 %v274
  %385 = vmatprep.subr.bf16.mxu0 0
  %386 = vmatpush1.bf16.msra.mxu0 %v275
  %387 = vmatprep.subr.bf16.mxu0 0
  %388 = vmatpush1.bf16.msra.mxu0 %v276
  %389 = vmatprep.subr.bf16.mxu0 0
  %390 = vmatpush1.bf16.msra.mxu0 %v277
  %391 = vmatprep.subr.bf16.mxu0 0
  %392 = vmatpush1.bf16.msra.mxu0 %v278
  %393 = vmatprep.subr.bf16.mxu0 0
  %394 = vmatpush1.bf16.msra.mxu0 %v279
  %395 = vmatprep.subr.bf16.mxu0 0
  %396 = vmatpush1.bf16.msra.mxu0 %v280
  %397 = vmatprep.subr.bf16.mxu0 0
  %398 = vmatpush1.bf16.msra.mxu0 %v281
  %399 = vmatprep.subr.bf16.mxu0 0
  %400 = vmatpush1.bf16.msra.mxu0 %v282
  %401 = vmatprep.subr.bf16.mxu0 0
  %402 = vmatpush1.bf16.msra.mxu0 %v283
  %403 = vmatprep.subr.bf16.mxu0 0
  %404 = vmatpush1.bf16.msra.mxu0 %v284
  %405 = vmatprep.subr.bf16.mxu0 0
  %406 = vmatpush1.bf16.msra.mxu0 %v285
  %407 = vmatprep.mubr.bf16.mxu0 %v23
  %408 = vmatmul.mubr.bf16.gmra.mrb[0].mxu0 %v22
  %v409 = vpop.f32.mrb[0].mxu0
  %v410 = vadd.f32 %v370, %v409
  %v411 = vpop.f32.mrb[0].mxu0
  %v412 = vpop.f32.mrb[0].mxu0
  %v413 = vpop.f32.mrb[0].mxu0
  %414 = vdwg.mxu0
  %415 = vmatprep.subr.bf16.mxu0 0
  %416 = vmatpush1.bf16.msra.mxu0 %v286
  %417 = vmatprep.subr.bf16.mxu0 0
  %418 = vmatpush1.bf16.msra.mxu0 %v287
  %419 = vmatprep.subr.bf16.mxu0 0
  %420 = vmatpush1.bf16.msra.mxu0 %v288
  %421 = vmatprep.subr.bf16.mxu0 0
  %422 = vmatpush1.bf16.msra.mxu0 %v289
  %423 = vmatprep.subr.bf16.mxu0 0
  %424 = vmatpush1.bf16.msra.mxu0 %v333
  %425 = vmatprep.subr.bf16.mxu0 0
  %426 = vmatpush1.bf16.msra.mxu0 0
  %427 = vmatprep.subr.bf16.mxu0 0
  %428 = vmatpush1.bf16.msra.mxu0 0
  %429 = vmatprep.subr.bf16.mxu0 0
  %430 = vmatpush1.bf16.msra.mxu0 0
  %431 = vmatprep.subr.bf16.mxu0 0
  %432 = vmatpush1.bf16.msra.mxu0 0
  %433 = vmatprep.subr.bf16.mxu0 0
  %434 = vmatpush1.bf16.msra.mxu0 0
  %435 = vmatprep.subr.bf16.mxu0 0
  %436 = vmatpush1.bf16.msra.mxu0 0
  %437 = vmatprep.subr.bf16.mxu0 0
  %438 = vmatpush1.bf16.msra.mxu0 0
  %439 = vmatprep.subr.bf16.mxu0 0
  %440 = vmatpush1.bf16.msra.mxu0 0
  %441 = vmatprep.subr.bf16.mxu0 0
  %442 = vmatpush1.bf16.msra.mxu0 0
  %443 = vmatprep.subr.bf16.mxu0 0
  %444 = vmatpush1.bf16.msra.mxu0 0
  %445 = vmatprep.subr.bf16.mxu0 0
  %446 = vmatpush1.bf16.msra.mxu0 0
  %447 = vmatprep.mubr.bf16.mxu0 0
  %448 = vmatmul.mubr.bf16.gmra.mrb[0].mxu0 %v329
  %v449 = vpop.f32.mrb[0].mxu0
  %v450 = vadd.f32 %v410, %v449
  %v451 = vpop.f32.mrb[0].mxu0
  %v452 = vpop.f32.mrb[0].mxu0
  %v453 = vpop.f32.mrb[0].mxu0
  %454 = vdwg.mxu0
  %455 = vst [vmem:[%s3] sm:$0xff] %v450
  // Predicated region
  $region14: #{forward.4} parent=0 // pred_check
    _
  $region15: #{forward.4} parent=0 // pred_check_branch
    %457 = sbr.rel (0) target = $region17
  $region16: #{forward.4} parent=0 // pred_region
    _
  $region17: #{forward.4} parent=0 // pred_fallthru
    _
  // Predicated region
  $region18: #{forward.4} parent=0 // pred_check
    _
  $region19: #{forward.4} parent=0 // pred_check_branch
    %459 = sbr.rel (0) target = $region21
  $region20: #{forward.4} parent=0 // pred_region
    _
  $region21: #{forward.4} parent=0 // pred_fallthru
    _

// kernel: forward.7
$region0: #{forward.7}
  #allocation0 [shape = 'u32[]', space=smem, size = 0x4, offset = 0x4, fixed_abs, tag = 'smem constant byte address 0x4 - core index']
  #allocation1 [shape = 'u32[144,128]{1,0:T(1,128)}', space=vmem, size = 0x12000, scoped, tag = 'internal scratch']
  %s0 = inlined_call_operand.vmem [shape: f32[2,128], index: 0, kind: input, shape index: {}]
  %s1 = inlined_call_operand.vmem [shape: f32[1,128], index: 1, kind: input, shape index: {}]
  %s2 = inlined_call_operand.vmem [shape: f32[1,128], index: 2, kind: input, shape index: {}]
  %s3 = inlined_call_operand.vmem [shape: f32[128,9], index: 3, kind: input, shape index: {}]
  %s4 = inlined_call_operand.vmem [shape: f32[1,9], index: 4, kind: input, shape index: {}]
  %s5 = inlined_call_operand.hbm [shape: f32[2,9], index: 5, kind: output, shape index: {}]
  %s6 = sld [smem:[#allocation0]]
  $region30: #{forward.7} parent=0
    _
  %s8 = ssub.s32 1, %s6
  %s9 = scalar_select 0, %s8, %s6
  $region1: #{forward.7} parent=0
    #allocation2 [shape = 'u8[1024]{0}', space=vmem, size = 0x400, scoped, tag = 'output window, operand 0, single buffered']
    #allocation3 [shape = 's32[1]{0}', space=sflag, size = 0x4, scoped, tag = 'scoped memory for forward.7']
    %10 = vsyncpa [#allocation3], 0
    // Predicated region
    $region2: #{forward.7} parent=1 // pred_check
      _
    $region3: #{forward.7} parent=1 // pred_check_branch
      %12 = sbr.rel (0) target = $region5
    $region4: #{forward.7} parent=1 // pred_region
      _
    $region5: #{forward.7} parent=1 // pred_fallthru
      _
    // Predicated region
    $region6: #{forward.7} parent=1 // pred_check
      _
    $region7: #{forward.7} parent=1 // pred_check_branch
      %14 = sbr.rel (0) target = $region9
    $region8: #{forward.7} parent=1 // pred_region
      _
    $region9: #{forward.7} parent=1 // pred_fallthru
      _
    // Predicated region
    $region10: #{forward.7} parent=1 // pred_check
      _
    $region11: #{forward.7} parent=1 // pred_check_branch
      %16 = sbr.rel (0) target = $region13
    $region12: #{forward.7} parent=1 // pred_region
      _
    $region13: #{forward.7} parent=1 // pred_fallthru
      _
    // Predicated region
    $region14: #{forward.7} parent=1 // pred_check
      _
    $region15: #{forward.7} parent=1 // pred_check_branch
      %18 = sbr.rel (0) target = $region17
    $region16: #{forward.7} parent=1 // pred_region
      _
    $region17: #{forward.7} parent=1 // pred_fallthru
      _
    // Predicated region
    $region18: #{forward.7} parent=1 // pred_check
      _
    $region19: #{forward.7} parent=1 // pred_check_branch
      %20 = sbr.rel (0) target = $region21
    $region20: #{forward.7} parent=1 // pred_region
      _
    $region21: #{forward.7} parent=1 // pred_fallthru
      _
    %v21 = vld [vmem:[%s0] sm:$0x3]
    %v22 = vld [vmem:[%s1] sm:$0x1]
    %v23 = vld [vmem:[%s2] sm:$0x1]
    %vm24 = vcmask 1041408
    %v25 = vsel %vm24, %v21, 0.0
    %26 = vadd.xlane.f32.xlu0 %v25
    %v27 = vpop.xlane.xlu0 %26
    %v28 = vrcp.pop 128.0
    %v29 = vmul.f32 %v27, %v28
    %v30 = vsub.f32 %v21, %v29
    %v31 = vmul.f32 %v30, %v30
    %v32 = vsel %vm24, %v31, 0.0
    %33 = vadd.xlane.f32.xlu0 %v32
    %v34 = vpop.xlane.xlu0 %33
    %v35 = vmul.f32 %v34, %v28
    %v36 = vadd.f32 %v35, 1e-06
    %v37 = vrsqrt.pop %v36
    %v38 = vmul.f32 %v30, %v37
    %v40 = vlaneseq
    %v41 = vshrl.u32 %v40, 7
    %v42 = vsub.s32 0, %v41
    %v43 = vrot.slane %v22, %v42
    %v45 = vmul.f32 %v38, %v43
    %v47 = vlaneseq
    %v48 = vshrl.u32 %v47, 7
    %v49 = vsub.s32 0, %v48
    %v50 = vrot.slane %v23, %v49
    %v52 = vadd.f32 %v45, %v50
    %v53 = vld [vmem:[%s3] sm:$0xff]
    %v54 = vld [vmem:[%s3 + $0x8] sm:$0xff]
    %v55 = vld [vmem:[%s3 + $0x10] sm:$0xff]
    %v56 = vld [vmem:[%s3 + $0x18] sm:$0xff]
    %v57 = vld [vmem:[%s3 + $0x20] sm:$0xff]
    %v58 = vld [vmem:[%s3 + $0x28] sm:$0xff]
    %v59 = vld [vmem:[%s3 + $0x30] sm:$0xff]
    %v60 = vld [vmem:[%s3 + $0x38] sm:$0xff]
    %v61 = vld [vmem:[%s3 + $0x40] sm:$0xff]
    %v62 = vld [vmem:[%s3 + $0x48] sm:$0xff]
    %v63 = vld [vmem:[%s3 + $0x50] sm:$0xff]
    %v64 = vld [vmem:[%s3 + $0x58] sm:$0xff]
    %v65 = vld [vmem:[%s3 + $0x60] sm:$0xff]
    %v66 = vld [vmem:[%s3 + $0x68] sm:$0xff]
    %v67 = vld [vmem:[%s3 + $0x70] sm:$0xff]
    %v68 = vld [vmem:[%s3 + $0x78] sm:$0xff]
    %v69 = vld [vmem:[%s4] sm:$0x1]
    %v71 = vlaneseq
    %v72 = vshrl.u32 %v71, 7
    %v73 = vsub.s32 0, %v72
    %v74 = vrot.slane %v69, %v73
    %76 = vmatprep.subr.mxu0 0.0
    %77 = vmatpush1.msra.mxu0 %v53
    %78 = vmatprep.subr.mxu0 0.0
    %79 = vmatpush1.msra.mxu0 %v54
    %80 = vmatprep.subr.mxu0 0.0
    %81 = vmatpush1.msra.mxu0 %v55
    %82 = vmatprep.subr.mxu0 0.0
    %83 = vmatpush1.msra.mxu0 %v56
    %84 = vmatprep.subr.mxu0 0.0
    %85 = vmatpush1.msra.mxu0 %v57
    %86 = vmatprep.subr.mxu0 0.0
    %87 = vmatpush1.msra.mxu0 %v58
    %88 = vmatprep.subr.mxu0 0.0
    %89 = vmatpush1.msra.mxu0 %v59
    %90 = vmatprep.subr.mxu0 0.0
    %91 = vmatpush1.msra.mxu0 %v60
    %92 = vmatprep.subr.mxu0 0.0
    %93 = vmatpush1.msra.mxu0 %v61
    %94 = vmatprep.subr.mxu0 0.0
    %95 = vmatpush1.msra.mxu0 %v62
    %96 = vmatprep.subr.mxu0 0.0
    %97 = vmatpush1.msra.mxu0 %v63
    %98 = vmatprep.subr.mxu0 0.0
    %99 = vmatpush1.msra.mxu0 %v64
    %100 = vmatprep.subr.mxu0 0.0
    %101 = vmatpush1.msra.mxu0 %v65
    %102 = vmatprep.subr.mxu0 0.0
    %103 = vmatpush1.msra.mxu0 %v66
    %104 = vmatprep.subr.mxu0 0.0
    %105 = vmatpush1.msra.mxu0 %v67
    %106 = vmatprep.subr.mxu0 0.0
    %107 = vmatpush1.msra.mxu0 %v68
    %108 = vmatprep.subr.mxu0 0.0
    %109 = vmatpush1.msra.mxu0 0.0
    %110 = vmatprep.subr.mxu0 0.0
    %111 = vmatpush1.msra.mxu0 0.0
    %112 = vmatprep.subr.mxu0 0.0
    %113 = vmatpush1.msra.mxu0 0.0
    %114 = vmatprep.subr.mxu0 0.0
    %115 = vmatpush1.msra.mxu0 0.0
    %116 = vmatprep.subr.mxu0 0.0
    %117 = vmatpush1.msra.mxu0 0.0
    %118 = vmatprep.subr.mxu0 0.0
    %119 = vmatpush1.msra.mxu0 0.0
    %120 = vmatprep.subr.mxu0 0.0
    %121 = vmatpush1.msra.mxu0 0.0
    %122 = vmatprep.subr.mxu0 0.0
    %123 = vmatpush1.msra.mxu0 0.0
    %124 = vmatprep.subr.mxu0 0.0
    %125 = vmatpush1.msra.mxu0 0.0
    %126 = vmatprep.subr.mxu0 0.0
    %127 = vmatpush1.msra.mxu0 0.0
    %128 = vmatprep.subr.mxu0 0.0
    %129 = vmatpush1.msra.mxu0 0.0
    %130 = vmatprep.subr.mxu0 0.0
    %131 = vmatpush1.msra.mxu0 0.0
    %132 = vmatprep.subr.mxu0 0.0
    %133 = vmatpush1.msra.mxu0 0.0
    %134 = vmatprep.subr.mxu0 0.0
    %135 = vmatpush1.msra.mxu0 0.0
    %136 = vmatprep.subr.mxu0 0.0
    %137 = vmatpush1.msra.mxu0 0.0
    %138 = vmatprep.subr.mxu0 0.0
    %139 = vmatpush1.msra.mxu0 0.0
    %140 = vmatprep.mubr.f32.mxu0 0.0
    %141 = vmatmul.mubr.f32.gmra.mrb[0].mxu0 %v52
    %v142 = vpop.f32.mrb[0].mxu0
    %v143 = vadd.f32 %v74, %v142
    %v144 = vpop.f32.mrb[0].mxu0
    %145 = vdwg.mxu0
    %vm146 = vcmask 66560
    %147 = vst.msk [vmem:[#allocation2] sm:$0x3] %vm146, %v143
    // Predicated region
    $region22: #{forward.7} parent=1 // pred_check
      _
    $region23: #{forward.7} parent=1 // pred_check_branch
      %149 = sbr.rel (0) target = $region25
    $region24: #{forward.7} parent=1 // pred_region
      %s151 = ssub.s32 32, 32
      %152 = vsyncadd [#allocation3], %s151
      %s154 = sshll.u32 [#allocation2], 4
      %s155 = int_to_ptr.vmem [resolvable:$true] %s154
      %157 = dma.vmem_to_hbm [thread:$0]  %s155, 32, %s5, [#allocation3]
    $region25: #{forward.7} parent=1 // pred_fallthru
      _
    // Predicated region
    $region26: #{forward.7} parent=1 // pred_check
      _
    $region27: #{forward.7} parent=1 // pred_check_branch
      %159 = sbr.rel (0) target = $region29
    $region28: #{forward.7} parent=1 // pred_region
      %160 = dma.done [#allocation3], 32
    $region29: #{forward.7} parent=1 // pred_fallthru
      _
    %161 = vsyncpa [#allocation3], 1

// kernel: forward.5
$region0: #{forward.5}
  #allocation0 [shape = 'u32[]', space=smem, size = 0x4, offset = 0x4, fixed_abs, tag = 'smem constant byte address 0x4 - core index']
  #allocation1 [shape = 'u32[144,128]{1,0:T(1,128)}', space=vmem, size = 0x12000, scoped, tag = 'internal scratch']
  %s0 = inlined_call_operand.vmem [shape: f32[2,8,128], index: 0, kind: input, shape index: {}]
  %s1 = inlined_call_operand.vmem [shape: f32[1,128], index: 1, kind: input, shape index: {}]
  %s2 = inlined_call_operand.vmem [shape: f32[1,128], index: 2, kind: input, shape index: {}]
  %s3 = inlined_call_operand.vmem [shape: bf16[128,384], index: 3, kind: input, shape index: {}]
  %s4 = inlined_call_operand.vmem [shape: f32[1,384], index: 4, kind: input, shape index: {}]
  %s5 = inlined_call_operand.vmem [shape: bf16[128,128], index: 5, kind: input, shape index: {}]
  %s6 = inlined_call_operand.vmem [shape: f32[1,128], index: 6, kind: input, shape index: {}]
  %s7 = inlined_call_operand.vmem [shape: f32[1,128], index: 7, kind: input, shape index: {}]
  %s8 = inlined_call_operand.vmem [shape: f32[1,128], index: 8, kind: input, shape index: {}]
  %s9 = inlined_call_operand.vmem [shape: f32[1,128], index: 9, kind: input, shape index: {}]
  %s10 = inlined_call_operand.vmem [shape: bf16[128,512], index: 10, kind: input, shape index: {}]
  %s11 = inlined_call_operand.vmem [shape: f32[1,512], index: 11, kind: input, shape index: {}]
  %s12 = inlined_call_operand.vmem [shape: bf16[512,128], index: 12, kind: input, shape index: {}]
  %s13 = inlined_call_operand.vmem [shape: f32[1,128], index: 13, kind: input, shape index: {}]
  %s14 = inlined_call_operand.vmem [shape: f32[1,128], index: 14, kind: input, shape index: {}]
  %s15 = inlined_call_operand.vmem [shape: f32[2,8,128], index: 15, kind: output, shape index: {}]
  %s16 = sld [smem:[#allocation0]]
  $region93: #{forward.5} parent=0
    _
  %s18 = ssub.s32 1, %s16
  %s19 = scalar_select 0, %s18, %s16
  loop: start=0, step=1, limit=4
  $region2: #{forward.5} parent=0 // loop_pre_header
    _
  $region3: #{forward.5} parent=0 // loop_header
    %s21 = sphi 0, %s25
    %p22 = scmp.ge.s32.totalorder %s21, 4
    %s31 = sphi 0, %s33
    %s34 = sphi 0, %s31
    %s35 = sphi 0, %s34
    %s51 = sphi 0, %s35
    %s55 = sphi 0, %s55
    %s57 = sphi 0, %s55
    %s58 = sphi 0, %s57
    %s72 = sphi 0, %s58
    %s76 = sphi 0, %s76
    %s78 = sphi 0, %s76
    %s79 = sphi 0, %s78
    %s93 = sphi 0, %s79
    %s97 = sphi 0, %s97
    %s99 = sphi 0, %s97
    %s100 = sphi 0, %s99
    %s114 = sphi 0, %s100
    %s118 = sphi 0, %s118
    %s120 = sphi 0, %s118
    %s121 = sphi 0, %s120
    %s135 = sphi 0, %s121
    %s139 = sphi 0, %s139
    %s141 = sphi 0, %s139
    %s142 = sphi 0, %s141
    %s156 = sphi 0, %s142
    %s160 = sphi 0, %s160
    %s162 = sphi 0, %s160
    %s163 = sphi 0, %s162
    %s177 = sphi 0, %s163
    %s181 = sphi 0, %s181
    %s183 = sphi 0, %s181
    %s184 = sphi 0, %s183
    %s198 = sphi 0, %s184
    %s202 = sphi 0, %s202
    %s204 = sphi 0, %s202
    %s205 = sphi 0, %s204
    %s219 = sphi 0, %s205
    %s223 = sphi 0, %s223
    %s225 = sphi 0, %s223
    %s226 = sphi 0, %s225
    %s240 = sphi 0, %s226
    %s244 = sphi 0, %s244
    %s246 = sphi 0, %s244
    %s247 = sphi 0, %s246
    %s261 = sphi 0, %s247
    %s265 = sphi 0, %s265
    %s267 = sphi 0, %s265
    %s268 = sphi 0, %s267
    %s282 = sphi 0, %s268
    %s286 = sphi 0, %s286
    %s288 = sphi 0, %s286
    %s289 = sphi 0, %s288
    %s303 = sphi 0, %s289
    %s307 = sphi 0, %s307
    %s309 = sphi 0, %s307
    %s310 = sphi 0, %s309
    %s324 = sphi 0, %s310
    %s328 = sphi 0, %s328
    %s330 = sphi 0, %s328
    %s331 = sphi 0, %s330
    %s345 = sphi 0, %s331
    %s351 = sphi 0, %s353
    %s354 = sphi 0, %s351
    %s355 = sphi 0, %s354
    %s371 = sphi 0, %s355
  $region4: #{forward.5} parent=0 // loop_header_branch
    %24 = sbr.rel (%p22) target = $region8
  $region5: #{forward.5} parent=0 // loop_body
    %s26 = ssub.s32 %s21, 1
    %s27 = ssub.s32 %s21, 2
    %s28 = sadd.s32 %s21, 1
    %s29 = ssub.s32 %s21, %s28
    %p30 = scmp.eq.s32.totalorder %s29, 0
    %s32 = sadd.s32 %s31, 1
    %s33 = scalar_select %p30, %s31, %s32
    %p36 = pneg %p30
    %p37 = scmp.eq.s32.totalorder %s21, 1
    %p38 = por %p36, %p37
    %p39 = scmp.ne.s32.totalorder %s31, %s34
    %p40 = scmp.eq.s32.totalorder %s21, 0
    %p41 = por %p39, %p40
    %p42 = scmp.ne.s32.totalorder %s31, %s34
    %p43 = scmp.eq.s32.totalorder %s26, 1
    %p44 = por %p42, %p43
    %p45 = scmp.ne.s32.totalorder %s34, %s35
    %p46 = scmp.eq.s32.totalorder %s26, 0
    %p47 = por %p45, %p46
    %p48 = scmp.ne.s32.totalorder %s34, %s35
    %p49 = scmp.eq.s32.totalorder %s27, 1
    %p50 = por %p48, %p49
    %p52 = scmp.ne.s32.totalorder %s35, %s51
    %p53 = scmp.eq.s32.totalorder %s27, 0
    %p54 = por %p52, %p53
    %s56 = sadd.s32 %s55, 1
    %p59 = scmp.eq.s32.totalorder %s21, 1
    %p60 = scmp.ne.s32.totalorder %s55, %s57
    %p61 = scmp.eq.s32.totalorder %s21, 0
    %p62 = por %p60, %p61
    %p63 = scmp.ne.s32.totalorder %s55, %s57
    %p64 = scmp.eq.s32.totalorder %s26, 1
    %p65 = por %p63, %p64
    %p66 = scmp.ne.s32.totalorder %s57, %s58
    %p67 = scmp.eq.s32.totalorder %s26, 0
    %p68 = por %p66, %p67
    %p69 = scmp.ne.s32.totalorder %s57, %s58
    %p70 = scmp.eq.s32.totalorder %s27, 1
    %p71 = por %p69, %p70
    %p73 = scmp.ne.s32.totalorder %s58, %s72
    %p74 = scmp.eq.s32.totalorder %s27, 0
    %p75 = por %p73, %p74
    %s77 = sadd.s32 %s76, 1
    %p80 = scmp.eq.s32.totalorder %s21, 1
    %p81 = scmp.ne.s32.totalorder %s76, %s78
    %p82 = scmp.eq.s32.totalorder %s21, 0
    %p83 = por %p81, %p82
    %p84 = scmp.ne.s32.totalorder %s76, %s78
    %p85 = scmp.eq.s32.totalorder %s26, 1
    %p86 = por %p84, %p85
    %p87 = scmp.ne.s32.totalorder %s78, %s79
    %p88 = scmp.eq.s32.totalorder %s26, 0
    %p89 = por %p87, %p88
    %p90 = scmp.ne.s32.totalorder %s78, %s79
    %p91 = scmp.eq.s32.totalorder %s27, 1
    %p92 = por %p90, %p91
    %p94 = scmp.ne.s32.totalorder %s79, %s93
    %p95 = scmp.eq.s32.totalorder %s27, 0
    %p96 = por %p94, %p95
    %s98 = sadd.s32 %s97, 1
    %p101 = scmp.eq.s32.totalorder %s21, 1
    %p102 = scmp.ne.s32.totalorder %s97, %s99
    %p103 = scmp.eq.s32.totalorder %s21, 0
    %p104 = por %p102, %p103
    %p105 = scmp.ne.s32.totalorder %s97, %s99
    %p106 = scmp.eq.s32.totalorder %s26, 1
    %p107 = por %p105, %p106
    %p108 = scmp.ne.s32.totalorder %s99, %s100
    %p109 = scmp.eq.s32.totalorder %s26, 0
    %p110 = por %p108, %p109
    %p111 = scmp.ne.s32.totalorder %s99, %s100
    %p112 = scmp.eq.s32.totalorder %s27, 1
    %p113 = por %p111, %p112
    %p115 = scmp.ne.s32.totalorder %s100, %s114
    %p116 = scmp.eq.s32.totalorder %s27, 0
    %p117 = por %p115, %p116
    %s119 = sadd.s32 %s118, 1
    %p122 = scmp.eq.s32.totalorder %s21, 1
    %p123 = scmp.ne.s32.totalorder %s118, %s120
    %p124 = scmp.eq.s32.totalorder %s21, 0
    %p125 = por %p123, %p124
    %p126 = scmp.ne.s32.totalorder %s118, %s120
    %p127 = scmp.eq.s32.totalorder %s26, 1
    %p128 = por %p126, %p127
    %p129 = scmp.ne.s32.totalorder %s120, %s121
    %p130 = scmp.eq.s32.totalorder %s26, 0
    %p131 = por %p129, %p130
    %p132 = scmp.ne.s32.totalorder %s120, %s121
    %p133 = scmp.eq.s32.totalorder %s27, 1
    %p134 = por %p132, %p133
    %p136 = scmp.ne.s32.totalorder %s121, %s135
    %p137 = scmp.eq.s32.totalorder %s27, 0
    %p138 = por %p136, %p137
    %s140 = sadd.s32 %s139, 1
    %p143 = scmp.eq.s32.totalorder %s21, 1
    %p144 = scmp.ne.s32.totalorder %s139, %s141
    %p145 = scmp.eq.s32.totalorder %s21, 0
    %p146 = por %p144, %p145
    %p147 = scmp.ne.s32.totalorder %s139, %s141
    %p148 = scmp.eq.s32.totalorder %s26, 1
    %p149 = por %p147, %p148
    %p150 = scmp.ne.s32.totalorder %s141, %s142
    %p151 = scmp.eq.s32.totalorder %s26, 0
    %p152 = por %p150, %p151
    %p153 = scmp.ne.s32.totalorder %s141, %s142
    %p154 = scmp.eq.s32.totalorder %s27, 1
    %p155 = por %p153, %p154
    %p157 = scmp.ne.s32.totalorder %s142, %s156
    %p158 = scmp.eq.s32.totalorder %s27, 0
    %p159 = por %p157, %p158
    %s161 = sadd.s32 %s160, 1
    %p164 = scmp.eq.s32.totalorder %s21, 1
    %p165 = scmp.ne.s32.totalorder %s160, %s162
    %p166 = scmp.eq.s32.totalorder %s21, 0
    %p167 = por %p165, %p166
    %p168 = scmp.ne.s32.totalorder %s160, %s162
    %p169 = scmp.eq.s32.totalorder %s26, 1
    %p170 = por %p168, %p169
    %p171 = scmp.ne.s32.totalorder %s162, %s163
    %p172 = scmp.eq.s32.totalorder %s26, 0
    %p173 = por %p171, %p172
    %p174 = scmp.ne.s32.totalorder %s162, %s163
    %p175 = scmp.eq.s32.totalorder %s27, 1
    %p176 = por %p174, %p175
    %p178 = scmp.ne.s32.totalorder %s163, %s177
    %p179 = scmp.eq.s32.totalorder %s27, 0
    %p180 = por %p178, %p179
    %s182 = sadd.s32 %s181, 1
    %p185 = scmp.eq.s32.totalorder %s21, 1
    %p186 = scmp.ne.s32.totalorder %s181, %s183
    %p187 = scmp.eq.s32.totalorder %s21, 0
    %p188 = por %p186, %p187
    %p189 = scmp.ne.s32.totalorder %s181, %s183
    %p190 = scmp.eq.s32.totalorder %s26, 1
    %p191 = por %p189, %p190
    %p192 = scmp.ne.s32.totalorder %s183, %s184
    %p193 = scmp.eq.s32.totalorder %s26, 0
    %p194 = por %p192, %p193
    %p195 = scmp.ne.s32.totalorder %s183, %s184
    %p196 = scmp.eq.s32.totalorder %s27, 1
    %p197 = por %p195, %p196
    %p199 = scmp.ne.s32.totalorder %s184, %s198
    %p200 = scmp.eq.s32.totalorder %s27, 0
    %p201 = por %p199, %p200
    %s203 = sadd.s32 %s202, 1
    %p206 = scmp.eq.s32.totalorder %s21, 1
    %p207 = scmp.ne.s32.totalorder %s202, %s204
    %p208 = scmp.eq.s32.totalorder %s21, 0
    %p209 = por %p207, %p208
    %p210 = scmp.ne.s32.totalorder %s202, %s204
    %p211 = scmp.eq.s32.totalorder %s26, 1
    %p212 = por %p210, %p211
    %p213 = scmp.ne.s32.totalorder %s204, %s205
    %p214 = scmp.eq.s32.totalorder %s26, 0
    %p215 = por %p213, %p214
    %p216 = scmp.ne.s32.totalorder %s204, %s205
    %p217 = scmp.eq.s32.totalorder %s27, 1
    %p218 = por %p216, %p217
    %p220 = scmp.ne.s32.totalorder %s205, %s219
    %p221 = scmp.eq.s32.totalorder %s27, 0
    %p222 = por %p220, %p221
    %s224 = sadd.s32 %s223, 1
    %p227 = scmp.eq.s32.totalorder %s21, 1
    %p228 = scmp.ne.s32.totalorder %s223, %s225
    %p229 = scmp.eq.s32.totalorder %s21, 0
    %p230 = por %p228, %p229
    %p231 = scmp.ne.s32.totalorder %s223, %s225
    %p232 = scmp.eq.s32.totalorder %s26, 1
    %p233 = por %p231, %p232
    %p234 = scmp.ne.s32.totalorder %s225, %s226
    %p235 = scmp.eq.s32.totalorder %s26, 0
    %p236 = por %p234, %p235
    %p237 = scmp.ne.s32.totalorder %s225, %s226
    %p238 = scmp.eq.s32.totalorder %s27, 1
    %p239 = por %p237, %p238
    %p241 = scmp.ne.s32.totalorder %s226, %s240
    %p242 = scmp.eq.s32.totalorder %s27, 0
    %p243 = por %p241, %p242
    %s245 = sadd.s32 %s244, 1
    %p248 = scmp.eq.s32.totalorder %s21, 1
    %p249 = scmp.ne.s32.totalorder %s244, %s246
    %p250 = scmp.eq.s32.totalorder %s21, 0
    %p251 = por %p249, %p250
    %p252 = scmp.ne.s32.totalorder %s244, %s246
    %p253 = scmp.eq.s32.totalorder %s26, 1
    %p254 = por %p252, %p253
    %p255 = scmp.ne.s32.totalorder %s246, %s247
    %p256 = scmp.eq.s32.totalorder %s26, 0
    %p257 = por %p255, %p256
    %p258 = scmp.ne.s32.totalorder %s246, %s247
    %p259 = scmp.eq.s32.totalorder %s27, 1
    %p260 = por %p258, %p259
    %p262 = scmp.ne.s32.totalorder %s247, %s261
    %p263 = scmp.eq.s32.totalorder %s27, 0
    %p264 = por %p262, %p263
    %s266 = sadd.s32 %s265, 1
    %p269 = scmp.eq.s32.totalorder %s21, 1
    %p270 = scmp.ne.s32.totalorder %s265, %s267
    %p271 = scmp.eq.s32.totalorder %s21, 0
    %p272 = por %p270, %p271
    %p273 = scmp.ne.s32.totalorder %s265, %s267
    %p274 = scmp.eq.s32.totalorder %s26, 1
    %p275 = por %p273, %p274
    %p276 = scmp.ne.s32.totalorder %s267, %s268
    %p277 = scmp.eq.s32.totalorder %s26, 0
    %p278 = por %p276, %p277
    %p279 = scmp.ne.s32.totalorder %s267, %s268
    %p280 = scmp.eq.s32.totalorder %s27, 1
    %p281 = por %p279, %p280
    %p283 = scmp.ne.s32.totalorder %s268, %s282
    %p284 = scmp.eq.s32.totalorder %s27, 0
    %p285 = por %p283, %p284
    %s287 = sadd.s32 %s286, 1
    %p290 = scmp.eq.s32.totalorder %s21, 1
    %p291 = scmp.ne.s32.totalorder %s286, %s288
    %p292 = scmp.eq.s32.totalorder %s21, 0
    %p293 = por %p291, %p292
    %p294 = scmp.ne.s32.totalorder %s286, %s288
    %p295 = scmp.eq.s32.totalorder %s26, 1
    %p296 = por %p294, %p295
    %p297 = scmp.ne.s32.totalorder %s288, %s289
    %p298 = scmp.eq.s32.totalorder %s26, 0
    %p299 = por %p297, %p298
    %p300 = scmp.ne.s32.totalorder %s288, %s289
    %p301 = scmp.eq.s32.totalorder %s27, 1
    %p302 = por %p300, %p301
    %p304 = scmp.ne.s32.totalorder %s289, %s303
    %p305 = scmp.eq.s32.totalorder %s27, 0
    %p306 = por %p304, %p305
    %s308 = sadd.s32 %s307, 1
    %p311 = scmp.eq.s32.totalorder %s21, 1
    %p312 = scmp.ne.s32.totalorder %s307, %s309
    %p313 = scmp.eq.s32.totalorder %s21, 0
    %p314 = por %p312, %p313
    %p315 = scmp.ne.s32.totalorder %s307, %s309
    %p316 = scmp.eq.s32.totalorder %s26, 1
    %p317 = por %p315, %p316
    %p318 = scmp.ne.s32.totalorder %s309, %s310
    %p319 = scmp.eq.s32.totalorder %s26, 0
    %p320 = por %p318, %p319
    %p321 = scmp.ne.s32.totalorder %s309, %s310
    %p322 = scmp.eq.s32.totalorder %s27, 1
    %p323 = por %p321, %p322
    %p325 = scmp.ne.s32.totalorder %s310, %s324
    %p326 = scmp.eq.s32.totalorder %s27, 0
    %p327 = por %p325, %p326
    %s329 = sadd.s32 %s328, 1
    %p332 = scmp.eq.s32.totalorder %s21, 1
    %p333 = scmp.ne.s32.totalorder %s328, %s330
    %p334 = scmp.eq.s32.totalorder %s21, 0
    %p335 = por %p333, %p334
    %p336 = scmp.ne.s32.totalorder %s328, %s330
    %p337 = scmp.eq.s32.totalorder %s26, 1
    %p338 = por %p336, %p337
    %p339 = scmp.ne.s32.totalorder %s330, %s331
    %p340 = scmp.eq.s32.totalorder %s26, 0
    %p341 = por %p339, %p340
    %p342 = scmp.ne.s32.totalorder %s330, %s331
    %p343 = scmp.eq.s32.totalorder %s27, 1
    %p344 = por %p342, %p343
    %p346 = scmp.ne.s32.totalorder %s331, %s345
    %p347 = scmp.eq.s32.totalorder %s27, 0
    %p348 = por %p346, %p347
    %s349 = ssub.s32 %s21, %s28
    %p350 = scmp.eq.s32.totalorder %s349, 0
    %s352 = sadd.s32 %s351, 1
    %s353 = scalar_select %p350, %s351, %s352
    %p356 = pneg %p350
    %p357 = scmp.eq.s32.totalorder %s21, 1
    %p358 = por %p356, %p357
    %p359 = scmp.ne.s32.totalorder %s351, %s354
    %p360 = scmp.eq.s32.totalorder %s21, 0
    %p361 = por %p359, %p360
    %p362 = scmp.ne.s32.totalorder %s351, %s354
    %p363 = scmp.eq.s32.totalorder %s26, 1
    %p364 = por %p362, %p363
    %p365 = scmp.ne.s32.totalorder %s354, %s355
    %p366 = scmp.eq.s32.totalorder %s26, 0
    %p367 = por %p365, %p366
    %p368 = scmp.ne.s32.totalorder %s354, %s355
    %p369 = scmp.eq.s32.totalorder %s27, 1
    %p370 = por %p368, %p369
    %p372 = scmp.ne.s32.totalorder %s355, %s371
    %p373 = scmp.eq.s32.totalorder %s27, 0
    %p374 = por %p372, %p373
    %p375 = scmp.le.s32.totalorder 1, %s21
    %p376 = scmp.lt.s32.totalorder %s21, 3
    %p377 = pnand %p375, %p376
    %p378 = pneg %p377
    // Predicated region
    $region9: #{forward.5} parent=5 // pred_check
      _
    $region10: #{forward.5} parent=5 // pred_check_branch
      %380 = sbr.rel (%p377) target = $region12
    $region11: #{forward.5} parent=5 // pred_region
      %s381 = ssub.s32 %s21, 1
      // Predicated region
      $region13: #{forward.5} parent=11 // pred_check
        %p382 = pneg %p68
      $region14: #{forward.5} parent=11 // pred_check_branch
        %384 = sbr.rel (%p382) target = $region16
      $region15: #{forward.5} parent=11 // pred_region
        _
      $region16: #{forward.5} parent=11 // pred_fallthru
        _
      // Predicated region
      $region17: #{forward.5} parent=11 // pred_check
        %p385 = pneg %p89
      $region18: #{forward.5} parent=11 // pred_check_branch
        %387 = sbr.rel (%p385) target = $region20
      $region19: #{forward.5} parent=11 // pred_region
        _
      $region20: #{forward.5} parent=11 // pred_fallthru
        _
      // Predicated region
      $region21: #{forward.5} parent=11 // pred_check
        %p388 = pneg %p110
      $region22: #{forward.5} parent=11 // pred_check_branch
        %390 = sbr.rel (%p388) target = $region24
      $region23: #{forward.5} parent=11 // pred_region
        _
      $region24: #{forward.5} parent=11 // pred_fallthru
        _
      // Predicated region
      $region25: #{forward.5} parent=11 // pred_check
        %p391 = pneg %p131
      $region26: #{forward.5} parent=11 // pred_check_branch
        %393 = sbr.rel (%p391) target = $region28
      $region27: #{forward.5} parent=11 // pred_region
        _
      $region28: #{forward.5} parent=11 // pred_fallthru
        _
      // Predicated region
      $region29: #{forward.5} parent=11 // pred_check
        %p394 = pneg %p152
      $region30: #{forward.5} parent=11 // pred_check_branch
        %396 = sbr.rel (%p394) target = $region32
      $region31: #{forward.5} parent=11 // pred_region
        _
      $region32: #{forward.5} parent=11 // pred_fallthru
        _
      // Predicated region
      $region33: #{forward.5} parent=11 // pred_check
        %p397 = pneg %p173
      $region34: #{forward.5} parent=11 // pred_check_branch
        %399 = sbr.rel (%p397) target = $region36
      $region35: #{forward.5} parent=11 // pred_region
        _
      $region36: #{forward.5} parent=11 // pred_fallthru
        _
      // Predicated region
      $region37: #{forward.5} parent=11 // pred_check
        %p400 = pneg %p194
      $region38: #{forward.5} parent=11 // pred_check_branch
        %402 = sbr.rel (%p400) target = $region40
      $region39: #{forward.5} parent=11 // pred_region
        _
      $region40: #{forward.5} parent=11 // pred_fallthru
        _
      // Predicated region
      $region41: #{forward.5} parent=11 // pred_check
        %p403 = pneg %p215
      $region42: #{forward.5} parent=11 // pred_check_branch
        %405 = sbr.rel (%p403) target = $region44
      $region43: #{forward.5} parent=11 // pred_region
        _
      $region44: #{forward.5} parent=11 // pred_fallthru
        _
      // Predicated region
      $region45: #{forward.5} parent=11 // pred_check
        %p406 = pneg %p236
      $region46: #{forward.5} parent=11 // pred_check_branch
        %408 = sbr.rel (%p406) target = $region48
      $region47: #{forward.5} parent=11 // pred_region
        _
      $region48: #{forward.5} parent=11 // pred_fallthru
        _
      // Predicated region
      $region49: #{forward.5} parent=11 // pred_check
        %p409 = pneg %p257
      $region50: #{forward.5} parent=11 // pred_check_branch
        %411 = sbr.rel (%p409) target = $region52
      $region51: #{forward.5} parent=11 // pred_region
        _
      $region52: #{forward.5} parent=11 // pred_fallthru
        _
      // Predicated region
      $region53: #{forward.5} parent=11 // pred_check
        %p412 = pneg %p278
      $region54: #{forward.5} parent=11 // pred_check_branch
        %414 = sbr.rel (%p412) target = $region56
      $region55: #{forward.5} parent=11 // pred_region
        _
      $region56: #{forward.5} parent=11 // pred_fallthru
        _
      // Predicated region
      $region57: #{forward.5} parent=11 // pred_check
        %p415 = pneg %p299
      $region58: #{forward.5} parent=11 // pred_check_branch
        %417 = sbr.rel (%p415) target = $region60
      $region59: #{forward.5} parent=11 // pred_region
        _
      $region60: #{forward.5} parent=11 // pred_fallthru
        _
      // Predicated region
      $region61: #{forward.5} parent=11 // pred_check
        %p418 = pneg %p320
      $region62: #{forward.5} parent=11 // pred_check_branch
        %420 = sbr.rel (%p418) target = $region64
      $region63: #{forward.5} parent=11 // pred_region
        _
      $region64: #{forward.5} parent=11 // pred_fallthru
        _
      // Predicated region
      $region65: #{forward.5} parent=11 // pred_check
        %p421 = pneg %p341
      $region66: #{forward.5} parent=11 // pred_check_branch
        %423 = sbr.rel (%p421) target = $region68
      $region67: #{forward.5} parent=11 // pred_region
        _
      $region68: #{forward.5} parent=11 // pred_fallthru
        _
    $region12: #{forward.5} parent=5 // pred_fallthru
      _
    %p424 = scmp.lt.s32.totalorder %s21, 2
    // Predicated region
    $region69: #{forward.5} parent=5 // pred_check
      %p425 = pneg %p424
    $region70: #{forward.5} parent=5 // pred_check_branch
      %427 = sbr.rel (%p425) target = $region72
    $region71: #{forward.5} parent=5 // pred_region
      // Predicated region
      $region73: #{forward.5} parent=71 // pred_check
        %p428 = pneg %p41
      $region74: #{forward.5} parent=71 // pred_check_branch
        %430 = sbr.rel (%p428) target = $region76
      $region75: #{forward.5} parent=71 // pred_region
        %p431 = scmp.lt.s32.totalorder %s21, 1
        %s432 = scalar_select %p431, %s21, 1
        %s433 = smul.addr %s432, 8
        %s434 = scalar_lea.vmem %s0, %s433
      $region76: #{forward.5} parent=71 // pred_fallthru
        _
    $region72: #{forward.5} parent=5 // pred_fallthru
      _
    %p435 = scmp.le.s32.totalorder 1, %s21
    %p436 = scmp.lt.s32.totalorder %s21, 3
    %p437 = pnand %p435, %p436
    %p438 = pneg %p437
    // Predicated region
    $region77: #{forward.5} parent=5 // pred_check
      _
    $region78: #{forward.5} parent=5 // pred_check_branch
      %440 = sbr.rel (%p437) target = $region80
    $region79: #{forward.5} parent=5 // pred_region
      %s441 = ssub.s32 %s21, 1
      %p442 = scmp.lt.s32.totalorder %s26, 1
      %s443 = scalar_select %p442, %s26, 1
      %s444 = smul.addr %s443, 8
      %s445 = scalar_lea.vmem %s0, %s444
      %p446 = pneg %p47
      %p447 = pneg %p44
      %p448 = pneg %p68
      %p449 = pneg %p65
      %p450 = pneg %p89
      %p451 = pneg %p86
      %p452 = pneg %p110
      %p453 = pneg %p107
      %p454 = pneg %p131
      %p455 = pneg %p128
      %p456 = pneg %p152
      %p457 = pneg %p149
      %p458 = pneg %p173
      %p459 = pneg %p170
      %p460 = pneg %p194
      %p461 = pneg %p191
      %p462 = pneg %p215
      %p463 = pneg %p212
      %p464 = pneg %p236
      %p465 = pneg %p233
      %p466 = pneg %p257
      %p467 = pneg %p254
      %p468 = pneg %p278
      %p469 = pneg %p275
      %p470 = pneg %p299
      %p471 = pneg %p296
      %p472 = pneg %p320
      %p473 = pneg %p317
      %p474 = pneg %p341
      %p475 = pneg %p338
      %p476 = pneg %p367
      %p477 = pneg %p364
      %p478 = scmp.lt.s32.totalorder %s26, 1
      %s479 = scalar_select %p478, %s26, 1
      %s480 = smul.addr %s479, 8
      %s481 = scalar_lea.vmem %s15, %s480
      %p482 = scmp.lt.s32.totalorder %s26, 1
      %s483 = scalar_select %p482, %s26, 1
      %s484 = smul.addr %s483, 8
      %s485 = scalar_lea.vmem %s0, %s484
      %p486 = scmp.lt.s32.totalorder %s26, 1
      %s487 = scalar_select %p486, %s26, 1
      %s488 = smul.addr %s487, 8
      %s489 = scalar_lea.vmem %s15, %s488
      %v491 = vld [vmem:[%s485] sm:$0xff]
      %v492 = vld [vmem:[%s1] sm:$0x1]
      %v493 = vld [vmem:[%s2] sm:$0x1]
      %494 = vadd.xlane.f32.xlu0 %v491
      %v495 = vpop.xlane.xlu0 %494
      %v496 = vrcp.pop 128.0
      %v497 = vmul.f32 %v495, %v496
      %v498 = vsub.f32 %v491, %v497
      %v499 = vmul.f32 %v498, %v498
      %500 = vadd.xlane.f32.xlu0 %v499
      %v501 = vpop.xlane.xlu0 %500
      %v502 = vmul.f32 %v501, %v496
      %v503 = vadd.f32 %v502, 1e-06
      %v504 = vrsqrt.pop %v503
      %v505 = vmul.f32 %v498, %v504
      %v507 = vlaneseq
      %v508 = vshrl.u32 %v507, 7
      %v509 = vsub.s32 0, %v508
      %v510 = vrot.slane %v492, %v509
      %v512 = vmul.f32 %v505, %v510
      %v514 = vlaneseq
      %v515 = vshrl.u32 %v514, 7
      %v516 = vsub.s32 0, %v515
      %v517 = vrot.slane %v493, %v516
      %v519 = vadd.f32 %v512, %v517
      %v520 = vpack.c.bf16 %v519, %v519
      %v521 = vld [vmem:[%s3] sm:$0xff]
      %v522 = vld [vmem:[%s3 + $0x8] sm:$0xf]
      %v523 = vld [vmem:[%s3 + $0xc] sm:$0xff]
      %v524 = vld [vmem:[%s3 + $0x14] sm:$0xf]
      %v525 = vld [vmem:[%s3 + $0x18] sm:$0xff]
      %v526 = vld [vmem:[%s3 + $0x20] sm:$0xf]
      %v527 = vld [vmem:[%s3 + $0x24] sm:$0xff]
      %v528 = vld [vmem:[%s3 + $0x2c] sm:$0xf]
      %v529 = vld [vmem:[%s3 + $0x30] sm:$0xff]
      %v530 = vld [vmem:[%s3 + $0x38] sm:$0xf]
      %v531 = vld [vmem:[%s3 + $0x3c] sm:$0xff]
      %v532 = vld [vmem:[%s3 + $0x44] sm:$0xf]
      %v533 = vld [vmem:[%s3 + $0x48] sm:$0xff]
      %v534 = vld [vmem:[%s3 + $0x50] sm:$0xf]
      %v535 = vld [vmem:[%s3 + $0x54] sm:$0xff]
      %v536 = vld [vmem:[%s3 + $0x5c] sm:$0xf]
      %v537 = vld [vmem:[%s3 + $0x60] sm:$0xff]
      %v538 = vld [vmem:[%s3 + $0x68] sm:$0xf]
      %v539 = vld [vmem:[%s3 + $0x6c] sm:$0xff]
      %v540 = vld [vmem:[%s3 + $0x74] sm:$0xf]
      %v541 = vld [vmem:[%s3 + $0x78] sm:$0xff]
      %v542 = vld [vmem:[%s3 + $0x80] sm:$0xf]
      %v543 = vld [vmem:[%s3 + $0x84] sm:$0xff]
      %v544 = vld [vmem:[%s3 + $0x8c] sm:$0xf]
      %v545 = vld [vmem:[%s3 + $0x90] sm:$0xff]
      %v546 = vld [vmem:[%s3 + $0x98] sm:$0xf]
      %v547 = vld [vmem:[%s3 + $0x9c] sm:$0xff]
      %v548 = vld [vmem:[%s3 + $0xa4] sm:$0xf]
      %v549 = vld [vmem:[%s3 + $0xa8] sm:$0xff]
      %v550 = vld [vmem:[%s3 + $0xb0] sm:$0xf]
      %v551 = vld [vmem:[%s3 + $0xb4] sm:$0xff]
      %v552 = vld [vmem:[%s3 + $0xbc] sm:$0xf]
      %v553 = vld [vmem:[%s4] sm:$0x7]
      %v555 = vlaneseq
      %v556 = vshrl.u32 %v555, 7
      %v557 = vsub.s32 0, %v556
      %v558 = vrot.slane %v553, %v557
      %v559 = vlaneseq
      %v560 = vshrl.u32 %v559, 7
      %v561 = vsub.s32 1, %v560
      %v562 = vrot.slane %v553, %v561
      %v563 = vlaneseq
      %v564 = vshrl.u32 %v563, 7
      %v565 = vsub.s32 2, %v564
      %v566 = vrot.slane %v553, %v565
      %v602 = vunpack.c.l.b16 %v521
      %v603 = vunpack.c.h.b16 %v521
      %v604 = vunpack.c.l.b16 %v522
      %v605 = vunpack.c.l.b16 %v523
      %v606 = vunpack.c.h.b16 %v523
      %v607 = vunpack.c.l.b16 %v524
      %v608 = vunpack.c.l.b16 %v525
      %v609 = vunpack.c.h.b16 %v525
      %v610 = vunpack.c.l.b16 %v526
      %v611 = vunpack.c.l.b16 %v527
      %v612 = vunpack.c.h.b16 %v527
      %v613 = vunpack.c.l.b16 %v528
      %v614 = vunpack.c.l.b16 %v529
      %v615 = vunpack.c.h.b16 %v529
      %v616 = vunpack.c.l.b16 %v530
      %v617 = vunpack.c.l.b16 %v531
      %v618 = vunpack.c.h.b16 %v531
      %v619 = vunpack.c.l.b16 %v532
      %v620 = vunpack.c.l.b16 %v533
      %v621 = vunpack.c.h.b16 %v533
      %v622 = vunpack.c.l.b16 %v534
      %v623 = vunpack.c.l.b16 %v535
      %v624 = vunpack.c.h.b16 %v535
      %v625 = vunpack.c.l.b16 %v536
      %v626 = vunpack.c.l.b16 %v537
      %v627 = vunpack.c.h.b16 %v537
      %v628 = vunpack.c.l.b16 %v538
      %v629 = vunpack.c.l.b16 %v539
      %v630 = vunpack.c.h.b16 %v539
      %v631 = vunpack.c.l.b16 %v540
      %v632 = vunpack.c.l.b16 %v541
      %v633 = vunpack.c.h.b16 %v541
      %v634 = vunpack.c.l.b16 %v542
      %v635 = vunpack.c.l.b16 %v543
      %v636 = vunpack.c.h.b16 %v543
      %v637 = vunpack.c.l.b16 %v544
      %v638 = vunpack.c.l.b16 %v545
      %v639 = vunpack.c.h.b16 %v545
      %v640 = vunpack.c.l.b16 %v546
      %v641 = vunpack.c.l.b16 %v547
      %v642 = vunpack.c.h.b16 %v547
      %v643 = vunpack.c.l.b16 %v548
      %v644 = vunpack.c.l.b16 %v549
      %v645 = vunpack.c.h.b16 %v549
      %v646 = vunpack.c.l.b16 %v550
      %v647 = vunpack.c.l.b16 %v551
      %v648 = vunpack.c.h.b16 %v551
      %v649 = vunpack.c.l.b16 %v552
      %v650 = vpack.c.b16 %v605, %v602
      %v651 = vpack.c.b16 %v606, %v603
      %v652 = vpack.c.b16 %v607, %v604
      %v653 = vpack.c.b16 %v611, %v608
      %v654 = vpack.c.b16 %v612, %v609
      %v655 = vpack.c.b16 %v613, %v610
      %v656 = vpack.c.b16 %v617, %v614
      %v657 = vpack.c.b16 %v618, %v615
      %v658 = vpack.c.b16 %v619, %v616
      %v659 = vpack.c.b16 %v623, %v620
      %v660 = vpack.c.b16 %v624, %v621
      %v661 = vpack.c.b16 %v625, %v622
      %v662 = vpack.c.b16 %v629, %v626
      %v663 = vpack.c.b16 %v630, %v627
      %v664 = vpack.c.b16 %v631, %v628
      %v665 = vpack.c.b16 %v635, %v632
      %v666 = vpack.c.b16 %v636, %v633
      %v667 = vpack.c.b16 %v637, %v634
      %v668 = vpack.c.b16 %v641, %v638
      %v669 = vpack.c.b16 %v642, %v639
      %v670 = vpack.c.b16 %v643, %v640
      %v671 = vpack.c.b16 %v647, %v644
      %v672 = vpack.c.b16 %v648, %v645
      %v673 = vpack.c.b16 %v649, %v646
      %698 = vmatprep.subr.bf16.mxu0 %v651
      %699 = vmatpush1.bf16.msra.mxu0 %v650
      %700 = vmatprep.subr.bf16.mxu0 %v654
      %701 = vmatpush1.bf16.msra.mxu0 %v653
      %702 = vmatprep.subr.bf16.mxu0 %v657
      %703 = vmatpush1.bf16.msra.mxu0 %v656
      %704 = vmatprep.subr.bf16.mxu0 %v660
      %705 = vmatpush1.bf16.msra.mxu0 %v659
      %706 = vmatprep.subr.bf16.mxu0 %v663
      %707 = vmatpush1.bf16.msra.mxu0 %v662
      %708 = vmatprep.subr.bf16.mxu0 %v666
      %709 = vmatpush1.bf16.msra.mxu0 %v665
      %710 = vmatprep.subr.bf16.mxu0 %v669
      %711 = vmatpush1.bf16.msra.mxu0 %v668
      %712 = vmatprep.subr.bf16.mxu0 %v672
      %713 = vmatpush1.bf16.msra.mxu0 %v671
      %714 = vmatprep.subr.bf16.mxu0 0
      %715 = vmatpush1.bf16.msra.mxu0 0
      %716 = vmatprep.subr.bf16.mxu0 0
      %717 = vmatpush1.bf16.msra.mxu0 0
      %718 = vmatprep.subr.bf16.mxu0 0
      %719 = vmatpush1.bf16.msra.mxu0 0
      %720 = vmatprep.subr.bf16.mxu0 0
      %721 = vmatpush1.bf16.msra.mxu0 0
      %722 = vmatprep.subr.bf16.mxu0 0
      %723 = vmatpush1.bf16.msra.mxu0 0
      %724 = vmatprep.subr.bf16.mxu0 0
      %725 = vmatpush1.bf16.msra.mxu0 0
      %726 = vmatprep.subr.bf16.mxu0 0
      %727 = vmatpush1.bf16.msra.mxu0 0
      %728 = vmatprep.subr.bf16.mxu0 0
      %729 = vmatpush1.bf16.msra.mxu0 0
      %730 = vmatprep.mubr.bf16.mxu0 0
      %731 = vmatmul.mubr.bf16.gmra.mrb[0].mxu0 %v520
      %v732 = vpop.f32.mrb[0].mxu0
      %v733 = vadd.f32 %v558, %v732
      %v734 = vpop.f32.mrb[0].mxu0
      %v735 = vadd.f32 %v562, %v734
      %v736 = vpop.f32.mrb[0].mxu0
      %v737 = vpop.f32.mrb[0].mxu0
      %738 = vdwg.mxu0
      %739 = vmatprep.subr.bf16.mxu0 0
      %740 = vmatpush1.bf16.msra.mxu0 %v652
      %741 = vmatprep.subr.bf16.mxu0 0
      %742 = vmatpush1.bf16.msra.mxu0 %v655
      %743 = vmatprep.subr.bf16.mxu0 0
      %744 = vmatpush1.bf16.msra.mxu0 %v658
      %745 = vmatprep.subr.bf16.mxu0 0
      %746 = vmatpush1.bf16.msra.mxu0 %v661
      %747 = vmatprep.subr.bf16.mxu0 0
      %748 = vmatpush1.bf16.msra.mxu0 %v664
      %749 = vmatprep.subr.bf16.mxu0 0
      %750 = vmatpush1.bf16.msra.mxu0 %v667
      %751 = vmatprep.subr.bf16.mxu0 0
      %752 = vmatpush1.bf16.msra.mxu0 %v670
      %753 = vmatprep.subr.bf16.mxu0 0
      %754 = vmatpush1.bf16.msra.mxu0 %v673
      %755 = vmatprep.subr.bf16.mxu0 0
      %756 = vmatpush1.bf16.msra.mxu0 0
      %757 = vmatprep.subr.bf16.mxu0 0
      %758 = vmatpush1.bf16.msra.mxu0 0
      %759 = vmatprep.subr.bf16.mxu0 0
      %760 = vmatpush1.bf16.msra.mxu0 0
      %761 = vmatprep.subr.bf16.mxu0 0
      %762 = vmatpush1.bf16.msra.mxu0 0
      %763 = vmatprep.subr.bf16.mxu0 0
      %764 = vmatpush1.bf16.msra.mxu0 0
      %765 = vmatprep.subr.bf16.mxu0 0
      %766 = vmatpush1.bf16.msra.mxu0 0
      %767 = vmatprep.subr.bf16.mxu0 0
      %768 = vmatpush1.bf16.msra.mxu0 0
      %769 = vmatprep.subr.bf16.mxu0 0
      %770 = vmatpush1.bf16.msra.mxu0 0
      %771 = vmatprep.mubr.bf16.mxu0 0
      %772 = vmatmul.mubr.bf16.gmra.mrb[0].mxu0 %v520
      %v773 = vpop.f32.mrb[0].mxu0
      %v774 = vadd.f32 %v566, %v773
      %v775 = vpop.f32.mrb[0].mxu0
      %v776 = vpop.f32.mrb[0].mxu0
      %v777 = vpop.f32.mrb[0].mxu0
      %778 = vdwg.mxu0
      %v779 = vmul.f32 %v733, 0.17677669
      %v780 = vlaneseq
      %v781 = vand.u32 %v780, 127
      %vm782 = vcmp.lt.s32.totalorder %v781, 5
      %v783 = vpack.c.bf16 %v779, %v779
      %v784 = vpack.c.bf16 %v735, %v735
      %v785 = vpack.c.bf16 %v774, %v774
      %vm786 = vcmask 261120
      %v788 = vsel %vm786, %v783, 0
      %v791 = vsel %vm786, %v784, 0
      %793 = vmatprep.subr.bf16.mxu0 0
      %794 = vmatpush1.bf16.xpose.msra.mxu0 %v791
      %795 = vmatprep.subr.bf16.mxu0 0
      %796 = vmatpush1.bf16.xpose.msra.mxu0 0
      %797 = vmatprep.subr.bf16.mxu0 0
      %798 = vmatpush1.bf16.xpose.msra.mxu0 0
      %799 = vmatprep.subr.bf16.mxu0 0
      %800 = vmatpush1.bf16.xpose.msra.mxu0 0
      %801 = vmatprep.subr.bf16.mxu0 0
      %802 = vmatpush1.bf16.xpose.msra.mxu0 0
      %803 = vmatprep.subr.bf16.mxu0 0
      %804 = vmatpush1.bf16.xpose.msra.mxu0 0
      %805 = vmatprep.subr.bf16.mxu0 0
      %806 = vmatpush1.bf16.xpose.msra.mxu0 0
      %807 = vmatprep.subr.bf16.mxu0 0
      %808 = vmatpush1.bf16.xpose.msra.mxu0 0
      %809 = vmatprep.subr.bf16.mxu0 0
      %810 = vmatpush1.bf16.xpose.msra.mxu0 0
      %811 = vmatprep.subr.bf16.mxu0 0
      %812 = vmatpush1.bf16.xpose.msra.mxu0 0
      %813 = vmatprep.subr.bf16.mxu0 0
      %814 = vmatpush1.bf16.xpose.msra.mxu0 0
      %815 = vmatprep.subr.bf16.mxu0 0
      %816 = vmatpush1.bf16.xpose.msra.mxu0 0
      %817 = vmatprep.subr.bf16.mxu0 0
      %818 = vmatpush1.bf16.xpose.msra.mxu0 0
      %819 = vmatprep.subr.bf16.mxu0 0
      %820 = vmatpush1.bf16.xpose.msra.mxu0 0
      %821 = vmatprep.subr.bf16.mxu0 0
      %822 = vmatpush1.bf16.xpose.msra.mxu0 0
      %823 = vmatprep.subr.bf16.mxu0 0
      %824 = vmatpush1.bf16.xpose.msra.mxu0 0
      %825 = vmatprep.mubr.bf16.mxu0 0
      %826 = vmatmul.mubr.bf16.gmra.mrb[0].mxu0 %v788
      %v827 = vpop.f32.mrb[0].mxu0
      %v828 = vadd.f32 0.0, %v827
      %v829 = vpop.f32.mrb[0].mxu0
      %v830 = vpop.f32.mrb[0].mxu0
      %v831 = vpop.f32.mrb[0].mxu0
      %832 = vdwg.mxu0
      %v833 = vsel %vm782, %v828, -1e+30
      %vm834 = vcmask 64512
      %v835 = vsel %vm834, %v833, -inf
      %836 = vmax.xlane.f32.xlu0 %v835
      %v837 = vpop.xlane.xlu0 %836
      %v838 = vsub.f32 %v833, %v837
      %v839 = vmul.f32 %v838, 1.442695
      %v840 = vpow.pop %v839
      %v841 = vsel %vm834, %v840, 0.0
      %842 = vadd.xlane.f32.xlu0 %v841
      %v843 = vpop.xlane.xlu0 %842
      %v844 = vrcp.pop %v843
      %v845 = vmul.f32 %v840, %v844
      %v846 = vpack.c.bf16 %v845, %v845
      %v848 = vsel %vm834, %v846, 0
      %vm850 = vcmask 1043456
      %v852 = vsel %vm850, %v785, 0
      %854 = vmatprep.subr.bf16.mxu0 0
      %855 = vmatpush1.bf16.msra.mxu0 %v852
      %856 = vmatprep.subr.bf16.mxu0 0
      %857 = vmatpush1.bf16.msra.mxu0 0
      %858 = vmatprep.subr.bf16.mxu0 0
      %859 = vmatpush1.bf16.msra.mxu0 0
      %860 = vmatprep.subr.bf16.mxu0 0
      %861 = vmatpush1.bf16.msra.mxu0 0
      %862 = vmatprep.subr.bf16.mxu0 0
      %863 = vmatpush1.bf16.msra.mxu0 0
      %864 = vmatprep.subr.bf16.mxu0 0
      %865 = vmatpush1.bf16.msra.mxu0 0
      %866 = vmatprep.subr.bf16.mxu0 0
      %867 = vmatpush1.bf16.msra.mxu0 0
      %868 = vmatprep.subr.bf16.mxu0 0
      %869 = vmatpush1.bf16.msra.mxu0 0
      %870 = vmatprep.subr.bf16.mxu0 0
      %871 = vmatpush1.bf16.msra.mxu0 0
      %872 = vmatprep.subr.bf16.mxu0 0
      %873 = vmatpush1.bf16.msra.mxu0 0
      %874 = vmatprep.subr.bf16.mxu0 0
      %875 = vmatpush1.bf16.msra.mxu0 0
      %876 = vmatprep.subr.bf16.mxu0 0
      %877 = vmatpush1.bf16.msra.mxu0 0
      %878 = vmatprep.subr.bf16.mxu0 0
      %879 = vmatpush1.bf16.msra.mxu0 0
      %880 = vmatprep.subr.bf16.mxu0 0
      %881 = vmatpush1.bf16.msra.mxu0 0
      %882 = vmatprep.subr.bf16.mxu0 0
      %883 = vmatpush1.bf16.msra.mxu0 0
      %884 = vmatprep.subr.bf16.mxu0 0
      %885 = vmatpush1.bf16.msra.mxu0 0
      %886 = vmatprep.mubr.bf16.mxu0 0
      %887 = vmatmul.mubr.bf16.gmra.mrb[0].mxu0 %v848
      %v888 = vpop.f32.mrb[0].mxu0
      %v889 = vadd.f32 0.0, %v888
      %v890 = vpop.f32.mrb[0].mxu0
      %v891 = vpop.f32.mrb[0].mxu0
      %v892 = vpop.f32.mrb[0].mxu0
      %893 = vdwg.mxu0
      %895 = vrot.lane.b32.xlu0 %v783, 96
      %v896 = vpop.permute.xlu0 %895
      %898 = vrot.lane.b32.xlu0 %v784, 96
      %v899 = vpop.permute.xlu0 %898
      %v901 = vsel %vm786, %v896, 0
      %v904 = vsel %vm786, %v899, 0
      %906 = vmatprep.subr.bf16.mxu0 0
      %907 = vmatpush1.bf16.xpose.msra.mxu0 %v904
      %908 = vmatprep.subr.bf16.mxu0 0
      %909 = vmatpush1.bf16.xpose.msra.mxu0 0
      %910 = vmatprep.subr.bf16.mxu0 0
      %911 = vmatpush1.bf16.xpose.msra.mxu0 0
      %912 = vmatprep.subr.bf16.mxu0 0
      %913 = vmatpush1.bf16.xpose.msra.mxu0 0
      %914 = vmatprep.subr.bf16.mxu0 0
      %915 = vmatpush1.bf16.xpose.msra.mxu0 0
      %916 = vmatprep.subr.bf16.mxu0 0
      %917 = vmatpush1.bf16.xpose.msra.mxu0 0
      %918 = vmatprep.subr.bf16.mxu0 0
      %919 = vmatpush1.bf16.xpose.msra.mxu0 0
      %920 = vmatprep.subr.bf16.mxu0 0
      %921 = vmatpush1.bf16.xpose.msra.mxu0 0
      %922 = vmatprep.subr.bf16.mxu0 0
      %923 = vmatpush1.bf16.xpose.msra.mxu0 0
      %924 = vmatprep.subr.bf16.mxu0 0
      %925 = vmatpush1.bf16.xpose.msra.mxu0 0
      %926 = vmatprep.subr.bf16.mxu0 0
      %927 = vmatpush1.bf16.xpose.msra.mxu0 0
      %928 = vmatprep.subr.bf16.mxu0 0
      %929 = vmatpush1.bf16.xpose.msra.mxu0 0
      %930 = vmatprep.subr.bf16.mxu0 0
      %931 = vmatpush1.bf16.xpose.msra.mxu0 0
      %932 = vmatprep.subr.bf16.mxu0 0
      %933 = vmatpush1.bf16.xpose.msra.mxu0 0
      %934 = vmatprep.subr.bf16.mxu0 0
      %935 = vmatpush1.bf16.xpose.msra.mxu0 0
      %936 = vmatprep.subr.bf16.mxu0 0
      %937 = vmatpush1.bf16.xpose.msra.mxu0 0
      %938 = vmatprep.mubr.bf16.mxu0 0
      %939 = vmatmul.mubr.bf16.gmra.mrb[0].mxu0 %v901
      %v940 = vpop.f32.mrb[0].mxu0
      %v941 = vadd.f32 0.0, %v940
      %v942 = vpop.f32.mrb[0].mxu0
      %v943 = vpop.f32.mrb[0].mxu0
      %v944 = vpop.f32.mrb[0].mxu0
      %945 = vdwg.mxu0
      %v946 = vsel %vm782, %v941, -1e+30
      %v947 = vsel %vm834, %v946, -inf
      %948 = vmax.xlane.f32.xlu0 %v947
      %v949 = vpop.xlane.xlu0 %948
      %v950 = vsub.f32 %v946, %v949
      %v951 = vmul.f32 %v950, 1.442695
      %v952 = vpow.pop %v951
      %v953 = vsel %vm834, %v952, 0.0
      %954 = vadd.xlane.f32.xlu0 %v953
      %v955 = vpop.xlane.xlu0 %954
      %v956 = vrcp.pop %v955
      %v957 = vmul.f32 %v952, %v956
      %v958 = vpack.c.bf16 %v957, %v957
      %960 = vrot.lane.b32.xlu0 %v785, 96
      %v961 = vpop.permute.xlu0 %960
      %v963 = vsel %vm834, %v958, 0
      %v966 = vsel %vm850, %v961, 0
      %968 = vmatprep.subr.bf16.mxu0 0
      %969 = vmatpush1.bf16.msra.mxu0 %v966
      %970 = vmatprep.subr.bf16.mxu0 0
      %971 = vmatpush1.bf16.msra.mxu0 0
      %972 = vmatprep.subr.bf16.mxu0 0
      %973 = vmatpush1.bf16.msra.mxu0 0
      %974 = vmatprep.subr.bf16.mxu0 0
      %975 = vmatpush1.bf16.msra.mxu0 0
      %976 = vmatprep.subr.bf16.mxu0 0
      %977 = vmatpush1.bf16.msra.mxu0 0
      %978 = vmatprep.subr.bf16.mxu0 0
      %979 = vmatpush1.bf16.msra.mxu0 0
      %980 = vmatprep.subr.bf16.mxu0 0
      %981 = vmatpush1.bf16.msra.mxu0 0
      %982 = vmatprep.subr.bf16.mxu0 0
      %983 = vmatpush1.bf16.msra.mxu0 0
      %984 = vmatprep.subr.bf16.mxu0 0
      %985 = vmatpush1.bf16.msra.mxu0 0
      %986 = vmatprep.subr.bf16.mxu0 0
      %987 = vmatpush1.bf16.msra.mxu0 0
      %988 = vmatprep.subr.bf16.mxu0 0
      %989 = vmatpush1.bf16.msra.mxu0 0
      %990 = vmatprep.subr.bf16.mxu0 0
      %991 = vmatpush1.bf16.msra.mxu0 0
      %992 = vmatprep.subr.bf16.mxu0 0
      %993 = vmatpush1.bf16.msra.mxu0 0
      %994 = vmatprep.subr.bf16.mxu0 0
      %995 = vmatpush1.bf16.msra.mxu0 0
      %996 = vmatprep.subr.bf16.mxu0 0
      %997 = vmatpush1.bf16.msra.mxu0 0
      %998 = vmatprep.subr.bf16.mxu0 0
      %999 = vmatpush1.bf16.msra.mxu0 0
      %1000 = vmatprep.mubr.bf16.mxu0 0
      %1001 = vmatmul.mubr.bf16.gmra.mrb[0].mxu0 %v963
      %v1002 = vpop.f32.mrb[0].mxu0
      %v1003 = vadd.f32 0.0, %v1002
      %v1004 = vpop.f32.mrb[0].mxu0
      %v1005 = vpop.f32.mrb[0].mxu0
      %v1006 = vpop.f32.mrb[0].mxu0
      %1007 = vdwg.mxu0
      %1008 = vrot.lane.b32.xlu0 %v783, 64
      %v1009 = vpop.permute.xlu0 %1008
      %1010 = vrot.lane.b32.xlu0 %v784, 64
      %v1011 = vpop.permute.xlu0 %1010
      %v1013 = vsel %vm786, %v1009, 0
      %v1016 = vsel %vm786, %v1011, 0
      %1018 = vmatprep.subr.bf16.mxu0 0
      %1019 = vmatpush1.bf16.xpose.msra.mxu0 %v1016
      %1020 = vmatprep.subr.bf16.mxu0 0
      %1021 = vmatpush1.bf16.xpose.msra.mxu0 0
      %1022 = vmatprep.subr.bf16.mxu0 0
      %1023 = vmatpush1.bf16.xpose.msra.mxu0 0
      %1024 = vmatprep.subr.bf16.mxu0 0
      %1025 = vmatpush1.bf16.xpose.msra.mxu0 0
      %1026 = vmatprep.subr.bf16.mxu0 0
      %1027 = vmatpush1.bf16.xpose.msra.mxu0 0
      %1028 = vmatprep.subr.bf16.mxu0 0
      %1029 = vmatpush1.bf16.xpose.msra.mxu0 0
      %1030 = vmatprep.subr.bf16.mxu0 0
      %1031 = vmatpush1.bf16.xpose.msra.mxu0 0
      %1032 = vmatprep.subr.bf16.mxu0 0
      %1033 = vmatpush1.bf16.xpose.msra.mxu0 0
      %1034 = vmatprep.subr.bf16.mxu0 0
      %1035 = vmatpush1.bf16.xpose.msra.mxu0 0
      %1036 = vmatprep.subr.bf16.mxu0 0
      %1037 = vmatpush1.bf16.xpose.msra.mxu0 0
      %1038 = vmatprep.subr.bf16.mxu0 0
      %1039 = vmatpush1.bf16.xpose.msra.mxu0 0
      %1040 = vmatprep.subr.bf16.mxu0 0
      %1041 = vmatpush1.bf16.xpose.msra.mxu0 0
      %1042 = vmatprep.subr.bf16.mxu0 0
      %1043 = vmatpush1.bf16.xpose.msra.mxu0 0
      %1044 = vmatprep.subr.bf16.mxu0 0
      %1045 = vmatpush1.bf16.xpose.msra.mxu0 0
      %1046 = vmatprep.subr.bf16.mxu0 0
      %1047 = vmatpush1.bf16.xpose.msra.mxu0 0
      %1048 = vmatprep.subr.bf16.mxu0 0
      %1049 = vmatpush1.bf16.xpose.msra.mxu0 0
      %1050 = vmatprep.mubr.bf16.mxu0 0
      %1051 = vmatmul.mubr.bf16.gmra.mrb[0].mxu0 %v1013
      %v1052 = vpop.f32.mrb[0].mxu0
      %v1053 = vadd.f32 0.0, %v1052
      %v1054 = vpop.f32.mrb[0].mxu0
      %v1055 = vpop.f32.mrb[0].mxu0
      %v1056 = vpop.f32.mrb[0].mxu0
      %1057 = vdwg.mxu0
      %v1058 = vsel %vm782, %v1053, -1e+30
      %v1059 = vsel %vm834, %v1058, -inf
      %1060 = vmax.xlane.f32.xlu0 %v1059
      %v1061 = vpop.xlane.xlu0 %1060
      %v1062 = vsub.f32 %v1058, %v1061
      %v1063 = vmul.f32 %v1062, 1.442695
      %v1064 = vpow.pop %v1063
      %v1065 = vsel %vm834, %v1064, 0.0
      %1066 = vadd.xlane.f32.xlu0 %v1065
      %v1067 = vpop.xlane.xlu0 %1066
      %v1068 = vrcp.pop %v1067
      %v1069 = vmul.f32 %v1064, %v1068
      %v1070 = vpack.c.bf16 %v1069, %v1069
      %1071 = vrot.lane.b32.xlu0 %v785, 64
      %v1072 = vpop.permute.xlu0 %1071
      %v1074 = vsel %vm834, %v1070, 0
      %v1077 = vsel %vm850, %v1072, 0
      %1079 = vmatprep.subr.bf16.mxu0 0
      %1080 = vmatpush1.bf16.msra.mxu0 %v1077
      %1081 = vmatprep.subr.bf16.mxu0 0
      %1082 = vmatpush1.bf16.msra.mxu0 0
      %1083 = vmatprep.subr.bf16.mxu0 0
      %1084 = vmatpush1.bf16.msra.mxu0 0
      %1085 = vmatprep.subr.bf16.mxu0 0
      %1086 = vmatpush1.bf16.msra.mxu0 0
      %1087 = vmatprep.subr.bf16.mxu0 0
      %1088 = vmatpush1.bf16.msra.mxu0 0
      %1089 = vmatprep.subr.bf16.mxu0 0
      %1090 = vmatpush1.bf16.msra.mxu0 0
      %1091 = vmatprep.subr.bf16.mxu0 0
      %1092 = vmatpush1.bf16.msra.mxu0 0
      %1093 = vmatprep.subr.bf16.mxu0 0
      %1094 = vmatpush1.bf16.msra.mxu0 0
      %1095 = vmatprep.subr.bf16.mxu0 0
      %1096 = vmatpush1.bf16.msra.mxu0 0
      %1097 = vmatprep.subr.bf16.mxu0 0
      %1098 = vmatpush1.bf16.msra.mxu0 0
      %1099 = vmatprep.subr.bf16.mxu0 0
      %1100 = vmatpush1.bf16.msra.mxu0 0
      %1101 = vmatprep.subr.bf16.mxu0 0
      %1102 = vmatpush1.bf16.msra.mxu0 0
      %1103 = vmatprep.subr.bf16.mxu0 0
      %1104 = vmatpush1.bf16.msra.mxu0 0
      %1105 = vmatprep.subr.bf16.mxu0 0
      %1106 = vmatpush1.bf16.msra.mxu0 0
      %1107 = vmatprep.subr.bf16.mxu0 0
      %1108 = vmatpush1.bf16.msra.mxu0 0
      %1109 = vmatprep.subr.bf16.mxu0 0
      %1110 = vmatpush1.bf16.msra.mxu0 0
      %1111 = vmatprep.mubr.bf16.mxu0 0
      %1112 = vmatmul.mubr.bf16.gmra.mrb[0].mxu0 %v1074
      %v1113 = vpop.f32.mrb[0].mxu0
      %v1114 = vadd.f32 0.0, %v1113
      %v1115 = vpop.f32.mrb[0].mxu0
      %v1116 = vpop.f32.mrb[0].mxu0
      %v1117 = vpop.f32.mrb[0].mxu0
      %1118 = vdwg.mxu0
      %1119 = vrot.lane.b32.xlu0 %v783, 32
      %v1120 = vpop.permute.xlu0 %1119
      %1121 = vrot.lane.b32.xlu0 %v784, 32
      %v1122 = vpop.permute.xlu0 %1121
      %v1124 = vsel %vm786, %v1120, 0
      %v1127 = vsel %vm786, %v1122, 0
      %1129 = vmatprep.subr.bf16.mxu0 0
      %1130 = vmatpush1.bf16.xpose.msra.mxu0 %v1127
      %1131 = vmatprep.subr.bf16.mxu0 0
      %1132 = vmatpush1.bf16.xpose.msra.mxu0 0
      %1133 = vmatprep.subr.bf16.mxu0 0
      %1134 = vmatpush1.bf16.xpose.msra.mxu0 0
      %1135 = vmatprep.subr.bf16.mxu0 0
      %1136 = vmatpush1.bf16.xpose.msra.mxu0 0
      %1137 = vmatprep.subr.bf16.mxu0 0
      %1138 = vmatpush1.bf16.xpose.msra.mxu0 0
      %1139 = vmatprep.subr.bf16.mxu0 0
      %1140 = vmatpush1.bf16.xpose.msra.mxu0 0
      %1141 = vmatprep.subr.bf16.mxu0 0
      %1142 = vmatpush1.bf16.xpose.msra.mxu0 0
      %1143 = vmatprep.subr.bf16.mxu0 0
      %1144 = vmatpush1.bf16.xpose.msra.mxu0 0
      %1145 = vmatprep.subr.bf16.mxu0 0
      %1146 = vmatpush1.bf16.xpose.msra.mxu0 0
      %1147 = vmatprep.subr.bf16.mxu0 0
      %1148 = vmatpush1.bf16.xpose.msra.mxu0 0
      %1149 = vmatprep.subr.bf16.mxu0 0
      %1150 = vmatpush1.bf16.xpose.msra.mxu0 0
      %1151 = vmatprep.subr.bf16.mxu0 0
      %1152 = vmatpush1.bf16.xpose.msra.mxu0 0
      %1153 = vmatprep.subr.bf16.mxu0 0
      %1154 = vmatpush1.bf16.xpose.msra.mxu0 0
      %1155 = vmatprep.subr.bf16.mxu0 0
      %1156 = vmatpush1.bf16.xpose.msra.mxu0 0
      %1157 = vmatprep.subr.bf16.mxu0 0
      %1158 = vmatpush1.bf16.xpose.msra.mxu0 0
      %1159 = vmatprep.subr.bf16.mxu0 0
      %1160 = vmatpush1.bf16.xpose.msra.mxu0 0
      %1161 = vmatprep.mubr.bf16.mxu0 0
      %1162 = vmatmul.mubr.bf16.gmra.mrb[0].mxu0 %v1124
      %v1163 = vpop.f32.mrb[0].mxu0
      %v1164 = vadd.f32 0.0, %v1163
      %v1165 = vpop.f32.mrb[0].mxu0
      %v1166 = vpop.f32.mrb[0].mxu0
      %v1167 = vpop.f32.mrb[0].mxu0
      %1168 = vdwg.mxu0
      %v1169 = vsel %vm782, %v1164, -1e+30
      %v1170 = vsel %vm834, %v1169, -inf
      %1171 = vmax.xlane.f32.xlu0 %v1170
      %v1172 = vpop.xlane.xlu0 %1171
      %v1173 = vsub.f32 %v1169, %v1172
      %v1174 = vmul.f32 %v1173, 1.442695
      %v1175 = vpow.pop %v1174
      %v1176 = vsel %vm834, %v1175, 0.0
      %1177 = vadd.xlane.f32.xlu0 %v1176
      %v1178 = vpop.xlane.xlu0 %1177
      %v1179 = vrcp.pop %v1178
      %v1180 = vmul.f32 %v1175, %v1179
      %v1181 = vpack.c.bf16 %v1180, %v1180
      %1182 = vrot.lane.b32.xlu0 %v785, 32
      %v1183 = vpop.permute.xlu0 %1182
      %v1185 = vsel %vm834, %v1181, 0
      %v1188 = vsel %vm850, %v1183, 0
      %1190 = vmatprep.subr.bf16.mxu0 0
      %1191 = vmatpush1.bf16.msra.mxu0 %v1188
      %1192 = vmatprep.subr.bf16.mxu0 0
      %1193 = vmatpush1.bf16.msra.mxu0 0
      %1194 = vmatprep.subr.bf16.mxu0 0
      %1195 = vmatpush1.bf16.msra.mxu0 0
      %1196 = vmatprep.subr.bf16.mxu0 0
      %1197 = vmatpush1.bf16.msra.mxu0 0
      %1198 = vmatprep.subr.bf16.mxu0 0
      %1199 = vmatpush1.bf16.msra.mxu0 0
      %1200 = vmatprep.subr.bf16.mxu0 0
      %1201 = vmatpush1.bf16.msra.mxu0 0
      %1202 = vmatprep.subr.bf16.mxu0 0
      %1203 = vmatpush1.bf16.msra.mxu0 0
      %1204 = vmatprep.subr.bf16.mxu0 0
      %1205 = vmatpush1.bf16.msra.mxu0 0
      %1206 = vmatprep.subr.bf16.mxu0 0
      %1207 = vmatpush1.bf16.msra.mxu0 0
      %1208 = vmatprep.subr.bf16.mxu0 0
      %1209 = vmatpush1.bf16.msra.mxu0 0
      %1210 = vmatprep.subr.bf16.mxu0 0
      %1211 = vmatpush1.bf16.msra.mxu0 0
      %1212 = vmatprep.subr.bf16.mxu0 0
      %1213 = vmatpush1.bf16.msra.mxu0 0
      %1214 = vmatprep.subr.bf16.mxu0 0
      %1215 = vmatpush1.bf16.msra.mxu0 0
      %1216 = vmatprep.subr.bf16.mxu0 0
      %1217 = vmatpush1.bf16.msra.mxu0 0
      %1218 = vmatprep.subr.bf16.mxu0 0
      %1219 = vmatpush1.bf16.msra.mxu0 0
      %1220 = vmatprep.subr.bf16.mxu0 0
      %1221 = vmatpush1.bf16.msra.mxu0 0
      %1222 = vmatprep.mubr.bf16.mxu0 0
      %1223 = vmatmul.mubr.bf16.gmra.mrb[0].mxu0 %v1185
      %v1224 = vpop.f32.mrb[0].mxu0
      %v1225 = vadd.f32 0.0, %v1224
      %v1226 = vpop.f32.mrb[0].mxu0
      %v1227 = vpop.f32.mrb[0].mxu0
      %v1228 = vpop.f32.mrb[0].mxu0
      %1229 = vdwg.mxu0
      %1231 = vrot.lane.b32.xlu0 %v1003, 32
      %v1232 = vpop.permute.xlu0 %1231
      %1235 = vrot.lane.b32.xlu0 %v1114, 64
      %v1236 = vpop.permute.xlu0 %1235
      %1239 = vrot.lane.b32.xlu0 %v1225, 96
      %v1240 = vpop.permute.xlu0 %1239
      %v1242 = vsel %vm786, %v889, %v1232
      %vm1243 = vcmask 523264
      %v1244 = vsel %vm1243, %v1242, %v1236
      %vm1245 = vcmask 785408
      %v1246 = vsel %vm1245, %v1244, %v1240
      %v1247 = vpack.c.bf16 %v1246, %v1246
      %v1248 = vld [vmem:[%s5] sm:$0xf]
      %v1249 = vld [vmem:[%s5 + $0x4] sm:$0xf]
      %v1250 = vld [vmem:[%s5 + $0x8] sm:$0xf]
      %v1251 = vld [vmem:[%s5 + $0xc] sm:$0xf]
      %v1252 = vld [vmem:[%s5 + $0x10] sm:$0xf]
      %v1253 = vld [vmem:[%s5 + $0x14] sm:$0xf]
      %v1254 = vld [vmem:[%s5 + $0x18] sm:$0xf]
      %v1255 = vld [vmem:[%s5 + $0x1c] sm:$0xf]
      %v1256 = vld [vmem:[%s5 + $0x20] sm:$0xf]
      %v1257 = vld [vmem:[%s5 + $0x24] sm:$0xf]
      %v1258 = vld [vmem:[%s5 + $0x28] sm:$0xf]
      %v1259 = vld [vmem:[%s5 + $0x2c] sm:$0xf]
      %v1260 = vld [vmem:[%s5 + $0x30] sm:$0xf]
      %v1261 = vld [vmem:[%s5 + $0x34] sm:$0xf]
      %v1262 = vld [vmem:[%s5 + $0x38] sm:$0xf]
      %v1263 = vld [vmem:[%s5 + $0x3c] sm:$0xf]
      %v1264 = vld [vmem:[%s6] sm:$0x1]
      %v1266 = vlaneseq
      %v1267 = vshrl.u32 %v1266, 7
      %v1268 = vsub.s32 0, %v1267
      %v1269 = vrot.slane %v1264, %v1268
      %v1287 = vunpack.c.l.b16 %v1248
      %v1288 = vunpack.c.l.b16 %v1249
      %v1289 = vunpack.c.l.b16 %v1250
      %v1290 = vunpack.c.l.b16 %v1251
      %v1291 = vunpack.c.l.b16 %v1252
      %v1292 = vunpack.c.l.b16 %v1253
      %v1293 = vunpack.c.l.b16 %v1254
      %v1294 = vunpack.c.l.b16 %v1255
      %v1295 = vunpack.c.l.b16 %v1256
      %v1296 = vunpack.c.l.b16 %v1257
      %v1297 = vunpack.c.l.b16 %v1258
      %v1298 = vunpack.c.l.b16 %v1259
      %v1299 = vunpack.c.l.b16 %v1260
      %v1300 = vunpack.c.l.b16 %v1261
      %v1301 = vunpack.c.l.b16 %v1262
      %v1302 = vunpack.c.l.b16 %v1263
      %v1303 = vpack.c.b16 %v1288, %v1287
      %v1304 = vpack.c.b16 %v1290, %v1289
      %v1305 = vpack.c.b16 %v1292, %v1291
      %v1306 = vpack.c.b16 %v1294, %v1293
      %v1307 = vpack.c.b16 %v1296, %v1295
      %v1308 = vpack.c.b16 %v1298, %v1297
      %v1309 = vpack.c.b16 %v1300, %v1299
      %v1310 = vpack.c.b16 %v1302, %v1301
      %1319 = vmatprep.subr.bf16.mxu0 0
      %1320 = vmatpush1.bf16.msra.mxu0 %v1303
      %1321 = vmatprep.subr.bf16.mxu0 0
      %1322 = vmatpush1.bf16.msra.mxu0 %v1304
      %1323 = vmatprep.subr.bf16.mxu0 0
      %1324 = vmatpush1.bf16.msra.mxu0 %v1305
      %1325 = vmatprep.subr.bf16.mxu0 0
      %1326 = vmatpush1.bf16.msra.mxu0 %v1306
      %1327 = vmatprep.subr.bf16.mxu0 0
      %1328 = vmatpush1.bf16.msra.mxu0 %v1307
      %1329 = vmatprep.subr.bf16.mxu0 0
      %1330 = vmatpush1.bf16.msra.mxu0 %v1308
      %1331 = vmatprep.subr.bf16.mxu0 0
      %1332 = vmatpush1.bf16.msra.mxu0 %v1309
      %1333 = vmatprep.subr.bf16.mxu0 0
      %1334 = vmatpush1.bf16.msra.mxu0 %v1310
      %1335 = vmatprep.subr.bf16.mxu0 0
      %1336 = vmatpush1.bf16.msra.mxu0 0
      %1337 = vmatprep.subr.bf16.mxu0 0
      %1338 = vmatpush1.bf16.msra.mxu0 0
      %1339 = vmatprep.subr.bf16.mxu0 0
      %1340 = vmatpush1.bf16.msra.mxu0 0
      %1341 = vmatprep.subr.bf16.mxu0 0
      %1342 = vmatpush1.bf16.msra.mxu0 0
      %1343 = vmatprep.subr.bf16.mxu0 0
      %1344 = vmatpush1.bf16.msra.mxu0 0
      %1345 = vmatprep.subr.bf16.mxu0 0
      %1346 = vmatpush1.bf16.msra.mxu0 0
      %1347 = vmatprep.subr.bf16.mxu0 0
      %1348 = vmatpush1.bf16.msra.mxu0 0
      %1349 = vmatprep.subr.bf16.mxu0 0
      %1350 = vmatpush1.bf16.msra.mxu0 0
      %1351 = vmatprep.mubr.bf16.mxu0 0
      %1352 = vmatmul.mubr.bf16.gmra.mrb[0].mxu0 %v1247
      %v1353 = vpop.f32.mrb[0].mxu0
      %v1354 = vadd.f32 %v1269, %v1353
      %v1355 = vpop.f32.mrb[0].mxu0
      %v1356 = vpop.f32.mrb[0].mxu0
      %v1357 = vpop.f32.mrb[0].mxu0
      %1358 = vdwg.mxu0
      %v1359 = vld [vmem:[%s7] sm:$0x1]
      %v1361 = vlaneseq
      %v1362 = vshrl.u32 %v1361, 7
      %v1363 = vsub.s32 0, %v1362
      %v1364 = vrot.slane %v1359, %v1363
      %v1366 = vmul.f32 %v1364, %v1354
      %v1367 = vadd.f32 %v491, %v1366
      %v1368 = vld [vmem:[%s8] sm:$0x1]
      %v1369 = vld [vmem:[%s9] sm:$0x1]
      %1370 = vadd.xlane.f32.xlu0 %v1367
      %v1371 = vpop.xlane.xlu0 %1370
      %v1372 = vmul.f32 %v1371, %v496
      %v1373 = vsub.f32 %v1367, %v1372
      %v1374 = vmul.f32 %v1373, %v1373
      %1375 = vadd.xlane.f32.xlu0 %v1374
      %v1376 = vpop.xlane.xlu0 %1375
      %v1377 = vmul.f32 %v1376, %v496
      %v1378 = vadd.f32 %v1377, 1e-06
      %v1379 = vrsqrt.pop %v1378
      %v1380 = vmul.f32 %v1373, %v1379
      %v1382 = vlaneseq
      %v1383 = vshrl.u32 %v1382, 7
      %v1384 = vsub.s32 0, %v1383
      %v1385 = vrot.slane %v1368, %v1384
      %v1387 = vmul.f32 %v1380, %v1385
      %v1389 = vlaneseq
      %v1390 = vshrl.u32 %v1389, 7
      %v1391 = vsub.s32 0, %v1390
      %v1392 = vrot.slane %v1369, %v1391
      %v1394 = vadd.f32 %v1387, %v1392
      %v1395 = vpack.c.bf16 %v1394, %v1394
      %v1396 = vld [vmem:[%s10] sm:$0xff]
      %v1397 = vld [vmem:[%s10 + $0x8] sm:$0xff]
      %v1398 = vld [vmem:[%s10 + $0x10] sm:$0xff]
      %v1399 = vld [vmem:[%s10 + $0x18] sm:$0xff]
      %v1400 = vld [vmem:[%s10 + $0x20] sm:$0xff]
      %v1401 = vld [vmem:[%s10 + $0x28] sm:$0xff]
      %v1402 = vld [vmem:[%s10 + $0x30] sm:$0xff]
      %v1403 = vld [vmem:[%s10 + $0x38] sm:$0xff]
      %v1404 = vld [vmem:[%s10 + $0x40] sm:$0xff]
      %v1405 = vld [vmem:[%s10 + $0x48] sm:$0xff]
      %v1406 = vld [vmem:[%s10 + $0x50] sm:$0xff]
      %v1407 = vld [vmem:[%s10 + $0x58] sm:$0xff]
      %v1408 = vld [vmem:[%s10 + $0x60] sm:$0xff]
      %v1409 = vld [vmem:[%s10 + $0x68] sm:$0xff]
      %v1410 = vld [vmem:[%s10 + $0x70] sm:$0xff]
      %v1411 = vld [vmem:[%s10 + $0x78] sm:$0xff]
      %v1412 = vld [vmem:[%s10 + $0x80] sm:$0xff]
      %v1413 = vld [vmem:[%s10 + $0x88] sm:$0xff]
      %v1414 = vld [vmem:[%s10 + $0x90] sm:$0xff]
      %v1415 = vld [vmem:[%s10 + $0x98] sm:$0xff]
      %v1416 = vld [vmem:[%s10 + $0xa0] sm:$0xff]
      %v1417 = vld [vmem:[%s10 + $0xa8] sm:$0xff]
      %v1418 = vld [vmem:[%s10 + $0xb0] sm:$0xff]
      %v1419 = vld [vmem:[%s10 + $0xb8] sm:$0xff]
      %v1420 = vld [vmem:[%s10 + $0xc0] sm:$0xff]
      %v1421 = vld [vmem:[%s10 + $0xc8] sm:$0xff]
      %v1422 = vld [vmem:[%s10 + $0xd0] sm:$0xff]
      %v1423 = vld [vmem:[%s10 + $0xd8] sm:$0xff]
      %v1424 = vld [vmem:[%s10 + $0xe0] sm:$0xff]
      %v1425 = vld [vmem:[%s10 + $0xe8] sm:$0xff]
      %v1426 = vld [vmem:[%s10 + $0xf0] sm:$0xff]
      %v1427 = vld [vmem:[%s10 + $0xf8] sm:$0xff]
      %v1428 = vld [vmem:[%s11] sm:$0xf]
      %v1430 = vlaneseq
      %v1431 = vshrl.u32 %v1430, 7
      %v1432 = vsub.s32 0, %v1431
      %v1433 = vrot.slane %v1428, %v1432
      %v1434 = vlaneseq
      %v1435 = vshrl.u32 %v1434, 7
      %v1436 = vsub.s32 1, %v1435
      %v1437 = vrot.slane %v1428, %v1436
      %v1438 = vlaneseq
      %v1439 = vshrl.u32 %v1438, 7
      %v1440 = vsub.s32 2, %v1439
      %v1441 = vrot.slane %v1428, %v1440
      %v1442 = vlaneseq
      %v1443 = vshrl.u32 %v1442, 7
      %v1444 = vsub.s32 3, %v1443
      %v1445 = vrot.slane %v1428, %v1444
      %v1482 = vunpack.c.l.b16 %v1396
      %v1483 = vunpack.c.h.b16 %v1396
      %v1484 = vunpack.c.l.b16 %v1397
      %v1485 = vunpack.c.h.b16 %v1397
      %v1486 = vunpack.c.l.b16 %v1398
      %v1487 = vunpack.c.h.b16 %v1398
      %v1488 = vunpack.c.l.b16 %v1399
      %v1489 = vunpack.c.h.b16 %v1399
      %v1490 = vunpack.c.l.b16 %v1400
      %v1491 = vunpack.c.h.b16 %v1400
      %v1492 = vunpack.c.l.b16 %v1401
      %v1493 = vunpack.c.h.b16 %v1401
      %v1494 = vunpack.c.l.b16 %v1402
      %v1495 = vunpack.c.h.b16 %v1402
      %v1496 = vunpack.c.l.b16 %v1403
      %v1497 = vunpack.c.h.b16 %v1403
      %v1498 = vunpack.c.l.b16 %v1404
      %v1499 = vunpack.c.h.b16 %v1404
      %v1500 = vunpack.c.l.b16 %v1405
      %v1501 = vunpack.c.h.b16 %v1405
      %v1502 = vunpack.c.l.b16 %v1406
      %v1503 = vunpack.c.h.b16 %v1406
      %v1504 = vunpack.c.l.b16 %v1407
      %v1505 = vunpack.c.h.b16 %v1407
      %v1506 = vunpack.c.l.b16 %v1408
      %v1507 = vunpack.c.h.b16 %v1408
      %v1508 = vunpack.c.l.b16 %v1409
      %v1509 = vunpack.c.h.b16 %v1409
      %v1510 = vunpack.c.l.b16 %v1410
      %v1511 = vunpack.c.h.b16 %v1410
      %v1512 = vunpack.c.l.b16 %v1411
      %v1513 = vunpack.c.h.b16 %v1411
      %v1514 = vunpack.c.l.b16 %v1412
      %v1515 = vunpack.c.h.b16 %v1412
      %v1516 = vunpack.c.l.b16 %v1413
      %v1517 = vunpack.c.h.b16 %v1413
      %v1518 = vunpack.c.l.b16 %v1414
      %v1519 = vunpack.c.h.b16 %v1414
      %v1520 = vunpack.c.l.b16 %v1415
      %v1521 = vunpack.c.h.b16 %v1415
      %v1522 = vunpack.c.l.b16 %v1416
      %v1523 = vunpack.c.h.b16 %v1416
      %v1524 = vunpack.c.l.b16 %v1417
      %v1525 = vunpack.c.h.b16 %v1417
      %v1526 = vunpack.c.l.b16 %v1418
      %v1527 = vunpack.c.h.b16 %v1418
      %v1528 = vunpack.c.l.b16 %v1419
      %v1529 = vunpack.c.h.b16 %v1419
      %v1530 = vunpack.c.l.b16 %v1420
      %v1531 = vunpack.c.h.b16 %v1420
      %v1532 = vunpack.c.l.b16 %v1421
      %v1533 = vunpack.c.h.b16 %v1421
      %v1534 = vunpack.c.l.b16 %v1422
      %v1535 = vunpack.c.h.b16 %v1422
      %v1536 = vunpack.c.l.b16 %v1423
      %v1537 = vunpack.c.h.b16 %v1423
      %v1538 = vunpack.c.l.b16 %v1424
      %v1539 = vunpack.c.h.b16 %v1424
      %v1540 = vunpack.c.l.b16 %v1425
      %v1541 = vunpack.c.h.b16 %v1425
      %v1542 = vunpack.c.l.b16 %v1426
      %v1543 = vunpack.c.h.b16 %v1426
      %v1544 = vunpack.c.l.b16 %v1427
      %v1545 = vunpack.c.h.b16 %v1427
      %v1546 = vpack.c.b16 %v1486, %v1482
      %v1547 = vpack.c.b16 %v1487, %v1483
      %v1548 = vpack.c.b16 %v1488, %v1484
      %v1549 = vpack.c.b16 %v1489, %v1485
      %v1550 = vpack.c.b16 %v1494, %v1490
      %v1551 = vpack.c.b16 %v1495, %v1491
      %v1552 = vpack.c.b16 %v1496, %v1492
      %v1553 = vpack.c.b16 %v1497, %v1493
      %v1554 = vpack.c.b16 %v1502, %v1498
      %v1555 = vpack.c.b16 %v1503, %v1499
      %v1556 = vpack.c.b16 %v1504, %v1500
      %v1557 = vpack.c.b16 %v1505, %v1501
      %v1558 = vpack.c.b16 %v1510, %v1506
      %v1559 = vpack.c.b16 %v1511, %v1507
      %v1560 = vpack.c.b16 %v1512, %v1508
      %v1561 = vpack.c.b16 %v1513, %v1509
      %v1562 = vpack.c.b16 %v1518, %v1514
      %v1563 = vpack.c.b16 %v1519, %v1515
      %v1564 = vpack.c.b16 %v1520, %v1516
      %v1565 = vpack.c.b16 %v1521, %v1517
      %v1566 = vpack.c.b16 %v1526, %v1522
      %v1567 = vpack.c.b16 %v1527, %v1523
      %v1568 = vpack.c.b16 %v1528, %v1524
      %v1569 = vpack.c.b16 %v1529, %v1525
      %v1570 = vpack.c.b16 %v1534, %v1530
      %v1571 = vpack.c.b16 %v1535, %v1531
      %v1572 = vpack.c.b16 %v1536, %v1532
      %v1573 = vpack.c.b16 %v1537, %v1533
      %v1574 = vpack.c.b16 %v1542, %v1538
      %v1575 = vpack.c.b16 %v1543, %v1539
      %v1576 = vpack.c.b16 %v1544, %v1540
      %v1577 = vpack.c.b16 %v1545, %v1541
      %1610 = vmatprep.subr.bf16.mxu0 %v1547
      %1611 = vmatpush1.bf16.msra.mxu0 %v1546
      %1612 = vmatprep.subr.bf16.mxu0 %v1551
      %1613 = vmatpush1.bf16.msra.mxu0 %v1550
      %1614 = vmatprep.subr.bf16.mxu0 %v1555
      %1615 = vmatpush1.bf16.msra.mxu0 %v1554
      %1616 = vmatprep.subr.bf16.mxu0 %v1559
      %1617 = vmatpush1.bf16.msra.mxu0 %v1558
      %1618 = vmatprep.subr.bf16.mxu0 %v1563
      %1619 = vmatpush1.bf16.msra.mxu0 %v1562
      %1620 = vmatprep.subr.bf16.mxu0 %v1567
      %1621 = vmatpush1.bf16.msra.mxu0 %v1566
      %1622 = vmatprep.subr.bf16.mxu0 %v1571
      %1623 = vmatpush1.bf16.msra.mxu0 %v1570
      %1624 = vmatprep.subr.bf16.mxu0 %v1575
      %1625 = vmatpush1.bf16.msra.mxu0 %v1574
      %1626 = vmatprep.subr.bf16.mxu0 0
      %1627 = vmatpush1.bf16.msra.mxu0 0
      %1628 = vmatprep.subr.bf16.mxu0 0
      %1629 = vmatpush1.bf16.msra.mxu0 0
      %1630 = vmatprep.subr.bf16.mxu0 0
      %1631 = vmatpush1.bf16.msra.mxu0 0
      %1632 = vmatprep.subr.bf16.mxu0 0
      %1633 = vmatpush1.bf16.msra.mxu0 0
      %1634 = vmatprep.subr.bf16.mxu0 0
      %1635 = vmatpush1.bf16.msra.mxu0 0
      %1636 = vmatprep.subr.bf16.mxu0 0
      %1637 = vmatpush1.bf16.msra.mxu0 0
      %1638 = vmatprep.subr.bf16.mxu0 0
      %1639 = vmatpush1.bf16.msra.mxu0 0
      %1640 = vmatprep.subr.bf16.mxu0 0
      %1641 = vmatpush1.bf16.msra.mxu0 0
      %1642 = vmatprep.mubr.bf16.mxu0 0
      %1643 = vmatmul.mubr.bf16.gmra.mrb[0].mxu0 %v1395
      %v1644 = vpop.f32.mrb[0].mxu0
      %v1645 = vadd.f32 %v1433, %v1644
      %v1646 = vpop.f32.mrb[0].mxu0
      %v1647 = vadd.f32 %v1437, %v1646
      %v1648 = vpop.f32.mrb[0].mxu0
      %v1649 = vpop.f32.mrb[0].mxu0
      %1650 = vdwg.mxu0
      %1651 = vmatprep.subr.bf16.mxu0 %v1549
      %1652 = vmatpush1.bf16.msra.mxu0 %v1548
      %1653 = vmatprep.subr.bf16.mxu0 %v1553
      %1654 = vmatpush1.bf16.msra.mxu0 %v1552
      %1655 = vmatprep.subr.bf16.mxu0 %v1557
      %1656 = vmatpush1.bf16.msra.mxu0 %v1556
      %1657 = vmatprep.subr.bf16.mxu0 %v1561
      %1658 = vmatpush1.bf16.msra.mxu0 %v1560
      %1659 = vmatprep.subr.bf16.mxu0 %v1565
      %1660 = vmatpush1.bf16.msra.mxu0 %v1564
      %1661 = vmatprep.subr.bf16.mxu0 %v1569
      %1662 = vmatpush1.bf16.msra.mxu0 %v1568
      %1663 = vmatprep.subr.bf16.mxu0 %v1573
      %1664 = vmatpush1.bf16.msra.mxu0 %v1572
      %1665 = vmatprep.subr.bf16.mxu0 %v1577
      %1666 = vmatpush1.bf16.msra.mxu0 %v1576
      %1667 = vmatprep.subr.bf16.mxu0 0
      %1668 = vmatpush1.bf16.msra.mxu0 0
      %1669 = vmatprep.subr.bf16.mxu0 0
      %1670 = vmatpush1.bf16.msra.mxu0 0
      %1671 = vmatprep.subr.bf16.mxu0 0
      %1672 = vmatpush1.bf16.msra.mxu0 0
      %1673 = vmatprep.subr.bf16.mxu0 0
      %1674 = vmatpush1.bf16.msra.mxu0 0
      %1675 = vmatprep.subr.bf16.mxu0 0
      %1676 = vmatpush1.bf16.msra.mxu0 0
      %1677 = vmatprep.subr.bf16.mxu0 0
      %1678 = vmatpush1.bf16.msra.mxu0 0
      %1679 = vmatprep.subr.bf16.mxu0 0
      %1680 = vmatpush1.bf16.msra.mxu0 0
      %1681 = vmatprep.subr.bf16.mxu0 0
      %1682 = vmatpush1.bf16.msra.mxu0 0
      %1683 = vmatprep.mubr.bf16.mxu0 0
      %1684 = vmatmul.mubr.bf16.gmra.mrb[0].mxu0 %v1395
      %v1685 = vpop.f32.mrb[0].mxu0
      %v1686 = vadd.f32 %v1441, %v1685
      %v1687 = vpop.f32.mrb[0].mxu0
      %v1688 = vadd.f32 %v1445, %v1687
      %v1689 = vpop.f32.mrb[0].mxu0
      %v1690 = vpop.f32.mrb[0].mxu0
      %1691 = vdwg.mxu0
      %v1692 = vmul.f32 %v1645, %v1645
      %v1693 = vmul.f32 %v1647, %v1647
      %v1694 = vmul.f32 %v1686, %v1686
      %v1695 = vmul.f32 %v1688, %v1688
      %v1696 = vmul.f32 %v1645, %v1692
      %v1697 = vmul.f32 %v1647, %v1693
      %v1698 = vmul.f32 %v1686, %v1694
      %v1699 = vmul.f32 %v1688, %v1695
      %v1700 = vmul.f32 %v1696, 0.044715
      %v1701 = vmul.f32 %v1697, 0.044715
      %v1702 = vmul.f32 %v1698, 0.044715
      %v1703 = vmul.f32 %v1699, 0.044715
      %v1704 = vadd.f32 %v1645, %v1700
      %v1705 = vadd.f32 %v1647, %v1701
      %v1706 = vadd.f32 %v1686, %v1702
      %v1707 = vadd.f32 %v1688, %v1703
      %v1708 = vmul.f32 %v1704, 0.7978846
      %v1709 = vmul.f32 %v1705, 0.7978846
      %v1710 = vmul.f32 %v1706, 0.7978846
      %v1711 = vmul.f32 %v1707, 0.7978846
      %v1712 = vtanh.pop %v1708
      %v1713 = vtanh.pop %v1709
      %v1714 = vtanh.pop %v1710
      %v1715 = vtanh.pop %v1711
      %v1716 = vadd.f32 %v1712, 1.0
      %v1717 = vadd.f32 %v1713, 1.0
      %v1718 = vadd.f32 %v1714, 1.0
      %v1719 = vadd.f32 %v1715, 1.0
      %v1720 = vmul.f32 %v1716, 0.5
      %v1721 = vmul.f32 %v1717, 0.5
      %v1722 = vmul.f32 %v1718, 0.5
      %v1723 = vmul.f32 %v1719, 0.5
      %v1724 = vmul.f32 %v1645, %v1720
      %v1725 = vmul.f32 %v1647, %v1721
      %v1726 = vmul.f32 %v1686, %v1722
      %v1727 = vmul.f32 %v1688, %v1723
      %v1728 = vpack.c.bf16 %v1724, %v1724
      %v1729 = vpack.c.bf16 %v1725, %v1725
      %v1730 = vpack.c.bf16 %v1726, %v1726
      %v1731 = vpack.c.bf16 %v1727, %v1727
      %v1732 = vld [vmem:[%s12] sm:$0xf]
      %v1733 = vld [vmem:[%s12 + $0x4] sm:$0xf]
      %v1734 = vld [vmem:[%s12 + $0x8] sm:$0xf]
      %v1735 = vld [vmem:[%s12 + $0xc] sm:$0xf]
      %v1736 = vld [vmem:[%s12 + $0x10] sm:$0xf]
      %v1737 = vld [vmem:[%s12 + $0x14] sm:$0xf]
      %v1738 = vld [vmem:[%s12 + $0x18] sm:$0xf]
      %v1739 = vld [vmem:[%s12 + $0x1c] sm:$0xf]
      %v1740 = vld [vmem:[%s12 + $0x20] sm:$0xf]
      %v1741 = vld [vmem:[%s12 + $0x24] sm:$0xf]
      %v1742 = vld [vmem:[%s12 + $0x28] sm:$0xf]
      %v1743 = vld [vmem:[%s12 + $0x2c] sm:$0xf]
      %v1744 = vld [vmem:[%s12 + $0x30] sm:$0xf]
      %v1745 = vld [vmem:[%s12 + $0x34] sm:$0xf]
      %v1746 = vld [vmem:[%s12 + $0x38] sm:$0xf]
      %v1747 = vld [vmem:[%s12 + $0x3c] sm:$0xf]
      %v1748 = vld [vmem:[%s12 + $0x40] sm:$0xf]
      %v1749 = vld [vmem:[%s12 + $0x44] sm:$0xf]
      %v1750 = vld [vmem:[%s12 + $0x48] sm:$0xf]
      %v1751 = vld [vmem:[%s12 + $0x4c] sm:$0xf]
      %v1752 = vld [vmem:[%s12 + $0x50] sm:$0xf]
      %v1753 = vld [vmem:[%s12 + $0x54] sm:$0xf]
      %v1754 = vld [vmem:[%s12 + $0x58] sm:$0xf]
      %v1755 = vld [vmem:[%s12 + $0x5c] sm:$0xf]
      %v1756 = vld [vmem:[%s12 + $0x60] sm:$0xf]
      %v1757 = vld [vmem:[%s12 + $0x64] sm:$0xf]
      %v1758 = vld [vmem:[%s12 + $0x68] sm:$0xf]
      %v1759 = vld [vmem:[%s12 + $0x6c] sm:$0xf]
      %v1760 = vld [vmem:[%s12 + $0x70] sm:$0xf]
      %v1761 = vld [vmem:[%s12 + $0x74] sm:$0xf]
      %v1762 = vld [vmem:[%s12 + $0x78] sm:$0xf]
      %v1763 = vld [vmem:[%s12 + $0x7c] sm:$0xf]
      %v1764 = vld [vmem:[%s12 + $0x80] sm:$0xf]
      %v1765 = vld [vmem:[%s12 + $0x84] sm:$0xf]
      %v1766 = vld [vmem:[%s12 + $0x88] sm:$0xf]
      %v1767 = vld [vmem:[%s12 + $0x8c] sm:$0xf]
      %v1768 = vld [vmem:[%s12 + $0x90] sm:$0xf]
      %v1769 = vld [vmem:[%s12 + $0x94] sm:$0xf]
      %v1770 = vld [vmem:[%s12 + $0x98] sm:$0xf]
      %v1771 = vld [vmem:[%s12 + $0x9c] sm:$0xf]
      %v1772 = vld [vmem:[%s12 + $0xa0] sm:$0xf]
      %v1773 = vld [vmem:[%s12 + $0xa4] sm:$0xf]
      %v1774 = vld [vmem:[%s12 + $0xa8] sm:$0xf]
      %v1775 = vld [vmem:[%s12 + $0xac] sm:$0xf]
      %v1776 = vld [vmem:[%s12 + $0xb0] sm:$0xf]
      %v1777 = vld [vmem:[%s12 + $0xb4] sm:$0xf]
      %v1778 = vld [vmem:[%s12 + $0xb8] sm:$0xf]
      %v1779 = vld [vmem:[%s12 + $0xbc] sm:$0xf]
      %v1780 = vld [vmem:[%s12 + $0xc0] sm:$0xf]
      %v1781 = vld [vmem:[%s12 + $0xc4] sm:$0xf]
      %v1782 = vld [vmem:[%s12 + $0xc8] sm:$0xf]
      %v1783 = vld [vmem:[%s12 + $0xcc] sm:$0xf]
      %v1784 = vld [vmem:[%s12 + $0xd0] sm:$0xf]
      %v1785 = vld [vmem:[%s12 + $0xd4] sm:$0xf]
      %v1786 = vld [vmem:[%s12 + $0xd8] sm:$0xf]
      %v1787 = vld [vmem:[%s12 + $0xdc] sm:$0xf]
      %v1788 = vld [vmem:[%s12 + $0xe0] sm:$0xf]
      %v1789 = vld [vmem:[%s12 + $0xe4] sm:$0xf]
      %v1790 = vld [vmem:[%s12 + $0xe8] sm:$0xf]
      %v1791 = vld [vmem:[%s12 + $0xec] sm:$0xf]
      %v1792 = vld [vmem:[%s12 + $0xf0] sm:$0xf]
      %v1793 = vld [vmem:[%s12 + $0xf4] sm:$0xf]
      %v1794 = vld [vmem:[%s12 + $0xf8] sm:$0xf]
      %v1795 = vld [vmem:[%s12 + $0xfc] sm:$0xf]
      %v1796 = vld [vmem:[%s13] sm:$0x1]
      %v1798 = vlaneseq
      %v1799 = vshrl.u32 %v1798, 7
      %v1800 = vsub.s32 0, %v1799
      %v1801 = vrot.slane %v1796, %v1800
      %v1867 = vunpack.c.l.b16 %v1732
      %v1868 = vunpack.c.l.b16 %v1733
      %v1869 = vunpack.c.l.b16 %v1734
      %v1870 = vunpack.c.l.b16 %v1735
      %v1871 = vunpack.c.l.b16 %v1736
      %v1872 = vunpack.c.l.b16 %v1737
      %v1873 = vunpack.c.l.b16 %v1738
      %v1874 = vunpack.c.l.b16 %v1739
      %v1875 = vunpack.c.l.b16 %v1740
      %v1876 = vunpack.c.l.b16 %v1741
      %v1877 = vunpack.c.l.b16 %v1742
      %v1878 = vunpack.c.l.b16 %v1743
      %v1879 = vunpack.c.l.b16 %v1744
      %v1880 = vunpack.c.l.b16 %v1745
      %v1881 = vunpack.c.l.b16 %v1746
      %v1882 = vunpack.c.l.b16 %v1747
      %v1883 = vunpack.c.l.b16 %v1748
      %v1884 = vunpack.c.l.b16 %v1749
      %v1885 = vunpack.c.l.b16 %v1750
      %v1886 = vunpack.c.l.b16 %v1751
      %v1887 = vunpack.c.l.b16 %v1752
      %v1888 = vunpack.c.l.b16 %v1753
      %v1889 = vunpack.c.l.b16 %v1754
      %v1890 = vunpack.c.l.b16 %v1755
      %v1891 = vunpack.c.l.b16 %v1756
      %v1892 = vunpack.c.l.b16 %v1757
      %v1893 = vunpack.c.l.b16 %v1758
      %v1894 = vunpack.c.l.b16 %v1759
      %v1895 = vunpack.c.l.b16 %v1760
      %v1896 = vunpack.c.l.b16 %v1761
      %v1897 = vunpack.c.l.b16 %v1762
      %v1898 = vunpack.c.l.b16 %v1763
      %v1899 = vunpack.c.l.b16 %v1764
      %v1900 = vunpack.c.l.b16 %v1765
      %v1901 = vunpack.c.l.b16 %v1766
      %v1902 = vunpack.c.l.b16 %v1767
      %v1903 = vunpack.c.l.b16 %v1768
      %v1904 = vunpack.c.l.b16 %v1769
      %v1905 = vunpack.c.l.b16 %v1770
      %v1906 = vunpack.c.l.b16 %v1771
      %v1907 = vunpack.c.l.b16 %v1772
      %v1908 = vunpack.c.l.b16 %v1773
      %v1909 = vunpack.c.l.b16 %v1774
      %v1910 = vunpack.c.l.b16 %v1775
      %v1911 = vunpack.c.l.b16 %v1776
      %v1912 = vunpack.c.l.b16 %v1777
      %v1913 = vunpack.c.l.b16 %v1778
      %v1914 = vunpack.c.l.b16 %v1779
      %v1915 = vunpack.c.l.b16 %v1780
      %v1916 = vunpack.c.l.b16 %v1781
      %v1917 = vunpack.c.l.b16 %v1782
      %v1918 = vunpack.c.l.b16 %v1783
      %v1919 = vunpack.c.l.b16 %v1784
      %v1920 = vunpack.c.l.b16 %v1785
      %v1921 = vunpack.c.l.b16 %v1786
      %v1922 = vunpack.c.l.b16 %v1787
      %v1923 = vunpack.c.l.b16 %v1788
      %v1924 = vunpack.c.l.b16 %v1789
      %v1925 = vunpack.c.l.b16 %v1790
      %v1926 = vunpack.c.l.b16 %v1791
      %v1927 = vunpack.c.l.b16 %v1792
      %v1928 = vunpack.c.l.b16 %v1793
      %v1929 = vunpack.c.l.b16 %v1794
      %v1930 = vunpack.c.l.b16 %v1795
      %v1931 = vpack.c.b16 %v1868, %v1867
      %v1932 = vpack.c.b16 %v1870, %v1869
      %v1933 = vpack.c.b16 %v1872, %v1871
      %v1934 = vpack.c.b16 %v1874, %v1873
      %v1935 = vpack.c.b16 %v1876, %v1875
      %v1936 = vpack.c.b16 %v1878, %v1877
      %v1937 = vpack.c.b16 %v1880, %v1879
      %v1938 = vpack.c.b16 %v1882, %v1881
      %v1939 = vpack.c.b16 %v1884, %v1883
      %v1940 = vpack.c.b16 %v1886, %v1885
      %v1941 = vpack.c.b16 %v1888, %v1887
      %v1942 = vpack.c.b16 %v1890, %v1889
      %v1943 = vpack.c.b16 %v1892, %v1891
      %v1944 = vpack.c.b16 %v1894, %v1893
      %v1945 = vpack.c.b16 %v1896, %v1895
      %v1946 = vpack.c.b16 %v1898, %v1897
      %v1947 = vpack.c.b16 %v1900, %v1899
      %v1948 = vpack.c.b16 %v1902, %v1901
      %v1949 = vpack.c.b16 %v1904, %v1903
      %v1950 = vpack.c.b16 %v1906, %v1905
      %v1951 = vpack.c.b16 %v1908, %v1907
      %v1952 = vpack.c.b16 %v1910, %v1909
      %v1953 = vpack.c.b16 %v1912, %v1911
      %v1954 = vpack.c.b16 %v1914, %v1913
      %v1955 = vpack.c.b16 %v1916, %v1915
      %v1956 = vpack.c.b16 %v1918, %v1917
      %v1957 = vpack.c.b16 %v1920, %v1919
      %v1958 = vpack.c.b16 %v1922, %v1921
      %v1959 = vpack.c.b16 %v1924, %v1923
      %v1960 = vpack.c.b16 %v1926, %v1925
      %v1961 = vpack.c.b16 %v1928, %v1927
      %v1962 = vpack.c.b16 %v1930, %v1929
      %1995 = vmatprep.subr.bf16.mxu0 0
      %1996 = vmatpush1.bf16.msra.mxu0 %v1931
      %1997 = vmatprep.subr.bf16.mxu0 0
      %1998 = vmatpush1.bf16.msra.mxu0 %v1932
      %1999 = vmatprep.subr.bf16.mxu0 0
      %2000 = vmatpush1.bf16.msra.mxu0 %v1933
      %2001 = vmatprep.subr.bf16.mxu0 0
      %2002 = vmatpush1.bf16.msra.mxu0 %v1934
      %2003 = vmatprep.subr.bf16.mxu0 0
      %2004 = vmatpush1.bf16.msra.mxu0 %v1935
      %2005 = vmatprep.subr.bf16.mxu0 0
      %2006 = vmatpush1.bf16.msra.mxu0 %v1936
      %2007 = vmatprep.subr.bf16.mxu0 0
      %2008 = vmatpush1.bf16.msra.mxu0 %v1937
      %2009 = vmatprep.subr.bf16.mxu0 0
      %2010 = vmatpush1.bf16.msra.mxu0 %v1938
      %2011 = vmatprep.subr.bf16.mxu0 0
      %2012 = vmatpush1.bf16.msra.mxu0 %v1939
      %2013 = vmatprep.subr.bf16.mxu0 0
      %2014 = vmatpush1.bf16.msra.mxu0 %v1940
      %2015 = vmatprep.subr.bf16.mxu0 0
      %2016 = vmatpush1.bf16.msra.mxu0 %v1941
      %2017 = vmatprep.subr.bf16.mxu0 0
      %2018 = vmatpush1.bf16.msra.mxu0 %v1942
      %2019 = vmatprep.subr.bf16.mxu0 0
      %2020 = vmatpush1.bf16.msra.mxu0 %v1943
      %2021 = vmatprep.subr.bf16.mxu0 0
      %2022 = vmatpush1.bf16.msra.mxu0 %v1944
      %2023 = vmatprep.subr.bf16.mxu0 0
      %2024 = vmatpush1.bf16.msra.mxu0 %v1945
      %2025 = vmatprep.subr.bf16.mxu0 0
      %2026 = vmatpush1.bf16.msra.mxu0 %v1946
      %2027 = vmatprep.mubr.bf16.mxu0 %v1729
      %2028 = vmatmul.mubr.bf16.gmra.mrb[0].mxu0 %v1728
      %v2029 = vpop.f32.mrb[0].mxu0
      %v2030 = vadd.f32 %v1801, %v2029
      %v2031 = vpop.f32.mrb[0].mxu0
      %v2032 = vpop.f32.mrb[0].mxu0
      %v2033 = vpop.f32.mrb[0].mxu0
      %2034 = vdwg.mxu0
      %2035 = vmatprep.subr.bf16.mxu0 0
      %2036 = vmatpush1.bf16.msra.mxu0 %v1947
      %2037 = vmatprep.subr.bf16.mxu0 0
      %2038 = vmatpush1.bf16.msra.mxu0 %v1948
      %2039 = vmatprep.subr.bf16.mxu0 0
      %2040 = vmatpush1.bf16.msra.mxu0 %v1949
      %2041 = vmatprep.subr.bf16.mxu0 0
      %2042 = vmatpush1.bf16.msra.mxu0 %v1950
      %2043 = vmatprep.subr.bf16.mxu0 0
      %2044 = vmatpush1.bf16.msra.mxu0 %v1951
      %2045 = vmatprep.subr.bf16.mxu0 0
      %2046 = vmatpush1.bf16.msra.mxu0 %v1952
      %2047 = vmatprep.subr.bf16.mxu0 0
      %2048 = vmatpush1.bf16.msra.mxu0 %v1953
      %2049 = vmatprep.subr.bf16.mxu0 0
      %2050 = vmatpush1.bf16.msra.mxu0 %v1954
      %2051 = vmatprep.subr.bf16.mxu0 0
      %2052 = vmatpush1.bf16.msra.mxu0 %v1955
      %2053 = vmatprep.subr.bf16.mxu0 0
      %2054 = vmatpush1.bf16.msra.mxu0 %v1956
      %2055 = vmatprep.subr.bf16.mxu0 0
      %2056 = vmatpush1.bf16.msra.mxu0 %v1957
      %2057 = vmatprep.subr.bf16.mxu0 0
      %2058 = vmatpush1.bf16.msra.mxu0 %v1958
      %2059 = vmatprep.subr.bf16.mxu0 0
      %2060 = vmatpush1.bf16.msra.mxu0 %v1959
      %2061 = vmatprep.subr.bf16.mxu0 0
      %2062 = vmatpush1.bf16.msra.mxu0 %v1960
      %2063 = vmatprep.subr.bf16.mxu0 0
      %2064 = vmatpush1.bf16.msra.mxu0 %v1961
      %2065 = vmatprep.subr.bf16.mxu0 0
      %2066 = vmatpush1.bf16.msra.mxu0 %v1962
      %2067 = vmatprep.mubr.bf16.mxu0 %v1731
      %2068 = vmatmul.mubr.bf16.gmra.mrb[0].mxu0 %v1730
      %v2069 = vpop.f32.mrb[0].mxu0
      %v2070 = vadd.f32 %v2030, %v2069
      %v2071 = vpop.f32.mrb[0].mxu0
      %v2072 = vpop.f32.mrb[0].mxu0
      %v2073 = vpop.f32.mrb[0].mxu0
      %2074 = vdwg.mxu0
      %v2075 = vld [vmem:[%s14] sm:$0x1]
      %v2077 = vlaneseq
      %v2078 = vshrl.u32 %v2077, 7
      %v2079 = vsub.s32 0, %v2078
      %v2080 = vrot.slane %v2075, %v2079
      %v2082 = vmul.f32 %v2080, %v2070
      %v2083 = vadd.f32 %v1367, %v2082
      %2084 = vst [vmem:[%s489] sm:$0xff] %v2083
      %p2085 = scmp.lt.s32.totalorder %s26, 1
      %s2086 = scalar_select %p2085, %s26, 1
      %s2087 = smul.addr %s2086, 8
      %s2088 = scalar_lea.vmem %s15, %s2087
      // Predicated region
      $region81: #{forward.5} parent=79 // pred_check
        %p2089 = pneg %p364
      $region82: #{forward.5} parent=79 // pred_check_branch
        %2091 = sbr.rel (%p2089) target = $region84
      $region83: #{forward.5} parent=79 // pred_region
        _
      $region84: #{forward.5} parent=79 // pred_fallthru
        _
    $region80: #{forward.5} parent=5 // pred_fallthru
      _
    %p2092 = scmp.le.s32.totalorder 2, %s21
    // Predicated region
    $region85: #{forward.5} parent=5 // pred_check
      %p2093 = pneg %p2092
    $region86: #{forward.5} parent=5 // pred_check_branch
      %2095 = sbr.rel (%p2093) target = $region88
    $region87: #{forward.5} parent=5 // pred_region
      %s2096 = ssub.s32 %s21, 2
      // Predicated region
      $region89: #{forward.5} parent=87 // pred_check
        %p2097 = pneg %p370
      $region90: #{forward.5} parent=87 // pred_check_branch
        %2099 = sbr.rel (%p2097) target = $region92
      $region91: #{forward.5} parent=87 // pred_region
        %p2100 = scmp.lt.s32.totalorder %s27, 1
        %s2101 = scalar_select %p2100, %s27, 1
        %s2102 = smul.addr %s2101, 8
        %s2103 = scalar_lea.vmem %s15, %s2102
      $region92: #{forward.5} parent=87 // pred_fallthru
        _
    $region88: #{forward.5} parent=5 // pred_fallthru
      _
  $region6: #{forward.5} parent=0 // loop_footer
    %s25 = sadd.s32 1, %s21
  $region7: #{forward.5} parent=0 // loop_footer_branch
    %20 = sbr.rel target = $region3
  $region8: #{forward.5} parent=0 // loop_exit
    _

</llo_original>
